<compile_context>
chip_gen: v7x
topology: tpu7x:2x2x1
jax: 0.10.0
libtpu: 0.0.40
codegen_flags: <defaults>
</compile_context>

<pallas_src>
import functools

import jax
import jax.numpy as jnp
from jax import lax
from jax.experimental import pallas as pl
from jax.experimental.pallas import tpu as pltpu

F32 = jnp.float32
BF16 = jnp.bfloat16
_EPS = 1e-5
_NEG = -1e30          # finite "minus infinity" for masking (NaN-safe)
_VMEM_LIMIT = 64 * 1024 * 1024


# ---------------------------------------------------------------------------
# in-kernel helpers (traced inline)
# ---------------------------------------------------------------------------
def _layer_norm(x, gamma, beta):
    mean = jnp.mean(x, axis=-1, keepdims=True)
    xc = x - mean
    var = jnp.mean(xc * xc, axis=-1, keepdims=True)
    return xc * lax.rsqrt(var + _EPS) * gamma + beta


def _split_heads(x, n_heads, d_head):
    # (N, H*dh) -> (H, N, dh)   (single reshape + transpose, no per-head slices)
    n = x.shape[0]
    return x.reshape(n, n_heads, d_head).transpose(1, 0, 2)


def _attention_core(q, k, v, *, kv_block, causal):
    """q: (H, Nq, dh) bf16 (pre-scaled).  k, v: (H, Nk, dh) f32.

    Flash-style online softmax over KV blocks; only (H, Nq, kv_block) score
    tiles ever exist.  Returns (H, Nq, dh) f32.
    """
    h, nq, dh = q.shape
    nk = k.shape[1]
    tk = kv_block if (kv_block and nk % kv_block == 0) else nk
    n_blk = nk // tk

    m = jnp.full((h, nq, 1), _NEG, F32)
    l = jnp.zeros((h, nq, 1), F32)
    acc = jnp.zeros((h, nq, dh), F32)

    for jb in range(n_blk):  # static unroll, n_blk known at trace time
        k_blk = k[:, jb * tk:(jb + 1) * tk, :].astype(BF16)
        v_blk = v[:, jb * tk:(jb + 1) * tk, :].astype(BF16)
        # batched QK^T over all heads at once (bf16 MXU, f32 accumulate)
        s = jnp.einsum("hid,hjd->hij", q, k_blk,
                       preferred_element_type=F32)            # (H, Nq, tk)
        if causal:
            row = lax.broadcasted_iota(jnp.int32, (nq, tk), 0)
            col = jb * tk + lax.broadcasted_iota(jnp.int32, (nq, tk), 1)
            bias = jnp.where(row >= col, 0.0, _NEG)            # built once/block
            s = s + bias[None, :, :]
        m_new = jnp.maximum(m, jnp.max(s, axis=-1, keepdims=True))
        alpha = jnp.exp(m - m_new)
        p = jnp.exp(s - m_new)
        l = alpha * l + jnp.sum(p, axis=-1, keepdims=True)
        acc = alpha * acc + jnp.einsum("hij,hjd->hid", p.astype(BF16), v_blk,
                                       preferred_element_type=F32)
        m = m_new

    # normalization on the EUP reciprocal (free slot) instead of a VALU divide
    return acc * pl.reciprocal(l, approx=True)


# ---------------------------------------------------------------------------
# Kernels (one batch element per grid step; residual fused in)
# ---------------------------------------------------------------------------
def _csa_kernel(x_ref, g_ref, b_ref, wqkv_ref, bqkv_ref, wo_ref, bo_ref,
                out_ref, *, n_heads, d_head, kv_block):
    x = x_ref[0]                                     # (N, D) f32
    n = x.shape[0]
    hd = n_heads * d_head

    xn = _layer_norm(x, g_ref[0], b_ref[0]).astype(BF16)

    # fused QKV projection: one (N,D)x(D,3HD) bf16 matmul, f32 accumulation
    qkv = jnp.dot(xn, wqkv_ref[...], preferred_element_type=F32) + bqkv_ref[0]
    inv_scale = 1.0 / (float(d_head) ** 0.5)
    q = qkv[:, :hd] * inv_scale                      # scale folded into Q once
    k = qkv[:, hd:2 * hd]
    v = qkv[:, 2 * hd:]

    qh = _split_heads(q, n_heads, d_head).astype(BF16)
    kh = _split_heads(k, n_heads, d_head)
    vh = _split_heads(v, n_heads, d_head)

    attn = _attention_core(qh, kh, vh, kv_block=kv_block, causal=True)
    attn = attn.transpose(1, 0, 2).reshape(n, hd).astype(BF16)

    y = jnp.dot(attn, wo_ref[...], preferred_element_type=F32) + bo_ref[0]
    out_ref[0] = (x + y).astype(out_ref.dtype)       # residual fused


def _cross_kernel(x_ref, enc_ref, g1_ref, b1_ref, g2_ref, b2_ref,
                  wq_ref, bq_ref, wkv_ref, bkv_ref, wo_ref, bo_ref,
                  out_ref, *, n_heads, d_head, kv_block):
    x = x_ref[0]                                     # (N, D) f32
    e = enc_ref[0]                                   # (M, D) f32
    n = x.shape[0]
    hd = n_heads * d_head

    xn = _layer_norm(x, g1_ref[0], b1_ref[0]).astype(BF16)
    en = _layer_norm(e, g2_ref[0], b2_ref[0]).astype(BF16)

    inv_scale = 1.0 / (float(d_head) ** 0.5)
    q = (jnp.dot(xn, wq_ref[...], preferred_element_type=F32)
         + bq_ref[0]) * inv_scale
    kv = jnp.dot(en, wkv_ref[...], preferred_element_type=F32) + bkv_ref[0]
    k = kv[:, :hd]
    v = kv[:, hd:]

    qh = _split_heads(q, n_heads, d_head).astype(BF16)
    kh = _split_heads(k, n_heads, d_head)
    vh = _split_heads(v, n_heads, d_head)

    attn = _attention_core(qh, kh, vh, kv_block=kv_block, causal=False)
    attn = attn.transpose(1, 0, 2).reshape(n, hd).astype(BF16)

    y = jnp.dot(attn, wo_ref[...], preferred_element_type=F32) + bo_ref[0]
    out_ref[0] = (x + y).astype(out_ref.dtype)       # residual fused


def _ff_kernel(x_ref, g_ref, b_ref, w1_ref, b1_ref, w2_ref, b2_ref, out_ref):
    x = x_ref[...]                                   # (TR, D) f32
    xn = _layer_norm(x, g_ref[0], b_ref[0]).astype(BF16)
    h = jnp.dot(xn, w1_ref[...], preferred_element_type=F32) + b1_ref[0]
    h = jnp.maximum(h, 0.0).astype(BF16)
    y = jnp.dot(h, w2_ref[...], preferred_element_type=F32) + b2_ref[0]
    out_ref[...] = (x + y).astype(out_ref.dtype)     # residual fused


# ---------------------------------------------------------------------------
# Wrappers
# ---------------------------------------------------------------------------
def _full(shape):
    return pl.BlockSpec(shape, lambda *_: (0,) * len(shape))


def causal_self_attention_block(x, p, *, n_heads, d_head, kv_block):
    B, N, D = x.shape
    HD = n_heads * d_head
    kernel = functools.partial(_csa_kernel, n_heads=n_heads, d_head=d_head,
                               kv_block=kv_block)
    return pl.pallas_call(
        kernel,
        out_shape=jax.ShapeDtypeStruct((B, N, D), x.dtype),
        grid_spec=pltpu.PrefetchScalarGridSpec(
            num_scalar_prefetch=0,
            grid=(B,),
            in_specs=[
                pl.BlockSpec((1, N, D), lambda b: (b, 0, 0)),      # x
                _full((1, D)), _full((1, D)),                      # ln gamma/beta
                _full((D, 3 * HD)), _full((1, 3 * HD)),            # packed QKV
                _full((HD, D)), _full((1, D)),                     # out proj
            ],
            out_specs=pl.BlockSpec((1, N, D), lambda b: (b, 0, 0)),
        ),
        compiler_params=pltpu.CompilerParams(
            dimension_semantics=("parallel",),
            vmem_limit_bytes=_VMEM_LIMIT),
    )(x, p["ln_g"], p["ln_b"], p["wqkv"], p["bqkv"], p["wo"], p["bo"])


def cross_attention_block(x, enc, p, *, n_heads, d_head, kv_block):
    B, N, D = x.shape
    M = enc.shape[1]
    HD = n_heads * d_head
    kernel = functools.partial(_cross_kernel, n_heads=n_heads, d_head=d_head,
                               kv_block=kv_block)
    return pl.pallas_call(
        kernel,
        out_shape=jax.ShapeDtypeStruct((B, N, D), x.dtype),
        grid_spec=pltpu.PrefetchScalarGridSpec(
            num_scalar_prefetch=0,
            grid=(B,),
            in_specs=[
                pl.BlockSpec((1, N, D), lambda b: (b, 0, 0)),      # x
                pl.BlockSpec((1, M, D), lambda b: (b, 0, 0)),      # enc
                _full((1, D)), _full((1, D)),                      # norm1
                _full((1, D)), _full((1, D)),                      # norm2
                _full((D, HD)), _full((1, HD)),                    # Q proj
                _full((D, 2 * HD)), _full((1, 2 * HD)),            # packed KV
                _full((HD, D)), _full((1, D)),                     # out proj
            ],
            out_specs=pl.BlockSpec((1, N, D), lambda b: (b, 0, 0)),
        ),
        compiler_params=pltpu.CompilerParams(
            dimension_semantics=("parallel",),
            vmem_limit_bytes=_VMEM_LIMIT),
    )(x, enc, p["ln1_g"], p["ln1_b"], p["ln2_g"], p["ln2_b"],
      p["wq"], p["bq"], p["wkv"], p["bkv"], p["wo"], p["bo"])


def feed_forward_block(x, p, *, block_rows=16):
    B, N, D = x.shape
    rows = B * N
    tr = block_rows if rows % block_rows == 0 else rows
    d_ff = p["w1"].shape[1]
    x2 = x.reshape(rows, D)
    out = pl.pallas_call(
        _ff_kernel,
        out_shape=jax.ShapeDtypeStruct((rows, D), x.dtype),
        grid_spec=pltpu.PrefetchScalarGridSpec(
            num_scalar_prefetch=0,
            grid=(rows // tr,),
            in_specs=[
                pl.BlockSpec((tr, D), lambda r: (r, 0)),
                _full((1, D)), _full((1, D)),
                _full((D, d_ff)), _full((1, d_ff)),
                _full((d_ff, D)), _full((1, D)),
            ],
            out_specs=pl.BlockSpec((tr, D), lambda r: (r, 0)),
        ),
        compiler_params=pltpu.CompilerParams(
            dimension_semantics=("parallel",),
            vmem_limit_bytes=_VMEM_LIMIT),
    )(x2, p["ln_g"], p["ln_b"], p["w1"], p["b1"], p["w2"], p["b2"])
    return out.reshape(B, N, D)


def decoder_forward(x, enc, params, *, n_heads, d_head, kv_block=256,
                    ff_block_rows=16):
    """Decoder.forward: x + pos, then per layer x += att / cross_att / ff."""
    N = x.shape[1]
    x = x + params["pos"][:, :N, :]           # positional embedding
    for layer in params["layers"]:
        x = causal_self_attention_block(x, layer["att"], n_heads=n_heads,
                                        d_head=d_head, kv_block=kv_block)
        x = cross_attention_block(x, enc, layer["cross"], n_heads=n_heads,
                                  d_head=d_head, kv_block=kv_block)
        x = feed_forward_block(x, layer["ff"], block_rows=ff_block_rows)
    return x


# ---------------------------------------------------------------------------
# Pure-JAX reference (mirrors the PyTorch forward, eval-mode dropout)
# ---------------------------------------------------------------------------
def _ln_ref(x, g, b):
    mean = jnp.mean(x, axis=-1, keepdims=True)
    var = jnp.mean((x - mean) ** 2, axis=-1, keepdims=True)
    return (x - mean) / jnp.sqrt(var + _EPS) * g[0] + b[0]


def _csa_ref(x, p, n_heads, d_head):
    B, N, _ = x.shape
    HD = n_heads * d_head
    xn = _ln_ref(x, p["ln_g"], p["ln_b"])
    qkv = xn @ p["wqkv"].astype(F32) + p["bqkv"][0]
    q = qkv[..., :HD].reshape(B, N, n_heads, d_head)
    k = qkv[..., HD:2 * HD].reshape(B, N, n_heads, d_head)
    v = qkv[..., 2 * HD:].reshape(B, N, n_heads, d_head)
    s = jnp.einsum("bihd,bjhd->bhij", q, k) / jnp.sqrt(jnp.float32(d_head))
    mask = jnp.tril(jnp.ones((N, N), bool))[None, None]
    s = jnp.where(mask, s, -jnp.inf)
    a = jax.nn.softmax(s, axis=-1)
    o = jnp.einsum("bhij,bjhd->bihd", a, v).reshape(B, N, HD)
    return o @ p["wo"].astype(F32) + p["bo"][0]


def _cross_ref(x, enc, p, n_heads, d_head):
    B, N, _ = x.shape
    M = enc.shape[1]
    HD = n_heads * d_head
    xn = _ln_ref(x, p["ln1_g"], p["ln1_b"])
    en = _ln_ref(enc, p["ln2_g"], p["ln2_b"])
    q = (xn @ p["wq"].astype(F32) + p["bq"][0]).reshape(B, N, n_heads, d_head)
    kv = en @ p["wkv"].astype(F32) + p["bkv"][0]
    k = kv[..., :HD].reshape(B, M, n_heads, d_head)
    v = kv[..., HD:].reshape(B, M, n_heads, d_head)
    s = jnp.einsum("bihd,bjhd->bhij", q, k) / jnp.sqrt(jnp.float32(d_head))
    a = jax.nn.softmax(s, axis=-1)
    o = jnp.einsum("bhij,bjhd->bihd", a, v).reshape(B, N, HD)
    return o @ p["wo"].astype(F32) + p["bo"][0]


def _ff_ref(x, p):
    xn = _ln_ref(x, p["ln_g"], p["ln_b"])
    h = jnp.maximum(xn @ p["w1"].astype(F32) + p["b1"][0], 0.0)
    return h @ p["w2"].astype(F32) + p["b2"][0]


def decoder_ref(x, enc, params, n_heads, d_head):
    N = x.shape[1]
    x = x + params["pos"][:, :N, :]
    for layer in params["layers"]:
        x = x + _csa_ref(x, layer["att"], n_heads, d_head)
        x = x + _cross_ref(x, enc, layer["cross"], n_heads, d_head)
        x = x + _ff_ref(x, layer["ff"])
    return x


# ---------------------------------------------------------------------------
# Parameter init (matmul weights stored in bf16; LN / biases in f32)
# ---------------------------------------------------------------------------
def init_params(key, *, nb_layers, seq_len, d_model, n_heads, d_head, d_ff,
                std=0.02):
    HD = n_heads * d_head
    keys = iter(jax.random.split(key, 2 + nb_layers * 32))

    def nrm(shape, dtype=F32):
        return (std * jax.random.normal(next(keys), shape, F32)).astype(dtype)

    params = {
        "pos": jax.random.normal(next(keys), (1, seq_len, d_model), F32),
        "layers": [],
    }
    for _ in range(nb_layers):
        att = {
            "ln_g": 1.0 + nrm((1, d_model)), "ln_b": nrm((1, d_model)),
            "wqkv": nrm((d_model, 3 * HD), BF16), "bqkv": nrm((1, 3 * HD)),
            "wo": nrm((HD, d_model), BF16), "bo": nrm((1, d_model)),
        }
        cross = {
            "ln1_g": 1.0 + nrm((1, d_model)), "ln1_b": nrm((1, d_model)),
            "ln2_g": 1.0 + nrm((1, d_model)), "ln2_b": nrm((1, d_model)),
            "wq": nrm((d_model, HD), BF16), "bq": nrm((1, HD)),
            "wkv": nrm((d_model, 2 * HD), BF16), "bkv": nrm((1, 2 * HD)),
            "wo": nrm((HD, d_model), BF16), "bo": nrm((1, d_model)),
        }
        ff = {
            "ln_g": 1.0 + nrm((1, d_model)), "ln_b": nrm((1, d_model)),
            "w1": nrm((d_model, d_ff), BF16), "b1": nrm((1, d_ff)),
            "w2": nrm((d_ff, d_model), BF16), "b2": nrm((1, d_model)),
        }
        params["layers"].append({"att": att, "cross": cross, "ff": ff})
    return params


# ---------------------------------------------------------------------------
if __name__ == "__main__":
    B = 2            # batch
    N = 16           # decoder seq_len (2 KV blocks of 8 -> online softmax path)
    M = 8            # encoder seq_len
    D = 32           # d_model
    H, DH = 4, 8     # n_heads, d_head
    D_FF = 64
    NB_LAYERS = 2

    key = jax.random.PRNGKey(0)
    k_x, k_enc, k_p = jax.random.split(key, 3)
    params = init_params(k_p, nb_layers=NB_LAYERS, seq_len=N, d_model=D,
                         n_heads=H, d_head=DH, d_ff=D_FF)
    x = jax.random.normal(k_x, (B, N, D), F32)
    enc = jax.random.normal(k_enc, (B, M, D), F32)

    fwd = jax.jit(functools.partial(decoder_forward, n_heads=H, d_head=DH,
                                    kv_block=8, ff_block_rows=16))
    out = jax.block_until_ready(fwd(x, enc, params))

    ref = decoder_ref(x, enc, params, H, DH)
    assert out.shape == (B, N, D)
    max_err = float(jnp.max(jnp.abs(out - ref)))
    assert max_err < 2e-2, f"mismatch vs reference: max abs err {max_err}"

    print("KERNEL_OK")
</pallas_src>

<mosaic_0001>
module attributes {stable_mosaic.version = 11 : i64} {
  func.func @_csa_kernel(%arg0: i32, %arg1: memref<1x16x32xf32, #tpu.memory_space<vmem>>, %arg2: memref<1x32xf32, #tpu.memory_space<vmem>>, %arg3: memref<1x32xf32, #tpu.memory_space<vmem>>, %arg4: memref<32x96xbf16, #tpu.memory_space<vmem>>, %arg5: memref<1x96xf32, #tpu.memory_space<vmem>>, %arg6: memref<32x32xbf16, #tpu.memory_space<vmem>>, %arg7: memref<1x32xf32, #tpu.memory_space<vmem>>, %arg8: memref<1x16x32xf32, #tpu.memory_space<vmem>>) attributes {dimension_semantics = [#tpu.dimension_semantics<parallel>], iteration_bounds = array<i64: 2>, scalar_prefetch = 0 : i64, scratch_operands = 0 : i64, tpu.core_type = #tpu.core_type<tc>, window_params = [{transform_indices = @transform_0, window_bounds = array<i64: 1, 16, 32>}, {pipeline_mode = #tpu.pipeline_mode<synchronous>, transform_indices = @transform_1, window_bounds = array<i64: 1, 32>}, {pipeline_mode = #tpu.pipeline_mode<synchronous>, transform_indices = @transform_2, window_bounds = array<i64: 1, 32>}, {pipeline_mode = #tpu.pipeline_mode<synchronous>, transform_indices = @transform_3, window_bounds = array<i64: 32, 96>}, {pipeline_mode = #tpu.pipeline_mode<synchronous>, transform_indices = @transform_4, window_bounds = array<i64: 1, 96>}, {pipeline_mode = #tpu.pipeline_mode<synchronous>, transform_indices = @transform_5, window_bounds = array<i64: 32, 32>}, {pipeline_mode = #tpu.pipeline_mode<synchronous>, transform_indices = @transform_6, window_bounds = array<i64: 1, 32>}, {transform_indices = @transform_7, window_bounds = array<i64: 1, 16, 32>}]} {
    %c0 = arith.constant 0 : index
    %c0_0 = arith.constant 0 : index
    %c0_1 = arith.constant 0 : index
    %0 = vector.load %arg1[%c0, %c0_0, %c0_1] : memref<1x16x32xf32, #tpu.memory_space<vmem>>, vector<1x16x32xf32>
    %1 = vector.shape_cast %0 : vector<1x16x32xf32> to vector<16x32xf32>
    %c0_2 = arith.constant 0 : index
    %c0_3 = arith.constant 0 : index
    %2 = vector.load %arg2[%c0_2, %c0_3] : memref<1x32xf32, #tpu.memory_space<vmem>>, vector<1x32xf32>
    %3 = vector.shape_cast %2 : vector<1x32xf32> to vector<32xf32>
    %c0_4 = arith.constant 0 : index
    %c0_5 = arith.constant 0 : index
    %4 = vector.load %arg3[%c0_4, %c0_5] : memref<1x32xf32, #tpu.memory_space<vmem>>, vector<1x32xf32>
    %5 = vector.shape_cast %4 : vector<1x32xf32> to vector<32xf32>
    %cst = arith.constant dense<0.000000e+00> : vector<16xf32>
    %6 = vector.multi_reduction <add>, %1, %cst [1] : vector<16x32xf32> to vector<16xf32>
    %7 = vector.shape_cast %6 : vector<16xf32> to vector<16x1xf32>
    %cst_6 = arith.constant 3.200000e+01 : f32
    %8 = vector.broadcast %cst_6 : f32 to vector<16x1xf32>
    %9 = arith.divf %7, %8 : vector<16x1xf32>
    %10 = vector.broadcast %9 : vector<16x1xf32> to vector<16x32xf32>
    %11 = arith.subf %1, %10 : vector<16x32xf32>
    %12 = arith.mulf %11, %11 : vector<16x32xf32>
    %cst_7 = arith.constant dense<0.000000e+00> : vector<16xf32>
    %13 = vector.multi_reduction <add>, %12, %cst_7 [1] : vector<16x32xf32> to vector<16xf32>
    %14 = vector.shape_cast %13 : vector<16xf32> to vector<16x1xf32>
    %cst_8 = arith.constant 3.200000e+01 : f32
    %15 = vector.broadcast %cst_8 : f32 to vector<16x1xf32>
    %16 = arith.divf %14, %15 : vector<16x1xf32>
    %cst_9 = arith.constant 9.99999974E-6 : f32
    %17 = vector.broadcast %cst_9 : f32 to vector<16x1xf32>
    %18 = arith.addf %16, %17 : vector<16x1xf32>
    %19 = math.rsqrt %18 : vector<16x1xf32>
    %20 = vector.broadcast %19 : vector<16x1xf32> to vector<16x32xf32>
    %21 = arith.mulf %11, %20 : vector<16x32xf32>
    %22 = vector.shape_cast %3 : vector<32xf32> to vector<1x32xf32>
    %23 = vector.broadcast %22 : vector<1x32xf32> to vector<16x32xf32>
    %24 = arith.mulf %21, %23 : vector<16x32xf32>
    %25 = vector.shape_cast %5 : vector<32xf32> to vector<1x32xf32>
    %26 = vector.broadcast %25 : vector<1x32xf32> to vector<16x32xf32>
    %27 = arith.addf %24, %26 : vector<16x32xf32>
    %28 = arith.truncf %27 : vector<16x32xf32> to vector<16x32xbf16>
    %c0_10 = arith.constant 0 : index
    %c0_11 = arith.constant 0 : index
    %29 = vector.load %arg4[%c0_10, %c0_11] : memref<32x96xbf16, #tpu.memory_space<vmem>>, vector<32x96xbf16>
    %cst_12 = arith.constant dense<0.000000e+00> : vector<16x96xf32>
    %30 = tpu.matmul %28, %29, %cst_12 {dimension_numbers = #tpu.dot_dimension_numbers<[1], [0], [0], [1], [0, 0, 1, 1], [], []>} : vector<16x32xbf16>, vector<32x96xbf16>, vector<16x96xf32> -> vector<16x96xf32>
    %c0_13 = arith.constant 0 : index
    %c0_14 = arith.constant 0 : index
    %31 = vector.load %arg5[%c0_13, %c0_14] : memref<1x96xf32, #tpu.memory_space<vmem>>, vector<1x96xf32>
    %32 = vector.shape_cast %31 : vector<1x96xf32> to vector<96xf32>
    %33 = vector.shape_cast %32 : vector<96xf32> to vector<1x96xf32>
    %34 = vector.broadcast %33 : vector<1x96xf32> to vector<16x96xf32>
    %35 = arith.addf %30, %34 : vector<16x96xf32>
    %36 = vector.extract_strided_slice %35 {offsets = [0, 0], sizes = [16, 32], strides = [1, 1]} : vector<16x96xf32> to vector<16x32xf32>
    %cst_15 = arith.constant 0.353553385 : f32
    %37 = vector.broadcast %cst_15 : f32 to vector<16x32xf32>
    %38 = arith.mulf %36, %37 : vector<16x32xf32>
    %39 = vector.extract_strided_slice %35 {offsets = [0, 32], sizes = [16, 32], strides = [1, 1]} : vector<16x96xf32> to vector<16x32xf32>
    %40 = vector.extract_strided_slice %35 {offsets = [0, 64], sizes = [16, 32], strides = [1, 1]} : vector<16x96xf32> to vector<16x32xf32>
    %41 = vector.shape_cast %38 : vector<16x32xf32> to vector<16x4x8xf32>
    %42 = tpu.transpose %41, [1, 0, 2] : vector<16x4x8xf32> -> vector<4x16x8xf32>
    %43 = arith.truncf %42 : vector<4x16x8xf32> to vector<4x16x8xbf16>
    %44 = vector.shape_cast %39 : vector<16x32xf32> to vector<16x4x8xf32>
    %45 = tpu.transpose %44, [1, 0, 2] : vector<16x4x8xf32> -> vector<4x16x8xf32>
    %46 = vector.shape_cast %40 : vector<16x32xf32> to vector<16x4x8xf32>
    %47 = tpu.transpose %46, [1, 0, 2] : vector<16x4x8xf32> -> vector<4x16x8xf32>
    %cst_16 = arith.constant -1.000000e+30 : f32
    %48 = vector.broadcast %cst_16 : f32 to vector<4x16x1xf32>
    %cst_17 = arith.constant 0.000000e+00 : f32
    %49 = vector.broadcast %cst_17 : f32 to vector<4x16x1xf32>
    %cst_18 = arith.constant 0.000000e+00 : f32
    %50 = vector.broadcast %cst_18 : f32 to vector<4x16x8xf32>
    %51 = vector.extract_strided_slice %45 {offsets = [0, 0, 0], sizes = [4, 8, 8], strides = [1, 1, 1]} : vector<4x16x8xf32> to vector<4x8x8xf32>
    %52 = arith.truncf %51 : vector<4x8x8xf32> to vector<4x8x8xbf16>
    %53 = vector.extract_strided_slice %47 {offsets = [0, 0, 0], sizes = [4, 8, 8], strides = [1, 1, 1]} : vector<4x16x8xf32> to vector<4x8x8xf32>
    %54 = arith.truncf %53 : vector<4x8x8xf32> to vector<4x8x8xbf16>
    "tpu.trace_start"() <{level = 10 : i32, message = "hid,hjd->hij"}> : () -> ()
    %cst_19 = arith.constant dense<0.000000e+00> : vector<4x16x8xf32>
    %55 = tpu.matmul %43, %52, %cst_19 {dimension_numbers = #tpu.dot_dimension_numbers<[2], [2], [1], [1], [0, 0, 0, 1, 1, 1], [0], [0]>} : vector<4x16x8xbf16>, vector<4x8x8xbf16>, vector<4x16x8xf32> -> vector<4x16x8xf32>
    "tpu.trace_stop"() : () -> ()
    %56 = tpu.iota {dimensions = array<i32: 0>} : vector<16x8xi32>
    %57 = tpu.iota {dimensions = array<i32: 1>} : vector<16x8xi32>
    %c0_i32 = arith.constant 0 : i32
    %58 = vector.broadcast %c0_i32 : i32 to vector<16x8xi32>
    %59 = arith.addi %58, %57 : vector<16x8xi32>
    %60 = arith.cmpi sge, %56, %59 : vector<16x8xi32>
    %cst_20 = arith.constant 0.000000e+00 : f32
    %cst_21 = arith.constant -1.000000e+30 : f32
    %61 = vector.broadcast %cst_20 : f32 to vector<16x8xf32>
    %62 = vector.broadcast %cst_21 : f32 to vector<16x8xf32>
    %63 = arith.select %60, %61, %62 : vector<16x8xi1>, vector<16x8xf32>
    %64 = vector.shape_cast %63 : vector<16x8xf32> to vector<1x16x8xf32>
    %65 = vector.broadcast %64 : vector<1x16x8xf32> to vector<4x16x8xf32>
    %66 = arith.addf %55, %65 : vector<4x16x8xf32>
    %cst_22 = arith.constant dense<0xFF800000> : vector<4x16xf32>
    %67 = vector.multi_reduction <maximumf>, %66, %cst_22 [2] : vector<4x16x8xf32> to vector<4x16xf32>
    %68 = vector.shape_cast %67 : vector<4x16xf32> to vector<4x16x1xf32>
    %69 = arith.maximumf %48, %68 : vector<4x16x1xf32>
    %70 = arith.subf %48, %69 : vector<4x16x1xf32>
    %71 = math.exp %70 : vector<4x16x1xf32>
    %72 = vector.broadcast %69 : vector<4x16x1xf32> to vector<4x16x8xf32>
    %73 = arith.subf %66, %72 : vector<4x16x8xf32>
    %74 = math.exp %73 : vector<4x16x8xf32>
    %75 = arith.mulf %71, %49 : vector<4x16x1xf32>
    %cst_23 = arith.constant dense<0.000000e+00> : vector<4x16xf32>
    %76 = vector.multi_reduction <add>, %74, %cst_23 [2] : vector<4x16x8xf32> to vector<4x16xf32>
    %77 = vector.shape_cast %76 : vector<4x16xf32> to vector<4x16x1xf32>
    %78 = arith.addf %75, %77 : vector<4x16x1xf32>
    %79 = vector.broadcast %71 : vector<4x16x1xf32> to vector<4x16x8xf32>
    %80 = arith.mulf %79, %50 : vector<4x16x8xf32>
    %81 = arith.truncf %74 : vector<4x16x8xf32> to vector<4x16x8xbf16>
    "tpu.trace_start"() <{level = 10 : i32, message = "hij,hjd->hid"}> : () -> ()
    %cst_24 = arith.constant dense<0.000000e+00> : vector<4x16x8xf32>
    %82 = tpu.matmul %81, %54, %cst_24 {dimension_numbers = #tpu.dot_dimension_numbers<[2], [1], [1], [2], [0, 0, 0, 1, 1, 2], [0], [0]>} : vector<4x16x8xbf16>, vector<4x8x8xbf16>, vector<4x16x8xf32> -> vector<4x16x8xf32>
    "tpu.trace_stop"() : () -> ()
    %83 = arith.addf %80, %82 : vector<4x16x8xf32>
    %84 = vector.extract_strided_slice %45 {offsets = [0, 8, 0], sizes = [4, 8, 8], strides = [1, 1, 1]} : vector<4x16x8xf32> to vector<4x8x8xf32>
    %85 = arith.truncf %84 : vector<4x8x8xf32> to vector<4x8x8xbf16>
    %86 = vector.extract_strided_slice %47 {offsets = [0, 8, 0], sizes = [4, 8, 8], strides = [1, 1, 1]} : vector<4x16x8xf32> to vector<4x8x8xf32>
    %87 = arith.truncf %86 : vector<4x8x8xf32> to vector<4x8x8xbf16>
    "tpu.trace_start"() <{level = 10 : i32, message = "hid,hjd->hij"}> : () -> ()
    %cst_25 = arith.constant dense<0.000000e+00> : vector<4x16x8xf32>
    %88 = tpu.matmul %43, %85, %cst_25 {dimension_numbers = #tpu.dot_dimension_numbers<[2], [2], [1], [1], [0, 0, 0, 1, 1, 1], [0], [0]>} : vector<4x16x8xbf16>, vector<4x8x8xbf16>, vector<4x16x8xf32> -> vector<4x16x8xf32>
    "tpu.trace_stop"() : () -> ()
    %89 = tpu.iota {dimensions = array<i32: 0>} : vector<16x8xi32>
    %90 = tpu.iota {dimensions = array<i32: 1>} : vector<16x8xi32>
    %c8_i32 = arith.constant 8 : i32
    %91 = vector.broadcast %c8_i32 : i32 to vector<16x8xi32>
    %92 = arith.addi %91, %90 : vector<16x8xi32>
    %93 = arith.cmpi sge, %89, %92 : vector<16x8xi32>
    %cst_26 = arith.constant 0.000000e+00 : f32
    %cst_27 = arith.constant -1.000000e+30 : f32
    %94 = vector.broadcast %cst_26 : f32 to vector<16x8xf32>
    %95 = vector.broadcast %cst_27 : f32 to vector<16x8xf32>
    %96 = arith.select %93, %94, %95 : vector<16x8xi1>, vector<16x8xf32>
    %97 = vector.shape_cast %96 : vector<16x8xf32> to vector<1x16x8xf32>
    %98 = vector.broadcast %97 : vector<1x16x8xf32> to vector<4x16x8xf32>
    %99 = arith.addf %88, %98 : vector<4x16x8xf32>
    %cst_28 = arith.constant dense<0xFF800000> : vector<4x16xf32>
    %100 = vector.multi_reduction <maximumf>, %99, %cst_28 [2] : vector<4x16x8xf32> to vector<4x16xf32>
    %101 = vector.shape_cast %100 : vector<4x16xf32> to vector<4x16x1xf32>
    %102 = arith.maximumf %69, %101 : vector<4x16x1xf32>
    %103 = arith.subf %69, %102 : vector<4x16x1xf32>
    %104 = math.exp %103 : vector<4x16x1xf32>
    %105 = vector.broadcast %102 : vector<4x16x1xf32> to vector<4x16x8xf32>
    %106 = arith.subf %99, %105 : vector<4x16x8xf32>
    %107 = math.exp %106 : vector<4x16x8xf32>
    %108 = arith.mulf %104, %78 : vector<4x16x1xf32>
    %cst_29 = arith.constant dense<0.000000e+00> : vector<4x16xf32>
    %109 = vector.multi_reduction <add>, %107, %cst_29 [2] : vector<4x16x8xf32> to vector<4x16xf32>
    %110 = vector.shape_cast %109 : vector<4x16xf32> to vector<4x16x1xf32>
    %111 = arith.addf %108, %110 : vector<4x16x1xf32>
    %112 = vector.broadcast %104 : vector<4x16x1xf32> to vector<4x16x8xf32>
    %113 = arith.mulf %112, %83 : vector<4x16x8xf32>
    %114 = arith.truncf %107 : vector<4x16x8xf32> to vector<4x16x8xbf16>
    "tpu.trace_start"() <{level = 10 : i32, message = "hij,hjd->hid"}> : () -> ()
    %cst_30 = arith.constant dense<0.000000e+00> : vector<4x16x8xf32>
    %115 = tpu.matmul %114, %87, %cst_30 {dimension_numbers = #tpu.dot_dimension_numbers<[2], [1], [1], [2], [0, 0, 0, 1, 1, 2], [0], [0]>} : vector<4x16x8xbf16>, vector<4x8x8xbf16>, vector<4x16x8xf32> -> vector<4x16x8xf32>
    "tpu.trace_stop"() : () -> ()
    %116 = arith.addf %113, %115 : vector<4x16x8xf32>
    %117 = tpu.reciprocal %111 {approx = true} : vector<4x16x1xf32> -> vector<4x16x1xf32>
    %118 = vector.broadcast %117 : vector<4x16x1xf32> to vector<4x16x8xf32>
    %119 = arith.mulf %116, %118 : vector<4x16x8xf32>
    %120 = tpu.transpose %119, [1, 0, 2] : vector<4x16x8xf32> -> vector<16x4x8xf32>
    %121 = vector.shape_cast %120 : vector<16x4x8xf32> to vector<16x32xf32>
    %122 = arith.truncf %121 : vector<16x32xf32> to vector<16x32xbf16>
    %c0_31 = arith.constant 0 : index
    %c0_32 = arith.constant 0 : index
    %123 = vector.load %arg6[%c0_31, %c0_32] : memref<32x32xbf16, #tpu.memory_space<vmem>>, vector<32x32xbf16>
    %cst_33 = arith.constant dense<0.000000e+00> : vector<16x32xf32>
    %124 = tpu.matmul %122, %123, %cst_33 {dimension_numbers = #tpu.dot_dimension_numbers<[1], [0], [0], [1], [0, 0, 1, 1], [], []>} : vector<16x32xbf16>, vector<32x32xbf16>, vector<16x32xf32> -> vector<16x32xf32>
    %c0_34 = arith.constant 0 : index
    %c0_35 = arith.constant 0 : index
    %125 = vector.load %arg7[%c0_34, %c0_35] : memref<1x32xf32, #tpu.memory_space<vmem>>, vector<1x32xf32>
    %126 = vector.shape_cast %125 : vector<1x32xf32> to vector<32xf32>
    %127 = vector.shape_cast %126 : vector<32xf32> to vector<1x32xf32>
    %128 = vector.broadcast %127 : vector<1x32xf32> to vector<16x32xf32>
    %129 = arith.addf %124, %128 : vector<16x32xf32>
    %130 = arith.addf %1, %129 : vector<16x32xf32>
    %c0_36 = arith.constant 0 : index
    %c0_37 = arith.constant 0 : index
    %c0_38 = arith.constant 0 : index
    %131 = vector.load %arg8[%c0_36, %c0_37, %c0_38] : memref<1x16x32xf32, #tpu.memory_space<vmem>>, vector<1x16x32xf32>
    %132 = vector.shape_cast %131 : vector<1x16x32xf32> to vector<16x32xf32>
    %133 = vector.shape_cast %130 : vector<16x32xf32> to vector<1x16x32xf32>
    tpu.vector_store %arg8[%c0_36, %c0_37, %c0_38], %133 {strides = array<i32>} : memref<1x16x32xf32, #tpu.memory_space<vmem>>, vector<1x16x32xf32>,
    return
  }
  func.func @transform_0(%arg0: i32) -> (i32, i32, i32) {
    %c0_i32 = arith.constant 0 : i32
    %c0_i32_0 = arith.constant 0 : i32
    %c0_i32_1 = arith.constant 0 : i32
    return %arg0, %c0_i32, %c0_i32_0 : i32, i32, i32
  }
  func.func @transform_1(%arg0: i32) -> (i32, i32) {
    %c0_i32 = arith.constant 0 : i32
    %c0_i32_0 = arith.constant 0 : i32
    %c0_i32_1 = arith.constant 0 : i32
    return %c0_i32, %c0_i32_0 : i32, i32
  }
  func.func @transform_2(%arg0: i32) -> (i32, i32) {
    %c0_i32 = arith.constant 0 : i32
    %c0_i32_0 = arith.constant 0 : i32
    %c0_i32_1 = arith.constant 0 : i32
    return %c0_i32, %c0_i32_0 : i32, i32
  }
  func.func @transform_3(%arg0: i32) -> (i32, i32) {
    %c0_i32 = arith.constant 0 : i32
    %c0_i32_0 = arith.constant 0 : i32
    %c0_i32_1 = arith.constant 0 : i32
    return %c0_i32, %c0_i32_0 : i32, i32
  }
  func.func @transform_4(%arg0: i32) -> (i32, i32) {
    %c0_i32 = arith.constant 0 : i32
    %c0_i32_0 = arith.constant 0 : i32
    %c0_i32_1 = arith.constant 0 : i32
    return %c0_i32, %c0_i32_0 : i32, i32
  }
  func.func @transform_5(%arg0: i32) -> (i32, i32) {
    %c0_i32 = arith.constant 0 : i32
    %c0_i32_0 = arith.constant 0 : i32
    %c0_i32_1 = arith.constant 0 : i32
    return %c0_i32, %c0_i32_0 : i32, i32
  }
  func.func @transform_6(%arg0: i32) -> (i32, i32) {
    %c0_i32 = arith.constant 0 : i32
    %c0_i32_0 = arith.constant 0 : i32
    %c0_i32_1 = arith.constant 0 : i32
    return %c0_i32, %c0_i32_0 : i32, i32
  }
  func.func @transform_7(%arg0: i32) -> (i32, i32, i32) {
    %c0_i32 = arith.constant 0 : i32
    %c0_i32_0 = arith.constant 0 : i32
    %c0_i32_1 = arith.constant 0 : i32
    return %arg0, %c0_i32, %c0_i32_0 : i32, i32, i32
  }
}

module attributes {stable_mosaic.version = 11 : i64} {
  func.func @_cross_kernel(%arg0: i32, %arg1: memref<1x16x32xf32, #tpu.memory_space<vmem>>, %arg2: memref<1x8x32xf32, #tpu.memory_space<vmem>>, %arg3: memref<1x32xf32, #tpu.memory_space<vmem>>, %arg4: memref<1x32xf32, #tpu.memory_space<vmem>>, %arg5: memref<1x32xf32, #tpu.memory_space<vmem>>, %arg6: memref<1x32xf32, #tpu.memory_space<vmem>>, %arg7: memref<32x32xbf16, #tpu.memory_space<vmem>>, %arg8: memref<1x32xf32, #tpu.memory_space<vmem>>, %arg9: memref<32x64xbf16, #tpu.memory_space<vmem>>, %arg10: memref<1x64xf32, #tpu.memory_space<vmem>>, %arg11: memref<32x32xbf16, #tpu.memory_space<vmem>>, %arg12: memref<1x32xf32, #tpu.memory_space<vmem>>, %arg13: memref<1x16x32xf32, #tpu.memory_space<vmem>>) attributes {dimension_semantics = [#tpu.dimension_semantics<parallel>], iteration_bounds = array<i64: 2>, scalar_prefetch = 0 : i64, scratch_operands = 0 : i64, tpu.core_type = #tpu.core_type<tc>, window_params = [{transform_indices = @transform_0, window_bounds = array<i64: 1, 16, 32>}, {transform_indices = @transform_1, window_bounds = array<i64: 1, 8, 32>}, {pipeline_mode = #tpu.pipeline_mode<synchronous>, transform_indices = @transform_2, window_bounds = array<i64: 1, 32>}, {pipeline_mode = #tpu.pipeline_mode<synchronous>, transform_indices = @transform_3, window_bounds = array<i64: 1, 32>}, {pipeline_mode = #tpu.pipeline_mode<synchronous>, transform_indices = @transform_4, window_bounds = array<i64: 1, 32>}, {pipeline_mode = #tpu.pipeline_mode<synchronous>, transform_indices = @transform_5, window_bounds = array<i64: 1, 32>}, {pipeline_mode = #tpu.pipeline_mode<synchronous>, transform_indices = @transform_6, window_bounds = array<i64: 32, 32>}, {pipeline_mode = #tpu.pipeline_mode<synchronous>, transform_indices = @transform_7, window_bounds = array<i64: 1, 32>}, {pipeline_mode = #tpu.pipeline_mode<synchronous>, transform_indices = @transform_8, window_bounds = array<i64: 32, 64>}, {pipeline_mode = #tpu.pipeline_mode<synchronous>, transform_indices = @transform_9, window_bounds = array<i64: 1, 64>}, {pipeline_mode = #tpu.pipeline_mode<synchronous>, transform_indices = @transform_10, window_bounds = array<i64: 32, 32>}, {pipeline_mode = #tpu.pipeline_mode<synchronous>, transform_indices = @transform_11, window_bounds = array<i64: 1, 32>}, {transform_indices = @transform_12, window_bounds = array<i64: 1, 16, 32>}]} {
    %c0 = arith.constant 0 : index
    %c0_0 = arith.constant 0 : index
    %c0_1 = arith.constant 0 : index
    %0 = vector.load %arg1[%c0, %c0_0, %c0_1] : memref<1x16x32xf32, #tpu.memory_space<vmem>>, vector<1x16x32xf32>
    %1 = vector.shape_cast %0 : vector<1x16x32xf32> to vector<16x32xf32>
    %c0_2 = arith.constant 0 : index
    %c0_3 = arith.constant 0 : index
    %c0_4 = arith.constant 0 : index
    %2 = vector.load %arg2[%c0_2, %c0_3, %c0_4] : memref<1x8x32xf32, #tpu.memory_space<vmem>>, vector<1x8x32xf32>
    %3 = vector.shape_cast %2 : vector<1x8x32xf32> to vector<8x32xf32>
    %c0_5 = arith.constant 0 : index
    %c0_6 = arith.constant 0 : index
    %4 = vector.load %arg3[%c0_5, %c0_6] : memref<1x32xf32, #tpu.memory_space<vmem>>, vector<1x32xf32>
    %5 = vector.shape_cast %4 : vector<1x32xf32> to vector<32xf32>
    %c0_7 = arith.constant 0 : index
    %c0_8 = arith.constant 0 : index
    %6 = vector.load %arg4[%c0_7, %c0_8] : memref<1x32xf32, #tpu.memory_space<vmem>>, vector<1x32xf32>
    %7 = vector.shape_cast %6 : vector<1x32xf32> to vector<32xf32>
    %cst = arith.constant dense<0.000000e+00> : vector<16xf32>
    %8 = vector.multi_reduction <add>, %1, %cst [1] : vector<16x32xf32> to vector<16xf32>
    %9 = vector.shape_cast %8 : vector<16xf32> to vector<16x1xf32>
    %cst_9 = arith.constant 3.200000e+01 : f32
    %10 = vector.broadcast %cst_9 : f32 to vector<16x1xf32>
    %11 = arith.divf %9, %10 : vector<16x1xf32>
    %12 = vector.broadcast %11 : vector<16x1xf32> to vector<16x32xf32>
    %13 = arith.subf %1, %12 : vector<16x32xf32>
    %14 = arith.mulf %13, %13 : vector<16x32xf32>
    %cst_10 = arith.constant dense<0.000000e+00> : vector<16xf32>
    %15 = vector.multi_reduction <add>, %14, %cst_10 [1] : vector<16x32xf32> to vector<16xf32>
    %16 = vector.shape_cast %15 : vector<16xf32> to vector<16x1xf32>
    %cst_11 = arith.constant 3.200000e+01 : f32
    %17 = vector.broadcast %cst_11 : f32 to vector<16x1xf32>
    %18 = arith.divf %16, %17 : vector<16x1xf32>
    %cst_12 = arith.constant 9.99999974E-6 : f32
    %19 = vector.broadcast %cst_12 : f32 to vector<16x1xf32>
    %20 = arith.addf %18, %19 : vector<16x1xf32>
    %21 = math.rsqrt %20 : vector<16x1xf32>
    %22 = vector.broadcast %21 : vector<16x1xf32> to vector<16x32xf32>
    %23 = arith.mulf %13, %22 : vector<16x32xf32>
    %24 = vector.shape_cast %5 : vector<32xf32> to vector<1x32xf32>
    %25 = vector.broadcast %24 : vector<1x32xf32> to vector<16x32xf32>
    %26 = arith.mulf %23, %25 : vector<16x32xf32>
    %27 = vector.shape_cast %7 : vector<32xf32> to vector<1x32xf32>
    %28 = vector.broadcast %27 : vector<1x32xf32> to vector<16x32xf32>
    %29 = arith.addf %26, %28 : vector<16x32xf32>
    %30 = arith.truncf %29 : vector<16x32xf32> to vector<16x32xbf16>
    %c0_13 = arith.constant 0 : index
    %c0_14 = arith.constant 0 : index
    %31 = vector.load %arg5[%c0_13, %c0_14] : memref<1x32xf32, #tpu.memory_space<vmem>>, vector<1x32xf32>
    %32 = vector.shape_cast %31 : vector<1x32xf32> to vector<32xf32>
    %c0_15 = arith.constant 0 : index
    %c0_16 = arith.constant 0 : index
    %33 = vector.load %arg6[%c0_15, %c0_16] : memref<1x32xf32, #tpu.memory_space<vmem>>, vector<1x32xf32>
    %34 = vector.shape_cast %33 : vector<1x32xf32> to vector<32xf32>
    %cst_17 = arith.constant dense<0.000000e+00> : vector<8xf32>
    %35 = vector.multi_reduction <add>, %3, %cst_17 [1] : vector<8x32xf32> to vector<8xf32>
    %36 = vector.shape_cast %35 : vector<8xf32> to vector<8x1xf32>
    %cst_18 = arith.constant 3.200000e+01 : f32
    %37 = vector.broadcast %cst_18 : f32 to vector<8x1xf32>
    %38 = arith.divf %36, %37 : vector<8x1xf32>
    %39 = vector.broadcast %38 : vector<8x1xf32> to vector<8x32xf32>
    %40 = arith.subf %3, %39 : vector<8x32xf32>
    %41 = arith.mulf %40, %40 : vector<8x32xf32>
    %cst_19 = arith.constant dense<0.000000e+00> : vector<8xf32>
    %42 = vector.multi_reduction <add>, %41, %cst_19 [1] : vector<8x32xf32> to vector<8xf32>
    %43 = vector.shape_cast %42 : vector<8xf32> to vector<8x1xf32>
    %cst_20 = arith.constant 3.200000e+01 : f32
    %44 = vector.broadcast %cst_20 : f32 to vector<8x1xf32>
    %45 = arith.divf %43, %44 : vector<8x1xf32>
    %cst_21 = arith.constant 9.99999974E-6 : f32
    %46 = vector.broadcast %cst_21 : f32 to vector<8x1xf32>
    %47 = arith.addf %45, %46 : vector<8x1xf32>
    %48 = math.rsqrt %47 : vector<8x1xf32>
    %49 = vector.broadcast %48 : vector<8x1xf32> to vector<8x32xf32>
    %50 = arith.mulf %40, %49 : vector<8x32xf32>
    %51 = vector.shape_cast %32 : vector<32xf32> to vector<1x32xf32>
    %52 = vector.broadcast %51 : vector<1x32xf32> to vector<8x32xf32>
    %53 = arith.mulf %50, %52 : vector<8x32xf32>
    %54 = vector.shape_cast %34 : vector<32xf32> to vector<1x32xf32>
    %55 = vector.broadcast %54 : vector<1x32xf32> to vector<8x32xf32>
    %56 = arith.addf %53, %55 : vector<8x32xf32>
    %57 = arith.truncf %56 : vector<8x32xf32> to vector<8x32xbf16>
    %c0_22 = arith.constant 0 : index
    %c0_23 = arith.constant 0 : index
    %58 = vector.load %arg7[%c0_22, %c0_23] : memref<32x32xbf16, #tpu.memory_space<vmem>>, vector<32x32xbf16>
    %cst_24 = arith.constant dense<0.000000e+00> : vector<16x32xf32>
    %59 = tpu.matmul %30, %58, %cst_24 {dimension_numbers = #tpu.dot_dimension_numbers<[1], [0], [0], [1], [0, 0, 1, 1], [], []>} : vector<16x32xbf16>, vector<32x32xbf16>, vector<16x32xf32> -> vector<16x32xf32>
    %c0_25 = arith.constant 0 : index
    %c0_26 = arith.constant 0 : index
    %60 = vector.load %arg8[%c0_25, %c0_26] : memref<1x32xf32, #tpu.memory_space<vmem>>, vector<1x32xf32>
    %61 = vector.shape_cast %60 : vector<1x32xf32> to vector<32xf32>
    %62 = vector.shape_cast %61 : vector<32xf32> to vector<1x32xf32>
    %63 = vector.broadcast %62 : vector<1x32xf32> to vector<16x32xf32>
    %64 = arith.addf %59, %63 : vector<16x32xf32>
    %cst_27 = arith.constant 0.353553385 : f32
    %65 = vector.broadcast %cst_27 : f32 to vector<16x32xf32>
    %66 = arith.mulf %64, %65 : vector<16x32xf32>
    %c0_28 = arith.constant 0 : index
    %c0_29 = arith.constant 0 : index
    %67 = vector.load %arg9[%c0_28, %c0_29] : memref<32x64xbf16, #tpu.memory_space<vmem>>, vector<32x64xbf16>
    %cst_30 = arith.constant dense<0.000000e+00> : vector<8x64xf32>
    %68 = tpu.matmul %57, %67, %cst_30 {dimension_numbers = #tpu.dot_dimension_numbers<[1], [0], [0], [1], [0, 0, 1, 1], [], []>} : vector<8x32xbf16>, vector<32x64xbf16>, vector<8x64xf32> -> vector<8x64xf32>
    %c0_31 = arith.constant 0 : index
    %c0_32 = arith.constant 0 : index
    %69 = vector.load %arg10[%c0_31, %c0_32] : memref<1x64xf32, #tpu.memory_space<vmem>>, vector<1x64xf32>
    %70 = vector.shape_cast %69 : vector<1x64xf32> to vector<64xf32>
    %71 = vector.shape_cast %70 : vector<64xf32> to vector<1x64xf32>
    %72 = vector.broadcast %71 : vector<1x64xf32> to vector<8x64xf32>
    %73 = arith.addf %68, %72 : vector<8x64xf32>
    %74 = vector.extract_strided_slice %73 {offsets = [0, 0], sizes = [8, 32], strides = [1, 1]} : vector<8x64xf32> to vector<8x32xf32>
    %75 = vector.extract_strided_slice %73 {offsets = [0, 32], sizes = [8, 32], strides = [1, 1]} : vector<8x64xf32> to vector<8x32xf32>
    %76 = vector.shape_cast %66 : vector<16x32xf32> to vector<16x4x8xf32>
    %77 = tpu.transpose %76, [1, 0, 2] : vector<16x4x8xf32> -> vector<4x16x8xf32>
    %78 = arith.truncf %77 : vector<4x16x8xf32> to vector<4x16x8xbf16>
    %79 = vector.shape_cast %74 : vector<8x32xf32> to vector<8x4x8xf32>
    %80 = tpu.transpose %79, [1, 0, 2] : vector<8x4x8xf32> -> vector<4x8x8xf32>
    %81 = vector.shape_cast %75 : vector<8x32xf32> to vector<8x4x8xf32>
    %82 = tpu.transpose %81, [1, 0, 2] : vector<8x4x8xf32> -> vector<4x8x8xf32>
    %cst_33 = arith.constant -1.000000e+30 : f32
    %83 = vector.broadcast %cst_33 : f32 to vector<4x16x1xf32>
    %cst_34 = arith.constant 0.000000e+00 : f32
    %84 = vector.broadcast %cst_34 : f32 to vector<4x16x1xf32>
    %cst_35 = arith.constant 0.000000e+00 : f32
    %85 = vector.broadcast %cst_35 : f32 to vector<4x16x8xf32>
    %86 = arith.truncf %80 : vector<4x8x8xf32> to vector<4x8x8xbf16>
    %87 = arith.truncf %82 : vector<4x8x8xf32> to vector<4x8x8xbf16>
    "tpu.trace_start"() <{level = 10 : i32, message = "hid,hjd->hij"}> : () -> ()
    %cst_36 = arith.constant dense<0.000000e+00> : vector<4x16x8xf32>
    %88 = tpu.matmul %78, %86, %cst_36 {dimension_numbers = #tpu.dot_dimension_numbers<[2], [2], [1], [1], [0, 0, 0, 1, 1, 1], [0], [0]>} : vector<4x16x8xbf16>, vector<4x8x8xbf16>, vector<4x16x8xf32> -> vector<4x16x8xf32>
    "tpu.trace_stop"() : () -> ()
    %cst_37 = arith.constant dense<0xFF800000> : vector<4x16xf32>
    %89 = vector.multi_reduction <maximumf>, %88, %cst_37 [2] : vector<4x16x8xf32> to vector<4x16xf32>
    %90 = vector.shape_cast %89 : vector<4x16xf32> to vector<4x16x1xf32>
    %91 = arith.maximumf %83, %90 : vector<4x16x1xf32>
    %92 = arith.subf %83, %91 : vector<4x16x1xf32>
    %93 = math.exp %92 : vector<4x16x1xf32>
    %94 = vector.broadcast %91 : vector<4x16x1xf32> to vector<4x16x8xf32>
    %95 = arith.subf %88, %94 : vector<4x16x8xf32>
    %96 = math.exp %95 : vector<4x16x8xf32>
    %97 = arith.mulf %93, %84 : vector<4x16x1xf32>
    %cst_38 = arith.constant dense<0.000000e+00> : vector<4x16xf32>
    %98 = vector.multi_reduction <add>, %96, %cst_38 [2] : vector<4x16x8xf32> to vector<4x16xf32>
    %99 = vector.shape_cast %98 : vector<4x16xf32> to vector<4x16x1xf32>
    %100 = arith.addf %97, %99 : vector<4x16x1xf32>
    %101 = vector.broadcast %93 : vector<4x16x1xf32> to vector<4x16x8xf32>
    %102 = arith.mulf %101, %85 : vector<4x16x8xf32>
    %103 = arith.truncf %96 : vector<4x16x8xf32> to vector<4x16x8xbf16>
    "tpu.trace_start"() <{level = 10 : i32, message = "hij,hjd->hid"}> : () -> ()
    %cst_39 = arith.constant dense<0.000000e+00> : vector<4x16x8xf32>
    %104 = tpu.matmul %103, %87, %cst_39 {dimension_numbers = #tpu.dot_dimension_numbers<[2], [1], [1], [2], [0, 0, 0, 1, 1, 2], [0], [0]>} : vector<4x16x8xbf16>, vector<4x8x8xbf16>, vector<4x16x8xf32> -> vector<4x16x8xf32>
    "tpu.trace_stop"() : () -> ()
    %105 = arith.addf %102, %104 : vector<4x16x8xf32>
    %106 = tpu.reciprocal %100 {approx = true} : vector<4x16x1xf32> -> vector<4x16x1xf32>
    %107 = vector.broadcast %106 : vector<4x16x1xf32> to vector<4x16x8xf32>
    %108 = arith.mulf %105, %107 : vector<4x16x8xf32>
    %109 = tpu.transpose %108, [1, 0, 2] : vector<4x16x8xf32> -> vector<16x4x8xf32>
    %110 = vector.shape_cast %109 : vector<16x4x8xf32> to vector<16x32xf32>
    %111 = arith.truncf %110 : vector<16x32xf32> to vector<16x32xbf16>
    %c0_40 = arith.constant 0 : index
    %c0_41 = arith.constant 0 : index
    %112 = vector.load %arg11[%c0_40, %c0_41] : memref<32x32xbf16, #tpu.memory_space<vmem>>, vector<32x32xbf16>
    %cst_42 = arith.constant dense<0.000000e+00> : vector<16x32xf32>
    %113 = tpu.matmul %111, %112, %cst_42 {dimension_numbers = #tpu.dot_dimension_numbers<[1], [0], [0], [1], [0, 0, 1, 1], [], []>} : vector<16x32xbf16>, vector<32x32xbf16>, vector<16x32xf32> -> vector<16x32xf32>
    %c0_43 = arith.constant 0 : index
    %c0_44 = arith.constant 0 : index
    %114 = vector.load %arg12[%c0_43, %c0_44] : memref<1x32xf32, #tpu.memory_space<vmem>>, vector<1x32xf32>
    %115 = vector.shape_cast %114 : vector<1x32xf32> to vector<32xf32>
    %116 = vector.shape_cast %115 : vector<32xf32> to vector<1x32xf32>
    %117 = vector.broadcast %116 : vector<1x32xf32> to vector<16x32xf32>
    %118 = arith.addf %113, %117 : vector<16x32xf32>
    %119 = arith.addf %1, %118 : vector<16x32xf32>
    %c0_45 = arith.constant 0 : index
    %c0_46 = arith.constant 0 : index
    %c0_47 = arith.constant 0 : index
    %120 = vector.load %arg13[%c0_45, %c0_46, %c0_47] : memref<1x16x32xf32, #tpu.memory_space<vmem>>, vector<1x16x32xf32>
    %121 = vector.shape_cast %120 : vector<1x16x32xf32> to vector<16x32xf32>
    %122 = vector.shape_cast %119 : vector<16x32xf32> to vector<1x16x32xf32>
    tpu.vector_store %arg13[%c0_45, %c0_46, %c0_47], %122 {strides = array<i32>} : memref<1x16x32xf32, #tpu.memory_space<vmem>>, vector<1x16x32xf32>,
    return
  }
  func.func @transform_0(%arg0: i32) -> (i32, i32, i32) {
    %c0_i32 = arith.constant 0 : i32
    %c0_i32_0 = arith.constant 0 : i32
    %c0_i32_1 = arith.constant 0 : i32
    return %arg0, %c0_i32, %c0_i32_0 : i32, i32, i32
  }
  func.func @transform_1(%arg0: i32) -> (i32, i32, i32) {
    %c0_i32 = arith.constant 0 : i32
    %c0_i32_0 = arith.constant 0 : i32
    %c0_i32_1 = arith.constant 0 : i32
    return %arg0, %c0_i32, %c0_i32_0 : i32, i32, i32
  }
  func.func @transform_2(%arg0: i32) -> (i32, i32) {
    %c0_i32 = arith.constant 0 : i32
    %c0_i32_0 = arith.constant 0 : i32
    %c0_i32_1 = arith.constant 0 : i32
    return %c0_i32, %c0_i32_0 : i32, i32
  }
  func.func @transform_3(%arg0: i32) -> (i32, i32) {
    %c0_i32 = arith.constant 0 : i32
    %c0_i32_0 = arith.constant 0 : i32
    %c0_i32_1 = arith.constant 0 : i32
    return %c0_i32, %c0_i32_0 : i32, i32
  }
  func.func @transform_4(%arg0: i32) -> (i32, i32) {
    %c0_i32 = arith.constant 0 : i32
    %c0_i32_0 = arith.constant 0 : i32
    %c0_i32_1 = arith.constant 0 : i32
    return %c0_i32, %c0_i32_0 : i32, i32
  }
  func.func @transform_5(%arg0: i32) -> (i32, i32) {
    %c0_i32 = arith.constant 0 : i32
    %c0_i32_0 = arith.constant 0 : i32
    %c0_i32_1 = arith.constant 0 : i32
    return %c0_i32, %c0_i32_0 : i32, i32
  }
  func.func @transform_6(%arg0: i32) -> (i32, i32) {
    %c0_i32 = arith.constant 0 : i32
    %c0_i32_0 = arith.constant 0 : i32
    %c0_i32_1 = arith.constant 0 : i32
    return %c0_i32, %c0_i32_0 : i32, i32
  }
  func.func @transform_7(%arg0: i32) -> (i32, i32) {
    %c0_i32 = arith.constant 0 : i32
    %c0_i32_0 = arith.constant 0 : i32
    %c0_i32_1 = arith.constant 0 : i32
    return %c0_i32, %c0_i32_0 : i32, i32
  }
  func.func @transform_8(%arg0: i32) -> (i32, i32) {
    %c0_i32 = arith.constant 0 : i32
    %c0_i32_0 = arith.constant 0 : i32
    %c0_i32_1 = arith.constant 0 : i32
    return %c0_i32, %c0_i32_0 : i32, i32
  }
  func.func @transform_9(%arg0: i32) -> (i32, i32) {
    %c0_i32 = arith.constant 0 : i32
    %c0_i32_0 = arith.constant 0 : i32
    %c0_i32_1 = arith.constant 0 : i32
    return %c0_i32, %c0_i32_0 : i32, i32
  }
  func.func @transform_10(%arg0: i32) -> (i32, i32) {
    %c0_i32 = arith.constant 0 : i32
    %c0_i32_0 = arith.constant 0 : i32
    %c0_i32_1 = arith.constant 0 : i32
    return %c0_i32, %c0_i32_0 : i32, i32
  }
  func.func @transform_11(%arg0: i32) -> (i32, i32) {
    %c0_i32 = arith.constant 0 : i32
    %c0_i32_0 = arith.constant 0 : i32
    %c0_i32_1 = arith.constant 0 : i32
    return %c0_i32, %c0_i32_0 : i32, i32
  }
  func.func @transform_12(%arg0: i32) -> (i32, i32, i32) {
    %c0_i32 = arith.constant 0 : i32
    %c0_i32_0 = arith.constant 0 : i32
    %c0_i32_1 = arith.constant 0 : i32
    return %arg0, %c0_i32, %c0_i32_0 : i32, i32, i32
  }
}

module attributes {stable_mosaic.version = 11 : i64} {
  func.func @_ff_kernel(%arg0: i32, %arg1: memref<16x32xf32, #tpu.memory_space<vmem>>, %arg2: memref<1x32xf32, #tpu.memory_space<vmem>>, %arg3: memref<1x32xf32, #tpu.memory_space<vmem>>, %arg4: memref<32x64xbf16, #tpu.memory_space<vmem>>, %arg5: memref<1x64xf32, #tpu.memory_space<vmem>>, %arg6: memref<64x32xbf16, #tpu.memory_space<vmem>>, %arg7: memref<1x32xf32, #tpu.memory_space<vmem>>, %arg8: memref<16x32xf32, #tpu.memory_space<vmem>>) attributes {dimension_semantics = [#tpu.dimension_semantics<parallel>], iteration_bounds = array<i64: 2>, scalar_prefetch = 0 : i64, scratch_operands = 0 : i64, tpu.core_type = #tpu.core_type<tc>, window_params = [{transform_indices = @transform_0, window_bounds = array<i64: 16, 32>}, {pipeline_mode = #tpu.pipeline_mode<synchronous>, transform_indices = @transform_1, window_bounds = array<i64: 1, 32>}, {pipeline_mode = #tpu.pipeline_mode<synchronous>, transform_indices = @transform_2, window_bounds = array<i64: 1, 32>}, {pipeline_mode = #tpu.pipeline_mode<synchronous>, transform_indices = @transform_3, window_bounds = array<i64: 32, 64>}, {pipeline_mode = #tpu.pipeline_mode<synchronous>, transform_indices = @transform_4, window_bounds = array<i64: 1, 64>}, {pipeline_mode = #tpu.pipeline_mode<synchronous>, transform_indices = @transform_5, window_bounds = array<i64: 64, 32>}, {pipeline_mode = #tpu.pipeline_mode<synchronous>, transform_indices = @transform_6, window_bounds = array<i64: 1, 32>}, {transform_indices = @transform_7, window_bounds = array<i64: 16, 32>}]} {
    %c0 = arith.constant 0 : index
    %c0_0 = arith.constant 0 : index
    %0 = vector.load %arg1[%c0, %c0_0] : memref<16x32xf32, #tpu.memory_space<vmem>>, vector<16x32xf32>
    %c0_1 = arith.constant 0 : index
    %c0_2 = arith.constant 0 : index
    %1 = vector.load %arg2[%c0_1, %c0_2] : memref<1x32xf32, #tpu.memory_space<vmem>>, vector<1x32xf32>
    %2 = vector.shape_cast %1 : vector<1x32xf32> to vector<32xf32>
    %c0_3 = arith.constant 0 : index
    %c0_4 = arith.constant 0 : index
    %3 = vector.load %arg3[%c0_3, %c0_4] : memref<1x32xf32, #tpu.memory_space<vmem>>, vector<1x32xf32>
    %4 = vector.shape_cast %3 : vector<1x32xf32> to vector<32xf32>
    %cst = arith.constant dense<0.000000e+00> : vector<16xf32>
    %5 = vector.multi_reduction <add>, %0, %cst [1] : vector<16x32xf32> to vector<16xf32>
    %6 = vector.shape_cast %5 : vector<16xf32> to vector<16x1xf32>
    %cst_5 = arith.constant 3.200000e+01 : f32
    %7 = vector.broadcast %cst_5 : f32 to vector<16x1xf32>
    %8 = arith.divf %6, %7 : vector<16x1xf32>
    %9 = vector.broadcast %8 : vector<16x1xf32> to vector<16x32xf32>
    %10 = arith.subf %0, %9 : vector<16x32xf32>
    %11 = arith.mulf %10, %10 : vector<16x32xf32>
    %cst_6 = arith.constant dense<0.000000e+00> : vector<16xf32>
    %12 = vector.multi_reduction <add>, %11, %cst_6 [1] : vector<16x32xf32> to vector<16xf32>
    %13 = vector.shape_cast %12 : vector<16xf32> to vector<16x1xf32>
    %cst_7 = arith.constant 3.200000e+01 : f32
    %14 = vector.broadcast %cst_7 : f32 to vector<16x1xf32>
    %15 = arith.divf %13, %14 : vector<16x1xf32>
    %cst_8 = arith.constant 9.99999974E-6 : f32
    %16 = vector.broadcast %cst_8 : f32 to vector<16x1xf32>
    %17 = arith.addf %15, %16 : vector<16x1xf32>
    %18 = math.rsqrt %17 : vector<16x1xf32>
    %19 = vector.broadcast %18 : vector<16x1xf32> to vector<16x32xf32>
    %20 = arith.mulf %10, %19 : vector<16x32xf32>
    %21 = vector.shape_cast %2 : vector<32xf32> to vector<1x32xf32>
    %22 = vector.broadcast %21 : vector<1x32xf32> to vector<16x32xf32>
    %23 = arith.mulf %20, %22 : vector<16x32xf32>
    %24 = vector.shape_cast %4 : vector<32xf32> to vector<1x32xf32>
    %25 = vector.broadcast %24 : vector<1x32xf32> to vector<16x32xf32>
    %26 = arith.addf %23, %25 : vector<16x32xf32>
    %27 = arith.truncf %26 : vector<16x32xf32> to vector<16x32xbf16>
    %c0_9 = arith.constant 0 : index
    %c0_10 = arith.constant 0 : index
    %28 = vector.load %arg4[%c0_9, %c0_10] : memref<32x64xbf16, #tpu.memory_space<vmem>>, vector<32x64xbf16>
    %cst_11 = arith.constant dense<0.000000e+00> : vector<16x64xf32>
    %29 = tpu.matmul %27, %28, %cst_11 {dimension_numbers = #tpu.dot_dimension_numbers<[1], [0], [0], [1], [0, 0, 1, 1], [], []>} : vector<16x32xbf16>, vector<32x64xbf16>, vector<16x64xf32> -> vector<16x64xf32>
    %c0_12 = arith.constant 0 : index
    %c0_13 = arith.constant 0 : index
    %30 = vector.load %arg5[%c0_12, %c0_13] : memref<1x64xf32, #tpu.memory_space<vmem>>, vector<1x64xf32>
    %31 = vector.shape_cast %30 : vector<1x64xf32> to vector<64xf32>
    %32 = vector.shape_cast %31 : vector<64xf32> to vector<1x64xf32>
    %33 = vector.broadcast %32 : vector<1x64xf32> to vector<16x64xf32>
    %34 = arith.addf %29, %33 : vector<16x64xf32>
    %cst_14 = arith.constant 0.000000e+00 : f32
    %35 = vector.broadcast %cst_14 : f32 to vector<16x64xf32>
    %36 = arith.maximumf %34, %35 : vector<16x64xf32>
    %37 = arith.truncf %36 : vector<16x64xf32> to vector<16x64xbf16>
    %c0_15 = arith.constant 0 : index
    %c0_16 = arith.constant 0 : index
    %38 = vector.load %arg6[%c0_15, %c0_16] : memref<64x32xbf16, #tpu.memory_space<vmem>>, vector<64x32xbf16>
    %cst_17 = arith.constant dense<0.000000e+00> : vector<16x32xf32>
    %39 = tpu.matmul %37, %38, %cst_17 {dimension_numbers = #tpu.dot_dimension_numbers<[1], [0], [0], [1], [0, 0, 1, 1], [], []>} : vector<16x64xbf16>, vector<64x32xbf16>, vector<16x32xf32> -> vector<16x32xf32>
    %c0_18 = arith.constant 0 : index
    %c0_19 = arith.constant 0 : index
    %40 = vector.load %arg7[%c0_18, %c0_19] : memref<1x32xf32, #tpu.memory_space<vmem>>, vector<1x32xf32>
    %41 = vector.shape_cast %40 : vector<1x32xf32> to vector<32xf32>
    %42 = vector.shape_cast %41 : vector<32xf32> to vector<1x32xf32>
    %43 = vector.broadcast %42 : vector<1x32xf32> to vector<16x32xf32>
    %44 = arith.addf %39, %43 : vector<16x32xf32>
    %45 = arith.addf %0, %44 : vector<16x32xf32>
    %c0_20 = arith.constant 0 : index
    %c0_21 = arith.constant 0 : index
    %46 = vector.load %arg8[%c0_20, %c0_21] : memref<16x32xf32, #tpu.memory_space<vmem>>, vector<16x32xf32>
    tpu.vector_store %arg8[%c0_20, %c0_21], %45 {strides = array<i32>} : memref<16x32xf32, #tpu.memory_space<vmem>>, vector<16x32xf32>,
    return
  }
  func.func @transform_0(%arg0: i32) -> (i32, i32) {
    %c0_i32 = arith.constant 0 : i32
    %c0_i32_0 = arith.constant 0 : i32
    return %arg0, %c0_i32 : i32, i32
  }
  func.func @transform_1(%arg0: i32) -> (i32, i32) {
    %c0_i32 = arith.constant 0 : i32
    %c0_i32_0 = arith.constant 0 : i32
    %c0_i32_1 = arith.constant 0 : i32
    return %c0_i32, %c0_i32_0 : i32, i32
  }
  func.func @transform_2(%arg0: i32) -> (i32, i32) {
    %c0_i32 = arith.constant 0 : i32
    %c0_i32_0 = arith.constant 0 : i32
    %c0_i32_1 = arith.constant 0 : i32
    return %c0_i32, %c0_i32_0 : i32, i32
  }
  func.func @transform_3(%arg0: i32) -> (i32, i32) {
    %c0_i32 = arith.constant 0 : i32
    %c0_i32_0 = arith.constant 0 : i32
    %c0_i32_1 = arith.constant 0 : i32
    return %c0_i32, %c0_i32_0 : i32, i32
  }
  func.func @transform_4(%arg0: i32) -> (i32, i32) {
    %c0_i32 = arith.constant 0 : i32
    %c0_i32_0 = arith.constant 0 : i32
    %c0_i32_1 = arith.constant 0 : i32
    return %c0_i32, %c0_i32_0 : i32, i32
  }
  func.func @transform_5(%arg0: i32) -> (i32, i32) {
    %c0_i32 = arith.constant 0 : i32
    %c0_i32_0 = arith.constant 0 : i32
    %c0_i32_1 = arith.constant 0 : i32
    return %c0_i32, %c0_i32_0 : i32, i32
  }
  func.func @transform_6(%arg0: i32) -> (i32, i32) {
    %c0_i32 = arith.constant 0 : i32
    %c0_i32_0 = arith.constant 0 : i32
    %c0_i32_1 = arith.constant 0 : i32
    return %c0_i32, %c0_i32_0 : i32, i32
  }
  func.func @transform_7(%arg0: i32) -> (i32, i32) {
    %c0_i32 = arith.constant 0 : i32
    %c0_i32_0 = arith.constant 0 : i32
    return %arg0, %c0_i32 : i32, i32
  }
}

</mosaic_0001>

<llo_original>
// kernel: decoder_forward.8
$region0: #{decoder_forward.8}
  #allocation0 [shape = 'u32[]', space=smem, size = 0x4, offset = 0x4, fixed_abs, tag = 'smem constant byte address 0x4 - core index']
  #allocation1 [shape = 'u32[144,128]{1,0:T(1,128)}', space=vmem, size = 0x12000, scoped, tag = 'internal scratch']
  %s0 = inlined_call_operand.hbm [shape: f32[32,32], index: 0, kind: input, shape index: {}]
  %s1 = inlined_call_operand.hbm [shape: f32[1,32], index: 1, kind: input, shape index: {}]
  %s2 = inlined_call_operand.hbm [shape: f32[1,32], index: 2, kind: input, shape index: {}]
  %s3 = inlined_call_operand.hbm [shape: bf16[32,64], index: 3, kind: input, shape index: {}]
  %s4 = inlined_call_operand.hbm [shape: f32[1,64], index: 4, kind: input, shape index: {}]
  %s5 = inlined_call_operand.hbm [shape: bf16[64,32], index: 5, kind: input, shape index: {}]
  %s6 = inlined_call_operand.hbm [shape: f32[1,32], index: 6, kind: input, shape index: {}]
  %s7 = inlined_call_operand.hbm [shape: f32[32,32], index: 7, kind: output, shape index: {}]
  %s8 = sld [smem:[#allocation0]]
  $region89: #{decoder_forward.8} parent=0
    _
  %s10 = ssub.s32 1, %s8
  %s11 = scalar_select 0, %s10, %s8
  $region1: #{decoder_forward.8} parent=0
    #allocation2 [shape = 'u8[16384]{0}', space=vmem, size = 0x4000, scoped, tag = 'input window, operand 0']
    #allocation3 [shape = 's32[2]{0}', space=sflag, size = 0x8, scoped, tag = 'scoped memory for decoder_forward.8']
    #allocation4 [shape = 's32[2]{0}', space=sflag, size = 0x8, scoped, tag = 'scoped memory for decoder_forward.8']
    #allocation5 [shape = 'u8[512]{0}', space=vmem, size = 0x400, scoped, tag = 'input window, operand 1, single buffered']
    #allocation6 [shape = 's32[1]{0}', space=sflag, size = 0x4, scoped, tag = 'scoped memory for decoder_forward.8']
    #allocation7 [shape = 'u8[512]{0}', space=vmem, size = 0x400, scoped, tag = 'input window, operand 2, single buffered']
    #allocation8 [shape = 'u8[8192]{0}', space=vmem, size = 0x2000, scoped, tag = 'input window, operand 3, single buffered']
    #allocation9 [shape = 's32[1]{0}', space=sflag, size = 0x4, scoped, tag = 'scoped memory for decoder_forward.8']
    #allocation10 [shape = 'u8[512]{0}', space=vmem, size = 0x400, scoped, tag = 'input window, operand 4, single buffered']
    #allocation11 [shape = 'u8[16384]{0}', space=vmem, size = 0x4000, scoped, tag = 'input window, operand 5, single buffered']
    #allocation12 [shape = 's32[1]{0}', space=sflag, size = 0x4, scoped, tag = 'scoped memory for decoder_forward.8']
    #allocation13 [shape = 'u8[512]{0}', space=vmem, size = 0x400, scoped, tag = 'input window, operand 6, single buffered']
    #allocation14 [shape = 'u8[16384]{0}', space=vmem, size = 0x4000, scoped, tag = 'output window, operand 0']
    %12 = vsyncpa [#allocation3], 0
    %s13 = scalar_lea.sflag [#allocation3], 1
    %14 = vsyncpa %s13, 0
    %15 = vsyncpa [#allocation6], 0
    %16 = vsyncpa [#allocation9], 0
    %17 = vsyncpa [#allocation12], 0
    %18 = vsyncpa [#allocation4], 0
    %s19 = scalar_lea.sflag [#allocation4], 1
    %20 = vsyncpa %s19, 0
    loop: start=0, step=1, limit=4
    $region2: #{decoder_forward.8} parent=1 // loop_pre_header
      _
    $region3: #{decoder_forward.8} parent=1 // loop_header
      %s22 = sphi 0, %s26
      %p23 = scmp.ge.s32.totalorder %s22, 4
      %s32 = sphi 0, %s34
      %s35 = sphi 0, %s32
      %s36 = sphi 0, %s35
      %s52 = sphi 0, %s36
      %s56 = sphi 0, %s56
      %s58 = sphi 0, %s56
      %s59 = sphi 0, %s58
      %s73 = sphi 0, %s59
      %s77 = sphi 0, %s77
      %s79 = sphi 0, %s77
      %s80 = sphi 0, %s79
      %s94 = sphi 0, %s80
      %s98 = sphi 0, %s98
      %s100 = sphi 0, %s98
      %s101 = sphi 0, %s100
      %s115 = sphi 0, %s101
      %s119 = sphi 0, %s119
      %s121 = sphi 0, %s119
      %s122 = sphi 0, %s121
      %s136 = sphi 0, %s122
      %s140 = sphi 0, %s140
      %s142 = sphi 0, %s140
      %s143 = sphi 0, %s142
      %s157 = sphi 0, %s143
      %s161 = sphi 0, %s161
      %s163 = sphi 0, %s161
      %s164 = sphi 0, %s163
      %s178 = sphi 0, %s164
      %s184 = sphi 0, %s186
      %s187 = sphi 0, %s184
      %s188 = sphi 0, %s187
      %s204 = sphi 0, %s188
    $region4: #{decoder_forward.8} parent=1 // loop_header_branch
      %25 = sbr.rel (%p23) target = $region8
    $region5: #{decoder_forward.8} parent=1 // loop_body
      %s27 = ssub.s32 %s22, 1
      %s28 = ssub.s32 %s22, 2
      %s29 = sadd.s32 %s22, 1
      %s30 = ssub.s32 %s22, %s29
      %p31 = scmp.eq.s32.totalorder %s30, 0
      %s33 = sadd.s32 %s32, 1
      %s34 = scalar_select %p31, %s32, %s33
      %p37 = pneg %p31
      %p38 = scmp.eq.s32.totalorder %s22, 1
      %p39 = por %p37, %p38
      %p40 = scmp.ne.s32.totalorder %s32, %s35
      %p41 = scmp.eq.s32.totalorder %s22, 0
      %p42 = por %p40, %p41
      %p43 = scmp.ne.s32.totalorder %s32, %s35
      %p44 = scmp.eq.s32.totalorder %s27, 1
      %p45 = por %p43, %p44
      %p46 = scmp.ne.s32.totalorder %s35, %s36
      %p47 = scmp.eq.s32.totalorder %s27, 0
      %p48 = por %p46, %p47
      %p49 = scmp.ne.s32.totalorder %s35, %s36
      %p50 = scmp.eq.s32.totalorder %s28, 1
      %p51 = por %p49, %p50
      %p53 = scmp.ne.s32.totalorder %s36, %s52
      %p54 = scmp.eq.s32.totalorder %s28, 0
      %p55 = por %p53, %p54
      %s57 = sadd.s32 %s56, 1
      %p60 = scmp.eq.s32.totalorder %s22, 1
      %p61 = scmp.ne.s32.totalorder %s56, %s58
      %p62 = scmp.eq.s32.totalorder %s22, 0
      %p63 = por %p61, %p62
      %p64 = scmp.ne.s32.totalorder %s56, %s58
      %p65 = scmp.eq.s32.totalorder %s27, 1
      %p66 = por %p64, %p65
      %p67 = scmp.ne.s32.totalorder %s58, %s59
      %p68 = scmp.eq.s32.totalorder %s27, 0
      %p69 = por %p67, %p68
      %p70 = scmp.ne.s32.totalorder %s58, %s59
      %p71 = scmp.eq.s32.totalorder %s28, 1
      %p72 = por %p70, %p71
      %p74 = scmp.ne.s32.totalorder %s59, %s73
      %p75 = scmp.eq.s32.totalorder %s28, 0
      %p76 = por %p74, %p75
      %s78 = sadd.s32 %s77, 1
      %p81 = scmp.eq.s32.totalorder %s22, 1
      %p82 = scmp.ne.s32.totalorder %s77, %s79
      %p83 = scmp.eq.s32.totalorder %s22, 0
      %p84 = por %p82, %p83
      %p85 = scmp.ne.s32.totalorder %s77, %s79
      %p86 = scmp.eq.s32.totalorder %s27, 1
      %p87 = por %p85, %p86
      %p88 = scmp.ne.s32.totalorder %s79, %s80
      %p89 = scmp.eq.s32.totalorder %s27, 0
      %p90 = por %p88, %p89
      %p91 = scmp.ne.s32.totalorder %s79, %s80
      %p92 = scmp.eq.s32.totalorder %s28, 1
      %p93 = por %p91, %p92
      %p95 = scmp.ne.s32.totalorder %s80, %s94
      %p96 = scmp.eq.s32.totalorder %s28, 0
      %p97 = por %p95, %p96
      %s99 = sadd.s32 %s98, 1
      %p102 = scmp.eq.s32.totalorder %s22, 1
      %p103 = scmp.ne.s32.totalorder %s98, %s100
      %p104 = scmp.eq.s32.totalorder %s22, 0
      %p105 = por %p103, %p104
      %p106 = scmp.ne.s32.totalorder %s98, %s100
      %p107 = scmp.eq.s32.totalorder %s27, 1
      %p108 = por %p106, %p107
      %p109 = scmp.ne.s32.totalorder %s100, %s101
      %p110 = scmp.eq.s32.totalorder %s27, 0
      %p111 = por %p109, %p110
      %p112 = scmp.ne.s32.totalorder %s100, %s101
      %p113 = scmp.eq.s32.totalorder %s28, 1
      %p114 = por %p112, %p113
      %p116 = scmp.ne.s32.totalorder %s101, %s115
      %p117 = scmp.eq.s32.totalorder %s28, 0
      %p118 = por %p116, %p117
      %s120 = sadd.s32 %s119, 1
      %p123 = scmp.eq.s32.totalorder %s22, 1
      %p124 = scmp.ne.s32.totalorder %s119, %s121
      %p125 = scmp.eq.s32.totalorder %s22, 0
      %p126 = por %p124, %p125
      %p127 = scmp.ne.s32.totalorder %s119, %s121
      %p128 = scmp.eq.s32.totalorder %s27, 1
      %p129 = por %p127, %p128
      %p130 = scmp.ne.s32.totalorder %s121, %s122
      %p131 = scmp.eq.s32.totalorder %s27, 0
      %p132 = por %p130, %p131
      %p133 = scmp.ne.s32.totalorder %s121, %s122
      %p134 = scmp.eq.s32.totalorder %s28, 1
      %p135 = por %p133, %p134
      %p137 = scmp.ne.s32.totalorder %s122, %s136
      %p138 = scmp.eq.s32.totalorder %s28, 0
      %p139 = por %p137, %p138
      %s141 = sadd.s32 %s140, 1
      %p144 = scmp.eq.s32.totalorder %s22, 1
      %p145 = scmp.ne.s32.totalorder %s140, %s142
      %p146 = scmp.eq.s32.totalorder %s22, 0
      %p147 = por %p145, %p146
      %p148 = scmp.ne.s32.totalorder %s140, %s142
      %p149 = scmp.eq.s32.totalorder %s27, 1
      %p150 = por %p148, %p149
      %p151 = scmp.ne.s32.totalorder %s142, %s143
      %p152 = scmp.eq.s32.totalorder %s27, 0
      %p153 = por %p151, %p152
      %p154 = scmp.ne.s32.totalorder %s142, %s143
      %p155 = scmp.eq.s32.totalorder %s28, 1
      %p156 = por %p154, %p155
      %p158 = scmp.ne.s32.totalorder %s143, %s157
      %p159 = scmp.eq.s32.totalorder %s28, 0
      %p160 = por %p158, %p159
      %s162 = sadd.s32 %s161, 1
      %p165 = scmp.eq.s32.totalorder %s22, 1
      %p166 = scmp.ne.s32.totalorder %s161, %s163
      %p167 = scmp.eq.s32.totalorder %s22, 0
      %p168 = por %p166, %p167
      %p169 = scmp.ne.s32.totalorder %s161, %s163
      %p170 = scmp.eq.s32.totalorder %s27, 1
      %p171 = por %p169, %p170
      %p172 = scmp.ne.s32.totalorder %s163, %s164
      %p173 = scmp.eq.s32.totalorder %s27, 0
      %p174 = por %p172, %p173
      %p175 = scmp.ne.s32.totalorder %s163, %s164
      %p176 = scmp.eq.s32.totalorder %s28, 1
      %p177 = por %p175, %p176
      %p179 = scmp.ne.s32.totalorder %s164, %s178
      %p180 = scmp.eq.s32.totalorder %s28, 0
      %p181 = por %p179, %p180
      %s182 = ssub.s32 %s22, %s29
      %p183 = scmp.eq.s32.totalorder %s182, 0
      %s185 = sadd.s32 %s184, 1
      %s186 = scalar_select %p183, %s184, %s185
      %p189 = pneg %p183
      %p190 = scmp.eq.s32.totalorder %s22, 1
      %p191 = por %p189, %p190
      %p192 = scmp.ne.s32.totalorder %s184, %s187
      %p193 = scmp.eq.s32.totalorder %s22, 0
      %p194 = por %p192, %p193
      %p195 = scmp.ne.s32.totalorder %s184, %s187
      %p196 = scmp.eq.s32.totalorder %s27, 1
      %p197 = por %p195, %p196
      %p198 = scmp.ne.s32.totalorder %s187, %s188
      %p199 = scmp.eq.s32.totalorder %s27, 0
      %p200 = por %p198, %p199
      %p201 = scmp.ne.s32.totalorder %s187, %s188
      %p202 = scmp.eq.s32.totalorder %s28, 1
      %p203 = por %p201, %p202
      %p205 = scmp.ne.s32.totalorder %s188, %s204
      %p206 = scmp.eq.s32.totalorder %s28, 0
      %p207 = por %p205, %p206
      %p208 = scmp.le.s32.totalorder 1, %s22
      %p209 = scmp.lt.s32.totalorder %s22, 3
      %p210 = pnand %p208, %p209
      %p211 = pneg %p210
      // Predicated region
      $region9: #{decoder_forward.8} parent=5 // pred_check
        _
      $region10: #{decoder_forward.8} parent=5 // pred_check_branch
        %213 = sbr.rel (%p210) target = $region12
      $region11: #{decoder_forward.8} parent=5 // pred_region
        %s214 = ssub.s32 %s22, 1
        // Predicated region
        $region13: #{decoder_forward.8} parent=11 // pred_check
          %p215 = pneg %p69
        $region14: #{decoder_forward.8} parent=11 // pred_check_branch
          %217 = sbr.rel (%p215) target = $region16
        $region15: #{decoder_forward.8} parent=11 // pred_region
          %s219 = ssub.s32 16, 16
          %220 = vsyncadd [#allocation6], %s219
          %s222 = sshll.u32 [#allocation5], 4
          %s223 = int_to_ptr.vmem [resolvable:$true] %s222
          %225 = dma.hbm_to_vmem [thread:$0]  %s1, 16, %s223, [#allocation6]
        $region16: #{decoder_forward.8} parent=11 // pred_fallthru
          _
        // Predicated region
        $region17: #{decoder_forward.8} parent=11 // pred_check
          %p226 = pneg %p90
        $region18: #{decoder_forward.8} parent=11 // pred_check_branch
          %228 = sbr.rel (%p226) target = $region20
        $region19: #{decoder_forward.8} parent=11 // pred_region
          %s230 = ssub.s32 16, 16
          %231 = vsyncadd [#allocation6], %s230
          %s233 = sshll.u32 [#allocation7], 4
          %s234 = int_to_ptr.vmem [resolvable:$true] %s233
          %236 = dma.hbm_to_vmem [thread:$0]  %s2, 16, %s234, [#allocation6]
        $region20: #{decoder_forward.8} parent=11 // pred_fallthru
          _
        // Predicated region
        $region21: #{decoder_forward.8} parent=11 // pred_check
          %p237 = pneg %p111
        $region22: #{decoder_forward.8} parent=11 // pred_check_branch
          %239 = sbr.rel (%p237) target = $region24
        $region23: #{decoder_forward.8} parent=11 // pred_region
          %s241 = ssub.s32 256, 256
          %242 = vsyncadd [#allocation9], %s241
          %s243 = sshll.u32 [#allocation8], 4
          %s244 = int_to_ptr.vmem [resolvable:$true] %s243
          %249 = dma.hbm_to_vmem [thread:$0]  %s3, 256, %s244, [#allocation9], 64, 64, 4
        $region24: #{decoder_forward.8} parent=11 // pred_fallthru
          _
        // Predicated region
        $region25: #{decoder_forward.8} parent=11 // pred_check
          %p250 = pneg %p132
        $region26: #{decoder_forward.8} parent=11 // pred_check_branch
          %252 = sbr.rel (%p250) target = $region28
        $region27: #{decoder_forward.8} parent=11 // pred_region
          %s254 = ssub.s32 16, 16
          %255 = vsyncadd [#allocation9], %s254
          %s257 = sshll.u32 [#allocation10], 4
          %s258 = int_to_ptr.vmem [resolvable:$true] %s257
          %260 = dma.hbm_to_vmem [thread:$0]  %s4, 16, %s258, [#allocation9]
        $region28: #{decoder_forward.8} parent=11 // pred_fallthru
          _
        // Predicated region
        $region29: #{decoder_forward.8} parent=11 // pred_check
          %p261 = pneg %p153
        $region30: #{decoder_forward.8} parent=11 // pred_check_branch
          %263 = sbr.rel (%p261) target = $region32
        $region31: #{decoder_forward.8} parent=11 // pred_region
          %s265 = ssub.s32 512, 512
          %266 = vsyncadd [#allocation12], %s265
          %s267 = sshll.u32 [#allocation11], 4
          %s268 = int_to_ptr.vmem [resolvable:$true] %s267
          %273 = dma.hbm_to_vmem [thread:$0]  %s5, 512, %s268, [#allocation12], 64, 64, 4
        $region32: #{decoder_forward.8} parent=11 // pred_fallthru
          _
        // Predicated region
        $region33: #{decoder_forward.8} parent=11 // pred_check
          %p274 = pneg %p174
        $region34: #{decoder_forward.8} parent=11 // pred_check_branch
          %276 = sbr.rel (%p274) target = $region36
        $region35: #{decoder_forward.8} parent=11 // pred_region
          %s278 = ssub.s32 16, 16
          %279 = vsyncadd [#allocation12], %s278
          %s281 = sshll.u32 [#allocation13], 4
          %s282 = int_to_ptr.vmem [resolvable:$true] %s281
          %284 = dma.hbm_to_vmem [thread:$0]  %s6, 16, %s282, [#allocation12]
        $region36: #{decoder_forward.8} parent=11 // pred_fallthru
          _
      $region12: #{decoder_forward.8} parent=5 // pred_fallthru
        _
      %p285 = scmp.lt.s32.totalorder %s22, 2
      // Predicated region
      $region37: #{decoder_forward.8} parent=5 // pred_check
        %p286 = pneg %p285
      $region38: #{decoder_forward.8} parent=5 // pred_check_branch
        %288 = sbr.rel (%p286) target = $region40
      $region39: #{decoder_forward.8} parent=5 // pred_region
        // Predicated region
        $region41: #{decoder_forward.8} parent=39 // pred_check
          %p289 = pneg %p42
        $region42: #{decoder_forward.8} parent=39 // pred_check_branch
          %291 = sbr.rel (%p289) target = $region44
        $region43: #{decoder_forward.8} parent=39 // pred_region
          %s292 = sand.u32 %s32, 1
          %s293 = scalar_lea.sflag [#allocation3], %s292
          %s294 = sand.u32 %s32, 1
          %s295 = smul.addr %s294, 16
          %s296 = scalar_lea.vmem [#allocation2], %s295
          %s297 = smul.u32 2, %s22
          %s299 = ssub.s32 256, 256
          %300 = vsyncadd %s293, %s299
          %s301 = smul.addr %s297, 128
          %s302 = scalar_lea.hbm %s0, %s301
          %s303 = sshll.u32 %s296, 4
          %s304 = int_to_ptr.vmem [resolvable:$true] %s303
          %309 = dma.hbm_to_vmem [thread:$0]  %s302, 256, %s304, %s293, 128, 128, 8
        $region44: #{decoder_forward.8} parent=39 // pred_fallthru
          _
      $region40: #{decoder_forward.8} parent=5 // pred_fallthru
        _
      %p310 = scmp.le.s32.totalorder 1, %s22
      %p311 = scmp.lt.s32.totalorder %s22, 3
      %p312 = pnand %p310, %p311
      %p313 = pneg %p312
      // Predicated region
      $region45: #{decoder_forward.8} parent=5 // pred_check
        _
      $region46: #{decoder_forward.8} parent=5 // pred_check_branch
        %315 = sbr.rel (%p312) target = $region48
      $region47: #{decoder_forward.8} parent=5 // pred_region
        %s316 = ssub.s32 %s22, 1
        %s317 = sand.u32 %s35, 1
        %s318 = scalar_lea.sflag [#allocation3], %s317
        %s319 = sand.u32 %s35, 1
        %s320 = smul.addr %s319, 16
        %s321 = scalar_lea.vmem [#allocation2], %s320
        // Predicated region
        $region49: #{decoder_forward.8} parent=47 // pred_check
          %p322 = pneg %p48
        $region50: #{decoder_forward.8} parent=47 // pred_check_branch
          %324 = sbr.rel (%p322) target = $region52
        $region51: #{decoder_forward.8} parent=47 // pred_region
          %325 = dma.done %s318, 256
        $region52: #{decoder_forward.8} parent=47 // pred_fallthru
          _
        // Predicated region
        $region53: #{decoder_forward.8} parent=47 // pred_check
          %p326 = pneg %p69
        $region54: #{decoder_forward.8} parent=47 // pred_check_branch
          %328 = sbr.rel (%p326) target = $region56
        $region55: #{decoder_forward.8} parent=47 // pred_region
          %329 = dma.done [#allocation6], 16
        $region56: #{decoder_forward.8} parent=47 // pred_fallthru
          _
        // Predicated region
        $region57: #{decoder_forward.8} parent=47 // pred_check
          %p330 = pneg %p90
        $region58: #{decoder_forward.8} parent=47 // pred_check_branch
          %332 = sbr.rel (%p330) target = $region60
        $region59: #{decoder_forward.8} parent=47 // pred_region
          %333 = dma.done [#allocation6], 16
        $region60: #{decoder_forward.8} parent=47 // pred_fallthru
          _
        // Predicated region
        $region61: #{decoder_forward.8} parent=47 // pred_check
          %p334 = pneg %p111
        $region62: #{decoder_forward.8} parent=47 // pred_check_branch
          %336 = sbr.rel (%p334) target = $region64
        $region63: #{decoder_forward.8} parent=47 // pred_region
          %337 = dma.done [#allocation9], 256
        $region64: #{decoder_forward.8} parent=47 // pred_fallthru
          _
        // Predicated region
        $region65: #{decoder_forward.8} parent=47 // pred_check
          %p338 = pneg %p132
        $region66: #{decoder_forward.8} parent=47 // pred_check_branch
          %340 = sbr.rel (%p338) target = $region68
        $region67: #{decoder_forward.8} parent=47 // pred_region
          %341 = dma.done [#allocation9], 16
        $region68: #{decoder_forward.8} parent=47 // pred_fallthru
          _
        // Predicated region
        $region69: #{decoder_forward.8} parent=47 // pred_check
          %p342 = pneg %p153
        $region70: #{decoder_forward.8} parent=47 // pred_check_branch
          %344 = sbr.rel (%p342) target = $region72
        $region71: #{decoder_forward.8} parent=47 // pred_region
          %345 = dma.done [#allocation12], 512
        $region72: #{decoder_forward.8} parent=47 // pred_fallthru
          _
        // Predicated region
        $region73: #{decoder_forward.8} parent=47 // pred_check
          %p346 = pneg %p174
        $region74: #{decoder_forward.8} parent=47 // pred_check_branch
          %348 = sbr.rel (%p346) target = $region76
        $region75: #{decoder_forward.8} parent=47 // pred_region
          %349 = dma.done [#allocation12], 16
        $region76: #{decoder_forward.8} parent=47 // pred_fallthru
          _
        %s350 = sand.u32 %s35, 1
        %s351 = scalar_lea.sflag [#allocation3], %s350
        %s352 = sand.u32 %s35, 1
        %s353 = smul.addr %s352, 16
        %s354 = scalar_lea.vmem [#allocation2], %s353
        %p355 = pneg %p48
        %p356 = pneg %p45
        %p357 = pneg %p69
        %p358 = pneg %p66
        %p359 = pneg %p90
        %p360 = pneg %p87
        %p361 = pneg %p111
        %p362 = pneg %p108
        %p363 = pneg %p132
        %p364 = pneg %p129
        %p365 = pneg %p153
        %p366 = pneg %p150
        %p367 = pneg %p174
        %p368 = pneg %p171
        %p369 = pneg %p200
        %p370 = pneg %p197
        %s371 = sand.u32 %s187, 1
        %s372 = scalar_lea.sflag [#allocation4], %s371
        %s373 = sand.u32 %s187, 1
        %s374 = smul.addr %s373, 16
        %s375 = scalar_lea.vmem [#allocation14], %s374
        %s376 = smul.u32 2, %s27
        %s377 = smul.u32 2, %s27
        %v379 = vld [vmem:[%s321] sm:$0xff]
        %v380 = vld [vmem:[%s321 + $0x8] sm:$0xff]
        %v381 = vld [vmem:[#allocation5] sm:$0x1]
        %v382 = vld [vmem:[#allocation7] sm:$0x1]
        %vm383 = vcmask 261120
        %v384 = vsel %vm383, %v379, 0.0
        %385 = vadd.xlane.f32.xlu0 %v384
        %v386 = vpop.xlane.xlu0 %385
        %v387 = vsel %vm383, %v380, 0.0
        %388 = vadd.xlane.f32.xlu0 %v387
        %v389 = vpop.xlane.xlu0 %388
        %v390 = vrcp.pop 32.0
        %v391 = vmul.f32 %v386, %v390
        %v392 = vmul.f32 %v389, %v390
        %v393 = vsub.f32 %v379, %v391
        %v394 = vsub.f32 %v380, %v392
        %v395 = vmul.f32 %v393, %v393
        %v396 = vmul.f32 %v394, %v394
        %v397 = vsel %vm383, %v395, 0.0
        %398 = vadd.xlane.f32.xlu0 %v397
        %v399 = vpop.xlane.xlu0 %398
        %v400 = vsel %vm383, %v396, 0.0
        %401 = vadd.xlane.f32.xlu0 %v400
        %v402 = vpop.xlane.xlu0 %401
        %v403 = vmul.f32 %v399, %v390
        %v404 = vmul.f32 %v402, %v390
        %v405 = vadd.f32 %v403, 1e-05
        %v406 = vadd.f32 %v404, 1e-05
        %v407 = vrsqrt.pop %v405
        %v408 = vrsqrt.pop %v406
        %v409 = vmul.f32 %v393, %v407
        %v410 = vmul.f32 %v394, %v408
        %v412 = vlaneseq
        %v413 = vshrl.u32 %v412, 7
        %v414 = vsub.s32 0, %v413
        %v415 = vrot.slane %v381, %v414
        %v417 = vmul.f32 %v409, %v415
        %v418 = vmul.f32 %v410, %v415
        %v420 = vlaneseq
        %v421 = vshrl.u32 %v420, 7
        %v422 = vsub.s32 0, %v421
        %v423 = vrot.slane %v382, %v422
        %v425 = vadd.f32 %v417, %v423
        %v426 = vadd.f32 %v418, %v423
        %v427 = vpack.c.bf16 %v426, %v425
        %v428 = vld [vmem:[#allocation8] sm:$0xf]
        %v429 = vld [vmem:[#allocation8 + $0x4] sm:$0xf]
        %v430 = vld [vmem:[#allocation8 + $0x8] sm:$0xf]
        %v431 = vld [vmem:[#allocation8 + $0xc] sm:$0xf]
        %v432 = vld [vmem:[#allocation10] sm:$0x1]
        %v434 = vlaneseq
        %v435 = vshrl.u32 %v434, 7
        %v436 = vsub.s32 0, %v435
        %v437 = vrot.slane %v432, %v436
        %v443 = vunpack.c.l.b16 %v428
        %v444 = vunpack.c.l.b16 %v429
        %v445 = vunpack.c.l.b16 %v430
        %v446 = vunpack.c.l.b16 %v431
        %v447 = vpack.c.b16 %v444, %v443
        %v448 = vpack.c.b16 %v446, %v445
        %v452 = vsel %vm383, %v427, 0
        %454 = vmatprep.subr.bf16.mxu0 0
        %455 = vmatpush1.bf16.msra.mxu0 %v447
        %456 = vmatprep.subr.bf16.mxu0 0
        %457 = vmatpush1.bf16.msra.mxu0 %v448
        %458 = vmatprep.subr.bf16.mxu0 0
        %459 = vmatpush1.bf16.msra.mxu0 0
        %460 = vmatprep.subr.bf16.mxu0 0
        %461 = vmatpush1.bf16.msra.mxu0 0
        %462 = vmatprep.subr.bf16.mxu0 0
        %463 = vmatpush1.bf16.msra.mxu0 0
        %464 = vmatprep.subr.bf16.mxu0 0
        %465 = vmatpush1.bf16.msra.mxu0 0
        %466 = vmatprep.subr.bf16.mxu0 0
        %467 = vmatpush1.bf16.msra.mxu0 0
        %468 = vmatprep.subr.bf16.mxu0 0
        %469 = vmatpush1.bf16.msra.mxu0 0
        %470 = vmatprep.subr.bf16.mxu0 0
        %471 = vmatpush1.bf16.msra.mxu0 0
        %472 = vmatprep.subr.bf16.mxu0 0
        %473 = vmatpush1.bf16.msra.mxu0 0
        %474 = vmatprep.subr.bf16.mxu0 0
        %475 = vmatpush1.bf16.msra.mxu0 0
        %476 = vmatprep.subr.bf16.mxu0 0
        %477 = vmatpush1.bf16.msra.mxu0 0
        %478 = vmatprep.subr.bf16.mxu0 0
        %479 = vmatpush1.bf16.msra.mxu0 0
        %480 = vmatprep.subr.bf16.mxu0 0
        %481 = vmatpush1.bf16.msra.mxu0 0
        %482 = vmatprep.subr.bf16.mxu0 0
        %483 = vmatpush1.bf16.msra.mxu0 0
        %484 = vmatprep.subr.bf16.mxu0 0
        %485 = vmatpush1.bf16.msra.mxu0 0
        %486 = vmatprep.mubr.bf16.mxu0 0
        %487 = vmatmul.mubr.bf16.gmra.mrb[0].mxu0 %v452
        %v488 = vpop.f32.mrb[0].mxu0
        %v489 = vadd.f32 %v437, %v488
        %v490 = vpop.f32.mrb[0].mxu0
        %v491 = vpop.f32.mrb[0].mxu0
        %v492 = vadd.f32 %v437, %v491
        %v493 = vpop.f32.mrb[0].mxu0
        %494 = vdwg.mxu0
        %v495 = vmax.f32 %v489, 0.0
        %v496 = vmax.f32 %v492, 0.0
        %v497 = vpack.c.bf16 %v496, %v495
        %v498 = vld [vmem:[#allocation11] sm:$0xf]
        %v499 = vld [vmem:[#allocation11 + $0x4] sm:$0xf]
        %v500 = vld [vmem:[#allocation11 + $0x8] sm:$0xf]
        %v501 = vld [vmem:[#allocation11 + $0xc] sm:$0xf]
        %v502 = vld [vmem:[#allocation11 + $0x10] sm:$0xf]
        %v503 = vld [vmem:[#allocation11 + $0x14] sm:$0xf]
        %v504 = vld [vmem:[#allocation11 + $0x18] sm:$0xf]
        %v505 = vld [vmem:[#allocation11 + $0x1c] sm:$0xf]
        %v506 = vld [vmem:[#allocation13] sm:$0x1]
        %v508 = vlaneseq
        %v509 = vshrl.u32 %v508, 7
        %v510 = vsub.s32 0, %v509
        %v511 = vrot.slane %v506, %v510
        %v521 = vunpack.c.l.b16 %v498
        %v522 = vunpack.c.l.b16 %v499
        %v523 = vunpack.c.l.b16 %v500
        %v524 = vunpack.c.l.b16 %v501
        %v525 = vunpack.c.l.b16 %v502
        %v526 = vunpack.c.l.b16 %v503
        %v527 = vunpack.c.l.b16 %v504
        %v528 = vunpack.c.l.b16 %v505
        %v529 = vpack.c.b16 %v522, %v521
        %v530 = vpack.c.b16 %v524, %v523
        %v531 = vpack.c.b16 %v526, %v525
        %v532 = vpack.c.b16 %v528, %v527
        %vm537 = vcmask 523264
        %v539 = vsel %vm537, %v497, 0
        %541 = vmatprep.subr.bf16.mxu0 0
        %542 = vmatpush1.bf16.msra.mxu0 %v529
        %543 = vmatprep.subr.bf16.mxu0 0
        %544 = vmatpush1.bf16.msra.mxu0 %v530
        %545 = vmatprep.subr.bf16.mxu0 0
        %546 = vmatpush1.bf16.msra.mxu0 %v531
        %547 = vmatprep.subr.bf16.mxu0 0
        %548 = vmatpush1.bf16.msra.mxu0 %v532
        %549 = vmatprep.subr.bf16.mxu0 0
        %550 = vmatpush1.bf16.msra.mxu0 0
        %551 = vmatprep.subr.bf16.mxu0 0
        %552 = vmatpush1.bf16.msra.mxu0 0
        %553 = vmatprep.subr.bf16.mxu0 0
        %554 = vmatpush1.bf16.msra.mxu0 0
        %555 = vmatprep.subr.bf16.mxu0 0
        %556 = vmatpush1.bf16.msra.mxu0 0
        %557 = vmatprep.subr.bf16.mxu0 0
        %558 = vmatpush1.bf16.msra.mxu0 0
        %559 = vmatprep.subr.bf16.mxu0 0
        %560 = vmatpush1.bf16.msra.mxu0 0
        %561 = vmatprep.subr.bf16.mxu0 0
        %562 = vmatpush1.bf16.msra.mxu0 0
        %563 = vmatprep.subr.bf16.mxu0 0
        %564 = vmatpush1.bf16.msra.mxu0 0
        %565 = vmatprep.subr.bf16.mxu0 0
        %566 = vmatpush1.bf16.msra.mxu0 0
        %567 = vmatprep.subr.bf16.mxu0 0
        %568 = vmatpush1.bf16.msra.mxu0 0
        %569 = vmatprep.subr.bf16.mxu0 0
        %570 = vmatpush1.bf16.msra.mxu0 0
        %571 = vmatprep.subr.bf16.mxu0 0
        %572 = vmatpush1.bf16.msra.mxu0 0
        %573 = vmatprep.mubr.bf16.mxu0 0
        %574 = vmatmul.mubr.bf16.gmra.mrb[0].mxu0 %v539
        %v575 = vpop.f32.mrb[0].mxu0
        %v576 = vadd.f32 %v511, %v575
        %v577 = vpop.f32.mrb[0].mxu0
        %v578 = vpop.f32.mrb[0].mxu0
        %v579 = vadd.f32 %v511, %v578
        %v580 = vpop.f32.mrb[0].mxu0
        %581 = vdwg.mxu0
        %v582 = vadd.f32 %v379, %v576
        %v583 = vadd.f32 %v380, %v579
        %584 = vst.msk [vmem:[%s375] sm:$0xff] %vm383, %v582
        %585 = vst.msk [vmem:[%s375 + $0x8] sm:$0xff] %vm383, %v583
        %s586 = sand.u32 %s187, 1
        %s587 = scalar_lea.sflag [#allocation4], %s586
        %s588 = sand.u32 %s187, 1
        %s589 = smul.addr %s588, 16
        %s590 = scalar_lea.vmem [#allocation14], %s589
        // Predicated region
        $region77: #{decoder_forward.8} parent=47 // pred_check
          %p591 = pneg %p197
        $region78: #{decoder_forward.8} parent=47 // pred_check_branch
          %593 = sbr.rel (%p591) target = $region80
        $region79: #{decoder_forward.8} parent=47 // pred_region
          %s594 = smul.u32 2, %s27
          %s596 = ssub.s32 256, 256
          %597 = vsyncadd %s587, %s596
          %s598 = smul.addr %s594, 128
          %s599 = scalar_lea.hbm %s7, %s598
          %s600 = sshll.u32 %s590, 4
          %s601 = int_to_ptr.vmem [resolvable:$true] %s600
          %606 = dma.vmem_to_hbm [thread:$0]  %s601, 256, %s599, %s587, 128, 128, 8
        $region80: #{decoder_forward.8} parent=47 // pred_fallthru
          _
      $region48: #{decoder_forward.8} parent=5 // pred_fallthru
        _
      %p607 = scmp.le.s32.totalorder 2, %s22
      // Predicated region
      $region81: #{decoder_forward.8} parent=5 // pred_check
        %p608 = pneg %p607
      $region82: #{decoder_forward.8} parent=5 // pred_check_branch
        %610 = sbr.rel (%p608) target = $region84
      $region83: #{decoder_forward.8} parent=5 // pred_region
        %s611 = ssub.s32 %s22, 2
        // Predicated region
        $region85: #{decoder_forward.8} parent=83 // pred_check
          %p612 = pneg %p203
        $region86: #{decoder_forward.8} parent=83 // pred_check_branch
          %614 = sbr.rel (%p612) target = $region88
        $region87: #{decoder_forward.8} parent=83 // pred_region
          %s615 = sand.u32 %s188, 1
          %s616 = scalar_lea.sflag [#allocation4], %s615
          %s617 = sand.u32 %s188, 1
          %s618 = smul.addr %s617, 16
          %s619 = scalar_lea.vmem [#allocation14], %s618
          %620 = dma.done %s616, 256
        $region88: #{decoder_forward.8} parent=83 // pred_fallthru
          _
      $region84: #{decoder_forward.8} parent=5 // pred_fallthru
        _
    $region6: #{decoder_forward.8} parent=1 // loop_footer
      %s26 = sadd.s32 1, %s22
    $region7: #{decoder_forward.8} parent=1 // loop_footer_branch
      %21 = sbr.rel target = $region3
    $region8: #{decoder_forward.8} parent=1 // loop_exit
      _
    %621 = vsyncpa [#allocation3], 1
    %s622 = scalar_lea.sflag [#allocation3], 1
    %623 = vsyncpa %s622, 1
    %624 = vsyncpa [#allocation6], 1
    %625 = vsyncpa [#allocation9], 1
    %626 = vsyncpa [#allocation12], 1
    %627 = vsyncpa [#allocation4], 1
    %s628 = scalar_lea.sflag [#allocation4], 1
    %629 = vsyncpa %s628, 1

// kernel: decoder_forward.7
$region0: #{decoder_forward.7}
  #allocation0 [shape = 'u32[]', space=smem, size = 0x4, offset = 0x4, fixed_abs, tag = 'smem constant byte address 0x4 - core index']
  #allocation1 [shape = 'u32[144,128]{1,0:T(1,128)}', space=vmem, size = 0x12000, scoped, tag = 'internal scratch']
  %s0 = inlined_call_operand.hbm [shape: f32[2,16,32], index: 0, kind: input, shape index: {}]
  %s1 = inlined_call_operand.hbm [shape: f32[2,8,32], index: 1, kind: input, shape index: {}]
  %s2 = inlined_call_operand.hbm [shape: f32[1,32], index: 2, kind: input, shape index: {}]
  %s3 = inlined_call_operand.hbm [shape: f32[1,32], index: 3, kind: input, shape index: {}]
  %s4 = inlined_call_operand.hbm [shape: f32[1,32], index: 4, kind: input, shape index: {}]
  %s5 = inlined_call_operand.hbm [shape: f32[1,32], index: 5, kind: input, shape index: {}]
  %s6 = inlined_call_operand.hbm [shape: bf16[32,32], index: 6, kind: input, shape index: {}]
  %s7 = inlined_call_operand.hbm [shape: f32[1,32], index: 7, kind: input, shape index: {}]
  %s8 = inlined_call_operand.hbm [shape: bf16[32,64], index: 8, kind: input, shape index: {}]
  %s9 = inlined_call_operand.hbm [shape: f32[1,64], index: 9, kind: input, shape index: {}]
  %s10 = inlined_call_operand.hbm [shape: bf16[32,32], index: 10, kind: input, shape index: {}]
  %s11 = inlined_call_operand.hbm [shape: f32[1,32], index: 11, kind: input, shape index: {}]
  %s12 = inlined_call_operand.hbm [shape: f32[2,16,32], index: 12, kind: output, shape index: {}]
  %s13 = sld [smem:[#allocation0]]
  $region129: #{decoder_forward.7} parent=0
    _
  %s15 = ssub.s32 1, %s13
  %s16 = scalar_select 0, %s15, %s13
  $region1: #{decoder_forward.7} parent=0
    #allocation2 [shape = 'u8[16384]{0}', space=vmem, size = 0x4000, scoped, tag = 'input window, operand 0']
    #allocation3 [shape = 's32[2]{0}', space=sflag, size = 0x8, scoped, tag = 'scoped memory for decoder_forward.7']
    #allocation4 [shape = 's32[2]{0}', space=sflag, size = 0x8, scoped, tag = 'scoped memory for decoder_forward.7']
    #allocation5 [shape = 'u8[8192]{0}', space=vmem, size = 0x2000, scoped, tag = 'input window, operand 1']
    #allocation6 [shape = 's32[2]{0}', space=sflag, size = 0x8, scoped, tag = 'scoped memory for decoder_forward.7']
    #allocation7 [shape = 'u8[512]{0}', space=vmem, size = 0x400, scoped, tag = 'input window, operand 2, single buffered']
    #allocation8 [shape = 'u8[512]{0}', space=vmem, size = 0x400, scoped, tag = 'input window, operand 3, single buffered']
    #allocation9 [shape = 's32[1]{0}', space=sflag, size = 0x4, scoped, tag = 'scoped memory for decoder_forward.7']
    #allocation10 [shape = 'u8[512]{0}', space=vmem, size = 0x400, scoped, tag = 'input window, operand 4, single buffered']
    #allocation11 [shape = 'u8[512]{0}', space=vmem, size = 0x400, scoped, tag = 'input window, operand 5, single buffered']
    #allocation12 [shape = 's32[1]{0}', space=sflag, size = 0x4, scoped, tag = 'scoped memory for decoder_forward.7']
    #allocation13 [shape = 'u8[8192]{0}', space=vmem, size = 0x2000, scoped, tag = 'input window, operand 6, single buffered']
    #allocation14 [shape = 'u8[512]{0}', space=vmem, size = 0x400, scoped, tag = 'input window, operand 7, single buffered']
    #allocation15 [shape = 's32[1]{0}', space=sflag, size = 0x4, scoped, tag = 'scoped memory for decoder_forward.7']
    #allocation16 [shape = 'u8[8192]{0}', space=vmem, size = 0x2000, scoped, tag = 'input window, operand 8, single buffered']
    #allocation17 [shape = 'u8[512]{0}', space=vmem, size = 0x400, scoped, tag = 'input window, operand 9, single buffered']
    #allocation18 [shape = 's32[1]{0}', space=sflag, size = 0x4, scoped, tag = 'scoped memory for decoder_forward.7']
    #allocation19 [shape = 'u8[8192]{0}', space=vmem, size = 0x2000, scoped, tag = 'input window, operand 10, single buffered']
    #allocation20 [shape = 'u8[512]{0}', space=vmem, size = 0x400, scoped, tag = 'input window, operand 11, single buffered']
    #allocation21 [shape = 's32[1]{0}', space=sflag, size = 0x4, scoped, tag = 'scoped memory for decoder_forward.7']
    #allocation22 [shape = 'u8[16384]{0}', space=vmem, size = 0x4000, scoped, tag = 'output window, operand 0']
    %17 = vsyncpa [#allocation3], 0
    %s18 = scalar_lea.sflag [#allocation3], 1
    %19 = vsyncpa %s18, 0
    %20 = vsyncpa [#allocation6], 0
    %s21 = scalar_lea.sflag [#allocation6], 1
    %22 = vsyncpa %s21, 0
    %23 = vsyncpa [#allocation9], 0
    %24 = vsyncpa [#allocation12], 0
    %25 = vsyncpa [#allocation15], 0
    %26 = vsyncpa [#allocation18], 0
    %27 = vsyncpa [#allocation21], 0
    %28 = vsyncpa [#allocation4], 0
    %s29 = scalar_lea.sflag [#allocation4], 1
    %30 = vsyncpa %s29, 0
    loop: start=0, step=1, limit=4
    $region2: #{decoder_forward.7} parent=1 // loop_pre_header
      _
    $region3: #{decoder_forward.7} parent=1 // loop_header
      %s32 = sphi 0, %s36
      %p33 = scmp.ge.s32.totalorder %s32, 4
      %s42 = sphi 0, %s44
      %s45 = sphi 0, %s42
      %s46 = sphi 0, %s45
      %s62 = sphi 0, %s46
      %s68 = sphi 0, %s70
      %s71 = sphi 0, %s68
      %s72 = sphi 0, %s71
      %s88 = sphi 0, %s72
      %s92 = sphi 0, %s92
      %s94 = sphi 0, %s92
      %s95 = sphi 0, %s94
      %s109 = sphi 0, %s95
      %s113 = sphi 0, %s113
      %s115 = sphi 0, %s113
      %s116 = sphi 0, %s115
      %s130 = sphi 0, %s116
      %s134 = sphi 0, %s134
      %s136 = sphi 0, %s134
      %s137 = sphi 0, %s136
      %s151 = sphi 0, %s137
      %s155 = sphi 0, %s155
      %s157 = sphi 0, %s155
      %s158 = sphi 0, %s157
      %s172 = sphi 0, %s158
      %s176 = sphi 0, %s176
      %s178 = sphi 0, %s176
      %s179 = sphi 0, %s178
      %s193 = sphi 0, %s179
      %s197 = sphi 0, %s197
      %s199 = sphi 0, %s197
      %s200 = sphi 0, %s199
      %s214 = sphi 0, %s200
      %s218 = sphi 0, %s218
      %s220 = sphi 0, %s218
      %s221 = sphi 0, %s220
      %s235 = sphi 0, %s221
      %s239 = sphi 0, %s239
      %s241 = sphi 0, %s239
      %s242 = sphi 0, %s241
      %s256 = sphi 0, %s242
      %s260 = sphi 0, %s260
      %s262 = sphi 0, %s260
      %s263 = sphi 0, %s262
      %s277 = sphi 0, %s263
      %s281 = sphi 0, %s281
      %s283 = sphi 0, %s281
      %s284 = sphi 0, %s283
      %s298 = sphi 0, %s284
      %s304 = sphi 0, %s306
      %s307 = sphi 0, %s304
      %s308 = sphi 0, %s307
      %s324 = sphi 0, %s308
    $region4: #{decoder_forward.7} parent=1 // loop_header_branch
      %35 = sbr.rel (%p33) target = $region8
    $region5: #{decoder_forward.7} parent=1 // loop_body
      %s37 = ssub.s32 %s32, 1
      %s38 = ssub.s32 %s32, 2
      %s39 = sadd.s32 %s32, 1
      %s40 = ssub.s32 %s32, %s39
      %p41 = scmp.eq.s32.totalorder %s40, 0
      %s43 = sadd.s32 %s42, 1
      %s44 = scalar_select %p41, %s42, %s43
      %p47 = pneg %p41
      %p48 = scmp.eq.s32.totalorder %s32, 1
      %p49 = por %p47, %p48
      %p50 = scmp.ne.s32.totalorder %s42, %s45
      %p51 = scmp.eq.s32.totalorder %s32, 0
      %p52 = por %p50, %p51
      %p53 = scmp.ne.s32.totalorder %s42, %s45
      %p54 = scmp.eq.s32.totalorder %s37, 1
      %p55 = por %p53, %p54
      %p56 = scmp.ne.s32.totalorder %s45, %s46
      %p57 = scmp.eq.s32.totalorder %s37, 0
      %p58 = por %p56, %p57
      %p59 = scmp.ne.s32.totalorder %s45, %s46
      %p60 = scmp.eq.s32.totalorder %s38, 1
      %p61 = por %p59, %p60
      %p63 = scmp.ne.s32.totalorder %s46, %s62
      %p64 = scmp.eq.s32.totalorder %s38, 0
      %p65 = por %p63, %p64
      %s66 = ssub.s32 %s32, %s39
      %p67 = scmp.eq.s32.totalorder %s66, 0
      %s69 = sadd.s32 %s68, 1
      %s70 = scalar_select %p67, %s68, %s69
      %p73 = pneg %p67
      %p74 = scmp.eq.s32.totalorder %s32, 1
      %p75 = por %p73, %p74
      %p76 = scmp.ne.s32.totalorder %s68, %s71
      %p77 = scmp.eq.s32.totalorder %s32, 0
      %p78 = por %p76, %p77
      %p79 = scmp.ne.s32.totalorder %s68, %s71
      %p80 = scmp.eq.s32.totalorder %s37, 1
      %p81 = por %p79, %p80
      %p82 = scmp.ne.s32.totalorder %s71, %s72
      %p83 = scmp.eq.s32.totalorder %s37, 0
      %p84 = por %p82, %p83
      %p85 = scmp.ne.s32.totalorder %s71, %s72
      %p86 = scmp.eq.s32.totalorder %s38, 1
      %p87 = por %p85, %p86
      %p89 = scmp.ne.s32.totalorder %s72, %s88
      %p90 = scmp.eq.s32.totalorder %s38, 0
      %p91 = por %p89, %p90
      %s93 = sadd.s32 %s92, 1
      %p96 = scmp.eq.s32.totalorder %s32, 1
      %p97 = scmp.ne.s32.totalorder %s92, %s94
      %p98 = scmp.eq.s32.totalorder %s32, 0
      %p99 = por %p97, %p98
      %p100 = scmp.ne.s32.totalorder %s92, %s94
      %p101 = scmp.eq.s32.totalorder %s37, 1
      %p102 = por %p100, %p101
      %p103 = scmp.ne.s32.totalorder %s94, %s95
      %p104 = scmp.eq.s32.totalorder %s37, 0
      %p105 = por %p103, %p104
      %p106 = scmp.ne.s32.totalorder %s94, %s95
      %p107 = scmp.eq.s32.totalorder %s38, 1
      %p108 = por %p106, %p107
      %p110 = scmp.ne.s32.totalorder %s95, %s109
      %p111 = scmp.eq.s32.totalorder %s38, 0
      %p112 = por %p110, %p111
      %s114 = sadd.s32 %s113, 1
      %p117 = scmp.eq.s32.totalorder %s32, 1
      %p118 = scmp.ne.s32.totalorder %s113, %s115
      %p119 = scmp.eq.s32.totalorder %s32, 0
      %p120 = por %p118, %p119
      %p121 = scmp.ne.s32.totalorder %s113, %s115
      %p122 = scmp.eq.s32.totalorder %s37, 1
      %p123 = por %p121, %p122
      %p124 = scmp.ne.s32.totalorder %s115, %s116
      %p125 = scmp.eq.s32.totalorder %s37, 0
      %p126 = por %p124, %p125
      %p127 = scmp.ne.s32.totalorder %s115, %s116
      %p128 = scmp.eq.s32.totalorder %s38, 1
      %p129 = por %p127, %p128
      %p131 = scmp.ne.s32.totalorder %s116, %s130
      %p132 = scmp.eq.s32.totalorder %s38, 0
      %p133 = por %p131, %p132
      %s135 = sadd.s32 %s134, 1
      %p138 = scmp.eq.s32.totalorder %s32, 1
      %p139 = scmp.ne.s32.totalorder %s134, %s136
      %p140 = scmp.eq.s32.totalorder %s32, 0
      %p141 = por %p139, %p140
      %p142 = scmp.ne.s32.totalorder %s134, %s136
      %p143 = scmp.eq.s32.totalorder %s37, 1
      %p144 = por %p142, %p143
      %p145 = scmp.ne.s32.totalorder %s136, %s137
      %p146 = scmp.eq.s32.totalorder %s37, 0
      %p147 = por %p145, %p146
      %p148 = scmp.ne.s32.totalorder %s136, %s137
      %p149 = scmp.eq.s32.totalorder %s38, 1
      %p150 = por %p148, %p149
      %p152 = scmp.ne.s32.totalorder %s137, %s151
      %p153 = scmp.eq.s32.totalorder %s38, 0
      %p154 = por %p152, %p153
      %s156 = sadd.s32 %s155, 1
      %p159 = scmp.eq.s32.totalorder %s32, 1
      %p160 = scmp.ne.s32.totalorder %s155, %s157
      %p161 = scmp.eq.s32.totalorder %s32, 0
      %p162 = por %p160, %p161
      %p163 = scmp.ne.s32.totalorder %s155, %s157
      %p164 = scmp.eq.s32.totalorder %s37, 1
      %p165 = por %p163, %p164
      %p166 = scmp.ne.s32.totalorder %s157, %s158
      %p167 = scmp.eq.s32.totalorder %s37, 0
      %p168 = por %p166, %p167
      %p169 = scmp.ne.s32.totalorder %s157, %s158
      %p170 = scmp.eq.s32.totalorder %s38, 1
      %p171 = por %p169, %p170
      %p173 = scmp.ne.s32.totalorder %s158, %s172
      %p174 = scmp.eq.s32.totalorder %s38, 0
      %p175 = por %p173, %p174
      %s177 = sadd.s32 %s176, 1
      %p180 = scmp.eq.s32.totalorder %s32, 1
      %p181 = scmp.ne.s32.totalorder %s176, %s178
      %p182 = scmp.eq.s32.totalorder %s32, 0
      %p183 = por %p181, %p182
      %p184 = scmp.ne.s32.totalorder %s176, %s178
      %p185 = scmp.eq.s32.totalorder %s37, 1
      %p186 = por %p184, %p185
      %p187 = scmp.ne.s32.totalorder %s178, %s179
      %p188 = scmp.eq.s32.totalorder %s37, 0
      %p189 = por %p187, %p188
      %p190 = scmp.ne.s32.totalorder %s178, %s179
      %p191 = scmp.eq.s32.totalorder %s38, 1
      %p192 = por %p190, %p191
      %p194 = scmp.ne.s32.totalorder %s179, %s193
      %p195 = scmp.eq.s32.totalorder %s38, 0
      %p196 = por %p194, %p195
      %s198 = sadd.s32 %s197, 1
      %p201 = scmp.eq.s32.totalorder %s32, 1
      %p202 = scmp.ne.s32.totalorder %s197, %s199
      %p203 = scmp.eq.s32.totalorder %s32, 0
      %p204 = por %p202, %p203
      %p205 = scmp.ne.s32.totalorder %s197, %s199
      %p206 = scmp.eq.s32.totalorder %s37, 1
      %p207 = por %p205, %p206
      %p208 = scmp.ne.s32.totalorder %s199, %s200
      %p209 = scmp.eq.s32.totalorder %s37, 0
      %p210 = por %p208, %p209
      %p211 = scmp.ne.s32.totalorder %s199, %s200
      %p212 = scmp.eq.s32.totalorder %s38, 1
      %p213 = por %p211, %p212
      %p215 = scmp.ne.s32.totalorder %s200, %s214
      %p216 = scmp.eq.s32.totalorder %s38, 0
      %p217 = por %p215, %p216
      %s219 = sadd.s32 %s218, 1
      %p222 = scmp.eq.s32.totalorder %s32, 1
      %p223 = scmp.ne.s32.totalorder %s218, %s220
      %p224 = scmp.eq.s32.totalorder %s32, 0
      %p225 = por %p223, %p224
      %p226 = scmp.ne.s32.totalorder %s218, %s220
      %p227 = scmp.eq.s32.totalorder %s37, 1
      %p228 = por %p226, %p227
      %p229 = scmp.ne.s32.totalorder %s220, %s221
      %p230 = scmp.eq.s32.totalorder %s37, 0
      %p231 = por %p229, %p230
      %p232 = scmp.ne.s32.totalorder %s220, %s221
      %p233 = scmp.eq.s32.totalorder %s38, 1
      %p234 = por %p232, %p233
      %p236 = scmp.ne.s32.totalorder %s221, %s235
      %p237 = scmp.eq.s32.totalorder %s38, 0
      %p238 = por %p236, %p237
      %s240 = sadd.s32 %s239, 1
      %p243 = scmp.eq.s32.totalorder %s32, 1
      %p244 = scmp.ne.s32.totalorder %s239, %s241
      %p245 = scmp.eq.s32.totalorder %s32, 0
      %p246 = por %p244, %p245
      %p247 = scmp.ne.s32.totalorder %s239, %s241
      %p248 = scmp.eq.s32.totalorder %s37, 1
      %p249 = por %p247, %p248
      %p250 = scmp.ne.s32.totalorder %s241, %s242
      %p251 = scmp.eq.s32.totalorder %s37, 0
      %p252 = por %p250, %p251
      %p253 = scmp.ne.s32.totalorder %s241, %s242
      %p254 = scmp.eq.s32.totalorder %s38, 1
      %p255 = por %p253, %p254
      %p257 = scmp.ne.s32.totalorder %s242, %s256
      %p258 = scmp.eq.s32.totalorder %s38, 0
      %p259 = por %p257, %p258
      %s261 = sadd.s32 %s260, 1
      %p264 = scmp.eq.s32.totalorder %s32, 1
      %p265 = scmp.ne.s32.totalorder %s260, %s262
      %p266 = scmp.eq.s32.totalorder %s32, 0
      %p267 = por %p265, %p266
      %p268 = scmp.ne.s32.totalorder %s260, %s262
      %p269 = scmp.eq.s32.totalorder %s37, 1
      %p270 = por %p268, %p269
      %p271 = scmp.ne.s32.totalorder %s262, %s263
      %p272 = scmp.eq.s32.totalorder %s37, 0
      %p273 = por %p271, %p272
      %p274 = scmp.ne.s32.totalorder %s262, %s263
      %p275 = scmp.eq.s32.totalorder %s38, 1
      %p276 = por %p274, %p275
      %p278 = scmp.ne.s32.totalorder %s263, %s277
      %p279 = scmp.eq.s32.totalorder %s38, 0
      %p280 = por %p278, %p279
      %s282 = sadd.s32 %s281, 1
      %p285 = scmp.eq.s32.totalorder %s32, 1
      %p286 = scmp.ne.s32.totalorder %s281, %s283
      %p287 = scmp.eq.s32.totalorder %s32, 0
      %p288 = por %p286, %p287
      %p289 = scmp.ne.s32.totalorder %s281, %s283
      %p290 = scmp.eq.s32.totalorder %s37, 1
      %p291 = por %p289, %p290
      %p292 = scmp.ne.s32.totalorder %s283, %s284
      %p293 = scmp.eq.s32.totalorder %s37, 0
      %p294 = por %p292, %p293
      %p295 = scmp.ne.s32.totalorder %s283, %s284
      %p296 = scmp.eq.s32.totalorder %s38, 1
      %p297 = por %p295, %p296
      %p299 = scmp.ne.s32.totalorder %s284, %s298
      %p300 = scmp.eq.s32.totalorder %s38, 0
      %p301 = por %p299, %p300
      %s302 = ssub.s32 %s32, %s39
      %p303 = scmp.eq.s32.totalorder %s302, 0
      %s305 = sadd.s32 %s304, 1
      %s306 = scalar_select %p303, %s304, %s305
      %p309 = pneg %p303
      %p310 = scmp.eq.s32.totalorder %s32, 1
      %p311 = por %p309, %p310
      %p312 = scmp.ne.s32.totalorder %s304, %s307
      %p313 = scmp.eq.s32.totalorder %s32, 0
      %p314 = por %p312, %p313
      %p315 = scmp.ne.s32.totalorder %s304, %s307
      %p316 = scmp.eq.s32.totalorder %s37, 1
      %p317 = por %p315, %p316
      %p318 = scmp.ne.s32.totalorder %s307, %s308
      %p319 = scmp.eq.s32.totalorder %s37, 0
      %p320 = por %p318, %p319
      %p321 = scmp.ne.s32.totalorder %s307, %s308
      %p322 = scmp.eq.s32.totalorder %s38, 1
      %p323 = por %p321, %p322
      %p325 = scmp.ne.s32.totalorder %s308, %s324
      %p326 = scmp.eq.s32.totalorder %s38, 0
      %p327 = por %p325, %p326
      %p328 = scmp.le.s32.totalorder 1, %s32
      %p329 = scmp.lt.s32.totalorder %s32, 3
      %p330 = pnand %p328, %p329
      %p331 = pneg %p330
      // Predicated region
      $region9: #{decoder_forward.7} parent=5 // pred_check
        _
      $region10: #{decoder_forward.7} parent=5 // pred_check_branch
        %333 = sbr.rel (%p330) target = $region12
      $region11: #{decoder_forward.7} parent=5 // pred_region
        %s334 = ssub.s32 %s32, 1
        // Predicated region
        $region13: #{decoder_forward.7} parent=11 // pred_check
          %p335 = pneg %p105
        $region14: #{decoder_forward.7} parent=11 // pred_check_branch
          %337 = sbr.rel (%p335) target = $region16
        $region15: #{decoder_forward.7} parent=11 // pred_region
          %s339 = ssub.s32 16, 16
          %340 = vsyncadd [#allocation6], %s339
          %s342 = sshll.u32 [#allocation7], 4
          %s343 = int_to_ptr.vmem [resolvable:$true] %s342
          %345 = dma.hbm_to_vmem [thread:$0]  %s2, 16, %s343, [#allocation6]
        $region16: #{decoder_forward.7} parent=11 // pred_fallthru
          _
        // Predicated region
        $region17: #{decoder_forward.7} parent=11 // pred_check
          %p346 = pneg %p126
        $region18: #{decoder_forward.7} parent=11 // pred_check_branch
          %348 = sbr.rel (%p346) target = $region20
        $region19: #{decoder_forward.7} parent=11 // pred_region
          %s350 = ssub.s32 16, 16
          %351 = vsyncadd [#allocation9], %s350
          %s353 = sshll.u32 [#allocation8], 4
          %s354 = int_to_ptr.vmem [resolvable:$true] %s353
          %356 = dma.hbm_to_vmem [thread:$0]  %s3, 16, %s354, [#allocation9]
        $region20: #{decoder_forward.7} parent=11 // pred_fallthru
          _
        // Predicated region
        $region21: #{decoder_forward.7} parent=11 // pred_check
          %p357 = pneg %p147
        $region22: #{decoder_forward.7} parent=11 // pred_check_branch
          %359 = sbr.rel (%p357) target = $region24
        $region23: #{decoder_forward.7} parent=11 // pred_region
          %s361 = ssub.s32 16, 16
          %362 = vsyncadd [#allocation9], %s361
          %s364 = sshll.u32 [#allocation10], 4
          %s365 = int_to_ptr.vmem [resolvable:$true] %s364
          %367 = dma.hbm_to_vmem [thread:$0]  %s4, 16, %s365, [#allocation9]
        $region24: #{decoder_forward.7} parent=11 // pred_fallthru
          _
        // Predicated region
        $region25: #{decoder_forward.7} parent=11 // pred_check
          %p368 = pneg %p168
        $region26: #{decoder_forward.7} parent=11 // pred_check_branch
          %370 = sbr.rel (%p368) target = $region28
        $region27: #{decoder_forward.7} parent=11 // pred_region
          %s372 = ssub.s32 16, 16
          %373 = vsyncadd [#allocation12], %s372
          %s375 = sshll.u32 [#allocation11], 4
          %s376 = int_to_ptr.vmem [resolvable:$true] %s375
          %378 = dma.hbm_to_vmem [thread:$0]  %s5, 16, %s376, [#allocation12]
        $region28: #{decoder_forward.7} parent=11 // pred_fallthru
          _
        // Predicated region
        $region29: #{decoder_forward.7} parent=11 // pred_check
          %p379 = pneg %p189
        $region30: #{decoder_forward.7} parent=11 // pred_check_branch
          %381 = sbr.rel (%p379) target = $region32
        $region31: #{decoder_forward.7} parent=11 // pred_region
          %s383 = ssub.s32 256, 256
          %384 = vsyncadd [#allocation12], %s383
          %s385 = sshll.u32 [#allocation13], 4
          %s386 = int_to_ptr.vmem [resolvable:$true] %s385
          %391 = dma.hbm_to_vmem [thread:$0]  %s6, 256, %s386, [#allocation12], 64, 64, 4
        $region32: #{decoder_forward.7} parent=11 // pred_fallthru
          _
        // Predicated region
        $region33: #{decoder_forward.7} parent=11 // pred_check
          %p392 = pneg %p210
        $region34: #{decoder_forward.7} parent=11 // pred_check_branch
          %394 = sbr.rel (%p392) target = $region36
        $region35: #{decoder_forward.7} parent=11 // pred_region
          %s396 = ssub.s32 16, 16
          %397 = vsyncadd [#allocation15], %s396
          %s399 = sshll.u32 [#allocation14], 4
          %s400 = int_to_ptr.vmem [resolvable:$true] %s399
          %402 = dma.hbm_to_vmem [thread:$0]  %s7, 16, %s400, [#allocation15]
        $region36: #{decoder_forward.7} parent=11 // pred_fallthru
          _
        // Predicated region
        $region37: #{decoder_forward.7} parent=11 // pred_check
          %p403 = pneg %p231
        $region38: #{decoder_forward.7} parent=11 // pred_check_branch
          %405 = sbr.rel (%p403) target = $region40
        $region39: #{decoder_forward.7} parent=11 // pred_region
          %s407 = ssub.s32 256, 256
          %408 = vsyncadd [#allocation15], %s407
          %s409 = sshll.u32 [#allocation16], 4
          %s410 = int_to_ptr.vmem [resolvable:$true] %s409
          %415 = dma.hbm_to_vmem [thread:$0]  %s8, 256, %s410, [#allocation15], 64, 64, 4
        $region40: #{decoder_forward.7} parent=11 // pred_fallthru
          _
        // Predicated region
        $region41: #{decoder_forward.7} parent=11 // pred_check
          %p416 = pneg %p252
        $region42: #{decoder_forward.7} parent=11 // pred_check_branch
          %418 = sbr.rel (%p416) target = $region44
        $region43: #{decoder_forward.7} parent=11 // pred_region
          %s420 = ssub.s32 16, 16
          %421 = vsyncadd [#allocation18], %s420
          %s423 = sshll.u32 [#allocation17], 4
          %s424 = int_to_ptr.vmem [resolvable:$true] %s423
          %426 = dma.hbm_to_vmem [thread:$0]  %s9, 16, %s424, [#allocation18]
        $region44: #{decoder_forward.7} parent=11 // pred_fallthru
          _
        // Predicated region
        $region45: #{decoder_forward.7} parent=11 // pred_check
          %p427 = pneg %p273
        $region46: #{decoder_forward.7} parent=11 // pred_check_branch
          %429 = sbr.rel (%p427) target = $region48
        $region47: #{decoder_forward.7} parent=11 // pred_region
          %s431 = ssub.s32 256, 256
          %432 = vsyncadd [#allocation18], %s431
          %s433 = sshll.u32 [#allocation19], 4
          %s434 = int_to_ptr.vmem [resolvable:$true] %s433
          %439 = dma.hbm_to_vmem [thread:$0]  %s10, 256, %s434, [#allocation18], 64, 64, 4
        $region48: #{decoder_forward.7} parent=11 // pred_fallthru
          _
        // Predicated region
        $region49: #{decoder_forward.7} parent=11 // pred_check
          %p440 = pneg %p294
        $region50: #{decoder_forward.7} parent=11 // pred_check_branch
          %442 = sbr.rel (%p440) target = $region52
        $region51: #{decoder_forward.7} parent=11 // pred_region
          %s444 = ssub.s32 16, 16
          %445 = vsyncadd [#allocation21], %s444
          %s447 = sshll.u32 [#allocation20], 4
          %s448 = int_to_ptr.vmem [resolvable:$true] %s447
          %450 = dma.hbm_to_vmem [thread:$0]  %s11, 16, %s448, [#allocation21]
        $region52: #{decoder_forward.7} parent=11 // pred_fallthru
          _
      $region12: #{decoder_forward.7} parent=5 // pred_fallthru
        _
      %p451 = scmp.lt.s32.totalorder %s32, 2
      // Predicated region
      $region53: #{decoder_forward.7} parent=5 // pred_check
        %p452 = pneg %p451
      $region54: #{decoder_forward.7} parent=5 // pred_check_branch
        %454 = sbr.rel (%p452) target = $region56
      $region55: #{decoder_forward.7} parent=5 // pred_region
        // Predicated region
        $region57: #{decoder_forward.7} parent=55 // pred_check
          %p455 = pneg %p52
        $region58: #{decoder_forward.7} parent=55 // pred_check_branch
          %457 = sbr.rel (%p455) target = $region60
        $region59: #{decoder_forward.7} parent=55 // pred_region
          %s458 = sand.u32 %s42, 1
          %s459 = scalar_lea.sflag [#allocation3], %s458
          %s460 = sand.u32 %s42, 1
          %s461 = smul.addr %s460, 16
          %s462 = scalar_lea.vmem [#allocation2], %s461
          %s464 = ssub.s32 256, 256
          %465 = vsyncadd %s459, %s464
          %s466 = smul.addr %s32, 2
          %s467 = smul.addr %s466, 128
          %s468 = scalar_lea.hbm %s0, %s467
          %s469 = sshll.u32 %s462, 4
          %s470 = int_to_ptr.vmem [resolvable:$true] %s469
          %475 = dma.hbm_to_vmem [thread:$0]  %s468, 256, %s470, %s459, 128, 128, 8
        $region60: #{decoder_forward.7} parent=55 // pred_fallthru
          _
        // Predicated region
        $region61: #{decoder_forward.7} parent=55 // pred_check
          %p476 = pneg %p78
        $region62: #{decoder_forward.7} parent=55 // pred_check_branch
          %478 = sbr.rel (%p476) target = $region64
        $region63: #{decoder_forward.7} parent=55 // pred_region
          %s479 = sand.u32 %s32, 1
          %s480 = scalar_lea.sflag [#allocation6], %s479
          %s481 = sand.u32 %s68, 1
          %s482 = smul.addr %s481, 8
          %s483 = scalar_lea.vmem [#allocation5], %s482
          %s485 = ssub.s32 128, 128
          %486 = vsyncadd %s480, %s485
          %s487 = smul.addr %s32, 128
          %s488 = scalar_lea.hbm %s1, %s487
          %s490 = sshll.u32 %s483, 4
          %s491 = int_to_ptr.vmem [resolvable:$true] %s490
          %493 = dma.hbm_to_vmem [thread:$0]  %s488, 128, %s491, %s480
        $region64: #{decoder_forward.7} parent=55 // pred_fallthru
          _
      $region56: #{decoder_forward.7} parent=5 // pred_fallthru
        _
      %p494 = scmp.le.s32.totalorder 1, %s32
      %p495 = scmp.lt.s32.totalorder %s32, 3
      %p496 = pnand %p494, %p495
      %p497 = pneg %p496
      // Predicated region
      $region65: #{decoder_forward.7} parent=5 // pred_check
        _
      $region66: #{decoder_forward.7} parent=5 // pred_check_branch
        %499 = sbr.rel (%p496) target = $region68
      $region67: #{decoder_forward.7} parent=5 // pred_region
        %s500 = ssub.s32 %s32, 1
        %s501 = sand.u32 %s45, 1
        %s502 = scalar_lea.sflag [#allocation3], %s501
        %s503 = sand.u32 %s45, 1
        %s504 = smul.addr %s503, 16
        %s505 = scalar_lea.vmem [#allocation2], %s504
        // Predicated region
        $region69: #{decoder_forward.7} parent=67 // pred_check
          %p506 = pneg %p58
        $region70: #{decoder_forward.7} parent=67 // pred_check_branch
          %508 = sbr.rel (%p506) target = $region72
        $region71: #{decoder_forward.7} parent=67 // pred_region
          %509 = dma.done %s502, 256
        $region72: #{decoder_forward.7} parent=67 // pred_fallthru
          _
        %s510 = sand.u32 %s37, 1
        %s511 = scalar_lea.sflag [#allocation6], %s510
        %s512 = sand.u32 %s71, 1
        %s513 = smul.addr %s512, 8
        %s514 = scalar_lea.vmem [#allocation5], %s513
        // Predicated region
        $region73: #{decoder_forward.7} parent=67 // pred_check
          %p515 = pneg %p84
        $region74: #{decoder_forward.7} parent=67 // pred_check_branch
          %517 = sbr.rel (%p515) target = $region76
        $region75: #{decoder_forward.7} parent=67 // pred_region
          %518 = dma.done %s511, 128
        $region76: #{decoder_forward.7} parent=67 // pred_fallthru
          _
        // Predicated region
        $region77: #{decoder_forward.7} parent=67 // pred_check
          %p519 = pneg %p105
        $region78: #{decoder_forward.7} parent=67 // pred_check_branch
          %521 = sbr.rel (%p519) target = $region80
        $region79: #{decoder_forward.7} parent=67 // pred_region
          %522 = dma.done [#allocation6], 16
        $region80: #{decoder_forward.7} parent=67 // pred_fallthru
          _
        // Predicated region
        $region81: #{decoder_forward.7} parent=67 // pred_check
          %p523 = pneg %p126
        $region82: #{decoder_forward.7} parent=67 // pred_check_branch
          %525 = sbr.rel (%p523) target = $region84
        $region83: #{decoder_forward.7} parent=67 // pred_region
          %526 = dma.done [#allocation9], 16
        $region84: #{decoder_forward.7} parent=67 // pred_fallthru
          _
        // Predicated region
        $region85: #{decoder_forward.7} parent=67 // pred_check
          %p527 = pneg %p147
        $region86: #{decoder_forward.7} parent=67 // pred_check_branch
          %529 = sbr.rel (%p527) target = $region88
        $region87: #{decoder_forward.7} parent=67 // pred_region
          %530 = dma.done [#allocation9], 16
        $region88: #{decoder_forward.7} parent=67 // pred_fallthru
          _
        // Predicated region
        $region89: #{decoder_forward.7} parent=67 // pred_check
          %p531 = pneg %p168
        $region90: #{decoder_forward.7} parent=67 // pred_check_branch
          %533 = sbr.rel (%p531) target = $region92
        $region91: #{decoder_forward.7} parent=67 // pred_region
          %534 = dma.done [#allocation12], 16
        $region92: #{decoder_forward.7} parent=67 // pred_fallthru
          _
        // Predicated region
        $region93: #{decoder_forward.7} parent=67 // pred_check
          %p535 = pneg %p189
        $region94: #{decoder_forward.7} parent=67 // pred_check_branch
          %537 = sbr.rel (%p535) target = $region96
        $region95: #{decoder_forward.7} parent=67 // pred_region
          %538 = dma.done [#allocation12], 256
        $region96: #{decoder_forward.7} parent=67 // pred_fallthru
          _
        // Predicated region
        $region97: #{decoder_forward.7} parent=67 // pred_check
          %p539 = pneg %p210
        $region98: #{decoder_forward.7} parent=67 // pred_check_branch
          %541 = sbr.rel (%p539) target = $region100
        $region99: #{decoder_forward.7} parent=67 // pred_region
          %542 = dma.done [#allocation15], 16
        $region100: #{decoder_forward.7} parent=67 // pred_fallthru
          _
        // Predicated region
        $region101: #{decoder_forward.7} parent=67 // pred_check
          %p543 = pneg %p231
        $region102: #{decoder_forward.7} parent=67 // pred_check_branch
          %545 = sbr.rel (%p543) target = $region104
        $region103: #{decoder_forward.7} parent=67 // pred_region
          %546 = dma.done [#allocation15], 256
        $region104: #{decoder_forward.7} parent=67 // pred_fallthru
          _
        // Predicated region
        $region105: #{decoder_forward.7} parent=67 // pred_check
          %p547 = pneg %p252
        $region106: #{decoder_forward.7} parent=67 // pred_check_branch
          %549 = sbr.rel (%p547) target = $region108
        $region107: #{decoder_forward.7} parent=67 // pred_region
          %550 = dma.done [#allocation18], 16
        $region108: #{decoder_forward.7} parent=67 // pred_fallthru
          _
        // Predicated region
        $region109: #{decoder_forward.7} parent=67 // pred_check
          %p551 = pneg %p273
        $region110: #{decoder_forward.7} parent=67 // pred_check_branch
          %553 = sbr.rel (%p551) target = $region112
        $region111: #{decoder_forward.7} parent=67 // pred_region
          %554 = dma.done [#allocation18], 256
        $region112: #{decoder_forward.7} parent=67 // pred_fallthru
          _
        // Predicated region
        $region113: #{decoder_forward.7} parent=67 // pred_check
          %p555 = pneg %p294
        $region114: #{decoder_forward.7} parent=67 // pred_check_branch
          %557 = sbr.rel (%p555) target = $region116
        $region115: #{decoder_forward.7} parent=67 // pred_region
          %558 = dma.done [#allocation21], 16
        $region116: #{decoder_forward.7} parent=67 // pred_fallthru
          _
        %s559 = sand.u32 %s45, 1
        %s560 = scalar_lea.sflag [#allocation3], %s559
        %s561 = sand.u32 %s45, 1
        %s562 = smul.addr %s561, 16
        %s563 = scalar_lea.vmem [#allocation2], %s562
        %p564 = pneg %p58
        %p565 = pneg %p55
        %s566 = sand.u32 %s37, 1
        %s567 = scalar_lea.sflag [#allocation6], %s566
        %s568 = sand.u32 %s71, 1
        %s569 = smul.addr %s568, 8
        %s570 = scalar_lea.vmem [#allocation5], %s569
        %p571 = pneg %p84
        %p572 = pneg %p81
        %p573 = pneg %p105
        %p574 = pneg %p102
        %p575 = pneg %p126
        %p576 = pneg %p123
        %p577 = pneg %p147
        %p578 = pneg %p144
        %p579 = pneg %p168
        %p580 = pneg %p165
        %p581 = pneg %p189
        %p582 = pneg %p186
        %p583 = pneg %p210
        %p584 = pneg %p207
        %p585 = pneg %p231
        %p586 = pneg %p228
        %p587 = pneg %p252
        %p588 = pneg %p249
        %p589 = pneg %p273
        %p590 = pneg %p270
        %p591 = pneg %p294
        %p592 = pneg %p291
        %p593 = pneg %p320
        %p594 = pneg %p317
        %s595 = sand.u32 %s307, 1
        %s596 = scalar_lea.sflag [#allocation4], %s595
        %s597 = sand.u32 %s307, 1
        %s598 = smul.addr %s597, 16
        %s599 = scalar_lea.vmem [#allocation22], %s598
        %v601 = vld [vmem:[%s505] sm:$0xff]
        %v602 = vld [vmem:[%s505 + $0x8] sm:$0xff]
        %v603 = vld [vmem:[%s514] sm:$0xff]
        %v604 = vld [vmem:[#allocation7] sm:$0x1]
        %v605 = vld [vmem:[#allocation8] sm:$0x1]
        %vm606 = vcmask 261120
        %v607 = vsel %vm606, %v601, 0.0
        %608 = vadd.xlane.f32.xlu0 %v607
        %v609 = vpop.xlane.xlu0 %608
        %v610 = vsel %vm606, %v602, 0.0
        %611 = vadd.xlane.f32.xlu0 %v610
        %v612 = vpop.xlane.xlu0 %611
        %v613 = vrcp.pop 32.0
        %v614 = vmul.f32 %v609, %v613
        %v615 = vmul.f32 %v612, %v613
        %v616 = vsub.f32 %v601, %v614
        %v617 = vsub.f32 %v602, %v615
        %v618 = vmul.f32 %v616, %v616
        %v619 = vmul.f32 %v617, %v617
        %v620 = vsel %vm606, %v618, 0.0
        %621 = vadd.xlane.f32.xlu0 %v620
        %v622 = vpop.xlane.xlu0 %621
        %v623 = vsel %vm606, %v619, 0.0
        %624 = vadd.xlane.f32.xlu0 %v623
        %v625 = vpop.xlane.xlu0 %624
        %v626 = vmul.f32 %v622, %v613
        %v627 = vmul.f32 %v625, %v613
        %v628 = vadd.f32 %v626, 1e-05
        %v629 = vadd.f32 %v627, 1e-05
        %v630 = vrsqrt.pop %v628
        %v631 = vrsqrt.pop %v629
        %v632 = vmul.f32 %v616, %v630
        %v633 = vmul.f32 %v617, %v631
        %v635 = vlaneseq
        %v636 = vshrl.u32 %v635, 7
        %v637 = vsub.s32 0, %v636
        %v638 = vrot.slane %v604, %v637
        %v640 = vmul.f32 %v632, %v638
        %v641 = vmul.f32 %v633, %v638
        %v643 = vlaneseq
        %v644 = vshrl.u32 %v643, 7
        %v645 = vsub.s32 0, %v644
        %v646 = vrot.slane %v605, %v645
        %v648 = vadd.f32 %v640, %v646
        %v649 = vadd.f32 %v641, %v646
        %v650 = vpack.c.bf16 %v649, %v648
        %v651 = vld [vmem:[#allocation10] sm:$0x1]
        %v652 = vld [vmem:[#allocation11] sm:$0x1]
        %v653 = vsel %vm606, %v603, 0.0
        %654 = vadd.xlane.f32.xlu0 %v653
        %v655 = vpop.xlane.xlu0 %654
        %v656 = vmul.f32 %v655, %v613
        %v657 = vsub.f32 %v603, %v656
        %v658 = vmul.f32 %v657, %v657
        %v659 = vsel %vm606, %v658, 0.0
        %660 = vadd.xlane.f32.xlu0 %v659
        %v661 = vpop.xlane.xlu0 %660
        %v662 = vmul.f32 %v661, %v613
        %v663 = vadd.f32 %v662, 1e-05
        %v664 = vrsqrt.pop %v663
        %v665 = vmul.f32 %v657, %v664
        %v667 = vlaneseq
        %v668 = vshrl.u32 %v667, 7
        %v669 = vsub.s32 0, %v668
        %v670 = vrot.slane %v651, %v669
        %v672 = vmul.f32 %v665, %v670
        %v674 = vlaneseq
        %v675 = vshrl.u32 %v674, 7
        %v676 = vsub.s32 0, %v675
        %v677 = vrot.slane %v652, %v676
        %v679 = vadd.f32 %v672, %v677
        %v680 = vpack.c.bf16 %v679, %v679
        %v681 = vld [vmem:[#allocation13] sm:$0xf]
        %v682 = vld [vmem:[#allocation13 + $0x4] sm:$0xf]
        %v683 = vld [vmem:[#allocation13 + $0x8] sm:$0xf]
        %v684 = vld [vmem:[#allocation13 + $0xc] sm:$0xf]
        %v685 = vld [vmem:[#allocation14] sm:$0x1]
        %v687 = vlaneseq
        %v688 = vshrl.u32 %v687, 7
        %v689 = vsub.s32 0, %v688
        %v690 = vrot.slane %v685, %v689
        %v696 = vunpack.c.l.b16 %v681
        %v697 = vunpack.c.l.b16 %v682
        %v698 = vunpack.c.l.b16 %v683
        %v699 = vunpack.c.l.b16 %v684
        %v700 = vpack.c.b16 %v697, %v696
        %v701 = vpack.c.b16 %v699, %v698
        %v705 = vsel %vm606, %v650, 0
        %707 = vmatprep.subr.bf16.mxu0 0
        %708 = vmatpush1.bf16.msra.mxu0 %v700
        %709 = vmatprep.subr.bf16.mxu0 0
        %710 = vmatpush1.bf16.msra.mxu0 %v701
        %711 = vmatprep.subr.bf16.mxu0 0
        %712 = vmatpush1.bf16.msra.mxu0 0
        %713 = vmatprep.subr.bf16.mxu0 0
        %714 = vmatpush1.bf16.msra.mxu0 0
        %715 = vmatprep.subr.bf16.mxu0 0
        %716 = vmatpush1.bf16.msra.mxu0 0
        %717 = vmatprep.subr.bf16.mxu0 0
        %718 = vmatpush1.bf16.msra.mxu0 0
        %719 = vmatprep.subr.bf16.mxu0 0
        %720 = vmatpush1.bf16.msra.mxu0 0
        %721 = vmatprep.subr.bf16.mxu0 0
        %722 = vmatpush1.bf16.msra.mxu0 0
        %723 = vmatprep.subr.bf16.mxu0 0
        %724 = vmatpush1.bf16.msra.mxu0 0
        %725 = vmatprep.subr.bf16.mxu0 0
        %726 = vmatpush1.bf16.msra.mxu0 0
        %727 = vmatprep.subr.bf16.mxu0 0
        %728 = vmatpush1.bf16.msra.mxu0 0
        %729 = vmatprep.subr.bf16.mxu0 0
        %730 = vmatpush1.bf16.msra.mxu0 0
        %731 = vmatprep.subr.bf16.mxu0 0
        %732 = vmatpush1.bf16.msra.mxu0 0
        %733 = vmatprep.subr.bf16.mxu0 0
        %734 = vmatpush1.bf16.msra.mxu0 0
        %735 = vmatprep.subr.bf16.mxu0 0
        %736 = vmatpush1.bf16.msra.mxu0 0
        %737 = vmatprep.subr.bf16.mxu0 0
        %738 = vmatpush1.bf16.msra.mxu0 0
        %739 = vmatprep.mubr.bf16.mxu0 0
        %740 = vmatmul.mubr.bf16.gmra.mrb[0].mxu0 %v705
        %v741 = vpop.f32.mrb[0].mxu0
        %v742 = vadd.f32 %v690, %v741
        %v743 = vpop.f32.mrb[0].mxu0
        %v744 = vpop.f32.mrb[0].mxu0
        %v745 = vadd.f32 %v690, %v744
        %v746 = vpop.f32.mrb[0].mxu0
        %747 = vdwg.mxu0
        %v748 = vmul.f32 %v742, 0.35355338
        %v749 = vmul.f32 %v745, 0.35355338
        %v750 = vld [vmem:[#allocation16] sm:$0xf]
        %v751 = vld [vmem:[#allocation16 + $0x4] sm:$0xf]
        %v752 = vld [vmem:[#allocation16 + $0x8] sm:$0xf]
        %v753 = vld [vmem:[#allocation16 + $0xc] sm:$0xf]
        %v754 = vld [vmem:[#allocation17] sm:$0x1]
        %v756 = vlaneseq
        %v757 = vshrl.u32 %v756, 7
        %v758 = vsub.s32 0, %v757
        %v759 = vrot.slane %v754, %v758
        %v765 = vunpack.c.l.b16 %v750
        %v766 = vunpack.c.l.b16 %v751
        %v767 = vunpack.c.l.b16 %v752
        %v768 = vunpack.c.l.b16 %v753
        %v769 = vpack.c.b16 %v766, %v765
        %v770 = vpack.c.b16 %v768, %v767
        %v774 = vsel %vm606, %v680, 0
        %776 = vmatprep.subr.bf16.mxu0 0
        %777 = vmatpush1.bf16.msra.mxu0 %v769
        %778 = vmatprep.subr.bf16.mxu0 0
        %779 = vmatpush1.bf16.msra.mxu0 %v770
        %780 = vmatprep.subr.bf16.mxu0 0
        %781 = vmatpush1.bf16.msra.mxu0 0
        %782 = vmatprep.subr.bf16.mxu0 0
        %783 = vmatpush1.bf16.msra.mxu0 0
        %784 = vmatprep.subr.bf16.mxu0 0
        %785 = vmatpush1.bf16.msra.mxu0 0
        %786 = vmatprep.subr.bf16.mxu0 0
        %787 = vmatpush1.bf16.msra.mxu0 0
        %788 = vmatprep.subr.bf16.mxu0 0
        %789 = vmatpush1.bf16.msra.mxu0 0
        %790 = vmatprep.subr.bf16.mxu0 0
        %791 = vmatpush1.bf16.msra.mxu0 0
        %792 = vmatprep.subr.bf16.mxu0 0
        %793 = vmatpush1.bf16.msra.mxu0 0
        %794 = vmatprep.subr.bf16.mxu0 0
        %795 = vmatpush1.bf16.msra.mxu0 0
        %796 = vmatprep.subr.bf16.mxu0 0
        %797 = vmatpush1.bf16.msra.mxu0 0
        %798 = vmatprep.subr.bf16.mxu0 0
        %799 = vmatpush1.bf16.msra.mxu0 0
        %800 = vmatprep.subr.bf16.mxu0 0
        %801 = vmatpush1.bf16.msra.mxu0 0
        %802 = vmatprep.subr.bf16.mxu0 0
        %803 = vmatpush1.bf16.msra.mxu0 0
        %804 = vmatprep.subr.bf16.mxu0 0
        %805 = vmatpush1.bf16.msra.mxu0 0
        %806 = vmatprep.subr.bf16.mxu0 0
        %807 = vmatpush1.bf16.msra.mxu0 0
        %808 = vmatprep.mubr.bf16.mxu0 0
        %809 = vmatmul.mubr.bf16.gmra.mrb[0].mxu0 %v774
        %v810 = vpop.f32.mrb[0].mxu0
        %v811 = vadd.f32 %v759, %v810
        %v812 = vpop.f32.mrb[0].mxu0
        %v813 = vpop.f32.mrb[0].mxu0
        %v814 = vpop.f32.mrb[0].mxu0
        %815 = vdwg.mxu0
        %818 = vrot.lane.b32.xlu0 %v748, 120
        %v819 = vpop.permute.xlu0 %818
        %820 = vrot.lane.b32.xlu0 %v749, 120
        %v821 = vpop.permute.xlu0 %820
        %824 = vrot.lane.b32.xlu0 %v748, 112
        %v825 = vpop.permute.xlu0 %824
        %826 = vrot.lane.b32.xlu0 %v749, 112
        %v827 = vpop.permute.xlu0 %826
        %830 = vrot.lane.b32.xlu0 %v748, 104
        %v831 = vpop.permute.xlu0 %830
        %832 = vrot.lane.b32.xlu0 %v749, 104
        %v833 = vpop.permute.xlu0 %832
        %v836 = vcombine.low %v748, %v825
        %v837 = vcombine.high %v748, %v825
        %v839 = vunpack.c.l.s4 1983009808
        %v840 = vunpack.c.0.s8 %v839
        %v841 = vlaneseq
        %v842 = vshrl.u32 %v841, 7
        %v843 = vsub.s32 %v840, %v842
        %v844 = vrot.slane %v836, %v843
        %v846 = vunpack.c.l.s4 1983009808
        %v847 = vunpack.c.0.s8 %v846
        %v848 = vlaneseq
        %v849 = vshrl.u32 %v848, 7
        %v850 = vsub.s32 %v847, %v849
        %v851 = vrot.slane %v837, %v850
        %v852 = vcombine.low %v819, %v831
        %v853 = vcombine.high %v819, %v831
        %v855 = vunpack.c.l.s4 1983009808
        %v856 = vunpack.c.0.s8 %v855
        %v857 = vlaneseq
        %v858 = vshrl.u32 %v857, 7
        %v859 = vsub.s32 %v856, %v858
        %v860 = vrot.slane %v852, %v859
        %v862 = vunpack.c.l.s4 1983009808
        %v863 = vunpack.c.0.s8 %v862
        %v864 = vlaneseq
        %v865 = vshrl.u32 %v864, 7
        %v866 = vsub.s32 %v863, %v865
        %v867 = vrot.slane %v853, %v866
        %v868 = vcombine.low %v844, %v860
        %v869 = vcombine.high %v844, %v860
        %v871 = vunpack.c.l.s4 1934713408
        %v872 = vunpack.c.0.s8 %v871
        %v873 = vlaneseq
        %v874 = vshrl.u32 %v873, 7
        %v875 = vsub.s32 %v872, %v874
        %v876 = vrot.slane %v868, %v875
        %v878 = vunpack.c.l.s4 1934713408
        %v879 = vunpack.c.0.s8 %v878
        %v880 = vlaneseq
        %v881 = vshrl.u32 %v880, 7
        %v882 = vsub.s32 %v879, %v881
        %v883 = vrot.slane %v869, %v882
        %v884 = vcombine.low %v851, %v867
        %v885 = vcombine.high %v851, %v867
        %v887 = vunpack.c.l.s4 1934713408
        %v888 = vunpack.c.0.s8 %v887
        %v889 = vlaneseq
        %v890 = vshrl.u32 %v889, 7
        %v891 = vsub.s32 %v888, %v890
        %v892 = vrot.slane %v884, %v891
        %v894 = vunpack.c.l.s4 1934713408
        %v895 = vunpack.c.0.s8 %v894
        %v896 = vlaneseq
        %v897 = vshrl.u32 %v896, 7
        %v898 = vsub.s32 %v895, %v897
        %v899 = vrot.slane %v885, %v898
        %v900 = vcombine.high %v876, 0.0
        %v901 = vcombine.high %v883, 0.0
        %v902 = vcombine.high %v892, 0.0
        %v903 = vcombine.high %v899, 0.0
        %v904 = vcombine.low %v749, %v827
        %v905 = vcombine.high %v749, %v827
        %v907 = vunpack.c.l.s4 1983009808
        %v908 = vunpack.c.0.s8 %v907
        %v909 = vlaneseq
        %v910 = vshrl.u32 %v909, 7
        %v911 = vsub.s32 %v908, %v910
        %v912 = vrot.slane %v904, %v911
        %v914 = vunpack.c.l.s4 1983009808
        %v915 = vunpack.c.0.s8 %v914
        %v916 = vlaneseq
        %v917 = vshrl.u32 %v916, 7
        %v918 = vsub.s32 %v915, %v917
        %v919 = vrot.slane %v905, %v918
        %v920 = vcombine.low %v821, %v833
        %v921 = vcombine.high %v821, %v833
        %v923 = vunpack.c.l.s4 1983009808
        %v924 = vunpack.c.0.s8 %v923
        %v925 = vlaneseq
        %v926 = vshrl.u32 %v925, 7
        %v927 = vsub.s32 %v924, %v926
        %v928 = vrot.slane %v920, %v927
        %v930 = vunpack.c.l.s4 1983009808
        %v931 = vunpack.c.0.s8 %v930
        %v932 = vlaneseq
        %v933 = vshrl.u32 %v932, 7
        %v934 = vsub.s32 %v931, %v933
        %v935 = vrot.slane %v921, %v934
        %v936 = vcombine.low %v912, %v928
        %v937 = vcombine.high %v912, %v928
        %v939 = vunpack.c.l.s4 1934713408
        %v940 = vunpack.c.0.s8 %v939
        %v941 = vlaneseq
        %v942 = vshrl.u32 %v941, 7
        %v943 = vsub.s32 %v940, %v942
        %v944 = vrot.slane %v936, %v943
        %v946 = vunpack.c.l.s4 1934713408
        %v947 = vunpack.c.0.s8 %v946
        %v948 = vlaneseq
        %v949 = vshrl.u32 %v948, 7
        %v950 = vsub.s32 %v947, %v949
        %v951 = vrot.slane %v937, %v950
        %v952 = vcombine.low %v919, %v935
        %v953 = vcombine.high %v919, %v935
        %v955 = vunpack.c.l.s4 1934713408
        %v956 = vunpack.c.0.s8 %v955
        %v957 = vlaneseq
        %v958 = vshrl.u32 %v957, 7
        %v959 = vsub.s32 %v956, %v958
        %v960 = vrot.slane %v952, %v959
        %v962 = vunpack.c.l.s4 1934713408
        %v963 = vunpack.c.0.s8 %v962
        %v964 = vlaneseq
        %v965 = vshrl.u32 %v964, 7
        %v966 = vsub.s32 %v963, %v965
        %v967 = vrot.slane %v953, %v966
        %v968 = vcombine.high %v944, 0.0
        %v969 = vcombine.high %v951, 0.0
        %v970 = vcombine.high %v960, 0.0
        %v971 = vcombine.high %v967, 0.0
        %v972 = vcombine.low %v876, %v883
        %v974 = vunpack.c.l.s4 1983009808
        %v975 = vunpack.c.0.s8 %v974
        %v976 = vlaneseq
        %v977 = vshrl.u32 %v976, 7
        %v978 = vsub.s32 %v975, %v977
        %v979 = vrot.slane %v972, %v978
        %v980 = vcombine.low %v900, %v901
        %v982 = vunpack.c.l.s4 1983009808
        %v983 = vunpack.c.0.s8 %v982
        %v984 = vlaneseq
        %v985 = vshrl.u32 %v984, 7
        %v986 = vsub.s32 %v983, %v985
        %v987 = vrot.slane %v980, %v986
        %v988 = vcombine.low %v892, %v899
        %v990 = vunpack.c.l.s4 1983009808
        %v991 = vunpack.c.0.s8 %v990
        %v992 = vlaneseq
        %v993 = vshrl.u32 %v992, 7
        %v994 = vsub.s32 %v991, %v993
        %v995 = vrot.slane %v988, %v994
        %v996 = vcombine.low %v902, %v903
        %v998 = vunpack.c.l.s4 1983009808
        %v999 = vunpack.c.0.s8 %v998
        %v1000 = vlaneseq
        %v1001 = vshrl.u32 %v1000, 7
        %v1002 = vsub.s32 %v999, %v1001
        %v1003 = vrot.slane %v996, %v1002
        %v1004 = vcombine.low %v979, %v987
        %v1005 = vcombine.high %v979, %v987
        %v1007 = vunpack.c.l.s4 1934713408
        %v1008 = vunpack.c.0.s8 %v1007
        %v1009 = vlaneseq
        %v1010 = vshrl.u32 %v1009, 7
        %v1011 = vsub.s32 %v1008, %v1010
        %v1012 = vrot.slane %v1004, %v1011
        %v1014 = vunpack.c.l.s4 1934713408
        %v1015 = vunpack.c.0.s8 %v1014
        %v1016 = vlaneseq
        %v1017 = vshrl.u32 %v1016, 7
        %v1018 = vsub.s32 %v1015, %v1017
        %v1019 = vrot.slane %v1005, %v1018
        %v1020 = vcombine.low %v995, %v1003
        %v1021 = vcombine.high %v995, %v1003
        %v1023 = vunpack.c.l.s4 1934713408
        %v1024 = vunpack.c.0.s8 %v1023
        %v1025 = vlaneseq
        %v1026 = vshrl.u32 %v1025, 7
        %v1027 = vsub.s32 %v1024, %v1026
        %v1028 = vrot.slane %v1020, %v1027
        %v1030 = vunpack.c.l.s4 1934713408
        %v1031 = vunpack.c.0.s8 %v1030
        %v1032 = vlaneseq
        %v1033 = vshrl.u32 %v1032, 7
        %v1034 = vsub.s32 %v1031, %v1033
        %v1035 = vrot.slane %v1021, %v1034
        %v1036 = vcombine.low %v1012, %v1028
        %v1037 = vcombine.high %v1012, %v1028
        %v1038 = vcombine.low %v1019, %v1035
        %v1039 = vcombine.high %v1019, %v1035
        %v1040 = vcombine.low %v944, %v951
        %v1042 = vunpack.c.l.s4 1983009808
        %v1043 = vunpack.c.0.s8 %v1042
        %v1044 = vlaneseq
        %v1045 = vshrl.u32 %v1044, 7
        %v1046 = vsub.s32 %v1043, %v1045
        %v1047 = vrot.slane %v1040, %v1046
        %v1048 = vcombine.low %v968, %v969
        %v1050 = vunpack.c.l.s4 1983009808
        %v1051 = vunpack.c.0.s8 %v1050
        %v1052 = vlaneseq
        %v1053 = vshrl.u32 %v1052, 7
        %v1054 = vsub.s32 %v1051, %v1053
        %v1055 = vrot.slane %v1048, %v1054
        %v1056 = vcombine.low %v960, %v967
        %v1058 = vunpack.c.l.s4 1983009808
        %v1059 = vunpack.c.0.s8 %v1058
        %v1060 = vlaneseq
        %v1061 = vshrl.u32 %v1060, 7
        %v1062 = vsub.s32 %v1059, %v1061
        %v1063 = vrot.slane %v1056, %v1062
        %v1064 = vcombine.low %v970, %v971
        %v1066 = vunpack.c.l.s4 1983009808
        %v1067 = vunpack.c.0.s8 %v1066
        %v1068 = vlaneseq
        %v1069 = vshrl.u32 %v1068, 7
        %v1070 = vsub.s32 %v1067, %v1069
        %v1071 = vrot.slane %v1064, %v1070
        %v1072 = vcombine.low %v1047, %v1055
        %v1073 = vcombine.high %v1047, %v1055
        %v1075 = vunpack.c.l.s4 1934713408
        %v1076 = vunpack.c.0.s8 %v1075
        %v1077 = vlaneseq
        %v1078 = vshrl.u32 %v1077, 7
        %v1079 = vsub.s32 %v1076, %v1078
        %v1080 = vrot.slane %v1072, %v1079
        %v1082 = vunpack.c.l.s4 1934713408
        %v1083 = vunpack.c.0.s8 %v1082
        %v1084 = vlaneseq
        %v1085 = vshrl.u32 %v1084, 7
        %v1086 = vsub.s32 %v1083, %v1085
        %v1087 = vrot.slane %v1073, %v1086
        %v1088 = vcombine.low %v1063, %v1071
        %v1089 = vcombine.high %v1063, %v1071
        %v1091 = vunpack.c.l.s4 1934713408
        %v1092 = vunpack.c.0.s8 %v1091
        %v1093 = vlaneseq
        %v1094 = vshrl.u32 %v1093, 7
        %v1095 = vsub.s32 %v1092, %v1094
        %v1096 = vrot.slane %v1088, %v1095
        %v1098 = vunpack.c.l.s4 1934713408
        %v1099 = vunpack.c.0.s8 %v1098
        %v1100 = vlaneseq
        %v1101 = vshrl.u32 %v1100, 7
        %v1102 = vsub.s32 %v1099, %v1101
        %v1103 = vrot.slane %v1089, %v1102
        %v1104 = vcombine.low %v1080, %v1096
        %v1105 = vcombine.high %v1080, %v1096
        %v1106 = vcombine.low %v1087, %v1103
        %v1107 = vcombine.high %v1087, %v1103
        %v1108 = vpack.c.bf16 %v1104, %v1036
        %v1109 = vpack.c.bf16 %v1105, %v1037
        %v1110 = vpack.c.bf16 %v1106, %v1038
        %v1111 = vpack.c.bf16 %v1107, %v1039
        %1113 = vrot.lane.b32.xlu0 %v811, 120
        %v1114 = vpop.permute.xlu0 %1113
        %1116 = vrot.lane.b32.xlu0 %v811, 112
        %v1117 = vpop.permute.xlu0 %1116
        %1119 = vrot.lane.b32.xlu0 %v811, 104
        %v1120 = vpop.permute.xlu0 %1119
        %v1122 = vcombine.low %v811, %v1117
        %v1123 = vcombine.high %v811, %v1117
        %v1125 = vunpack.c.l.s4 1983009808
        %v1126 = vunpack.c.0.s8 %v1125
        %v1127 = vlaneseq
        %v1128 = vshrl.u32 %v1127, 7
        %v1129 = vsub.s32 %v1126, %v1128
        %v1130 = vrot.slane %v1122, %v1129
        %v1132 = vunpack.c.l.s4 1983009808
        %v1133 = vunpack.c.0.s8 %v1132
        %v1134 = vlaneseq
        %v1135 = vshrl.u32 %v1134, 7
        %v1136 = vsub.s32 %v1133, %v1135
        %v1137 = vrot.slane %v1123, %v1136
        %v1138 = vcombine.low %v1114, %v1120
        %v1139 = vcombine.high %v1114, %v1120
        %v1141 = vunpack.c.l.s4 1983009808
        %v1142 = vunpack.c.0.s8 %v1141
        %v1143 = vlaneseq
        %v1144 = vshrl.u32 %v1143, 7
        %v1145 = vsub.s32 %v1142, %v1144
        %v1146 = vrot.slane %v1138, %v1145
        %v1148 = vunpack.c.l.s4 1983009808
        %v1149 = vunpack.c.0.s8 %v1148
        %v1150 = vlaneseq
        %v1151 = vshrl.u32 %v1150, 7
        %v1152 = vsub.s32 %v1149, %v1151
        %v1153 = vrot.slane %v1139, %v1152
        %v1154 = vcombine.low %v1130, %v1146
        %v1155 = vcombine.high %v1130, %v1146
        %v1157 = vunpack.c.l.s4 1934713408
        %v1158 = vunpack.c.0.s8 %v1157
        %v1159 = vlaneseq
        %v1160 = vshrl.u32 %v1159, 7
        %v1161 = vsub.s32 %v1158, %v1160
        %v1162 = vrot.slane %v1154, %v1161
        %v1164 = vunpack.c.l.s4 1934713408
        %v1165 = vunpack.c.0.s8 %v1164
        %v1166 = vlaneseq
        %v1167 = vshrl.u32 %v1166, 7
        %v1168 = vsub.s32 %v1165, %v1167
        %v1169 = vrot.slane %v1155, %v1168
        %v1170 = vcombine.low %v1137, %v1153
        %v1171 = vcombine.high %v1137, %v1153
        %v1173 = vunpack.c.l.s4 1934713408
        %v1174 = vunpack.c.0.s8 %v1173
        %v1175 = vlaneseq
        %v1176 = vshrl.u32 %v1175, 7
        %v1177 = vsub.s32 %v1174, %v1176
        %v1178 = vrot.slane %v1170, %v1177
        %v1180 = vunpack.c.l.s4 1934713408
        %v1181 = vunpack.c.0.s8 %v1180
        %v1182 = vlaneseq
        %v1183 = vshrl.u32 %v1182, 7
        %v1184 = vsub.s32 %v1181, %v1183
        %v1185 = vrot.slane %v1171, %v1184
        %v1186 = vcombine.high %v1162, 0.0
        %v1187 = vcombine.high %v1169, 0.0
        %v1188 = vcombine.high %v1178, 0.0
        %v1189 = vcombine.high %v1185, 0.0
        %v1190 = vcombine.low %v1162, %v1169
        %v1192 = vunpack.c.l.s4 1983009808
        %v1193 = vunpack.c.0.s8 %v1192
        %v1194 = vlaneseq
        %v1195 = vshrl.u32 %v1194, 7
        %v1196 = vsub.s32 %v1193, %v1195
        %v1197 = vrot.slane %v1190, %v1196
        %v1198 = vcombine.low %v1186, %v1187
        %v1200 = vunpack.c.l.s4 1983009808
        %v1201 = vunpack.c.0.s8 %v1200
        %v1202 = vlaneseq
        %v1203 = vshrl.u32 %v1202, 7
        %v1204 = vsub.s32 %v1201, %v1203
        %v1205 = vrot.slane %v1198, %v1204
        %v1206 = vcombine.low %v1178, %v1185
        %v1208 = vunpack.c.l.s4 1983009808
        %v1209 = vunpack.c.0.s8 %v1208
        %v1210 = vlaneseq
        %v1211 = vshrl.u32 %v1210, 7
        %v1212 = vsub.s32 %v1209, %v1211
        %v1213 = vrot.slane %v1206, %v1212
        %v1214 = vcombine.low %v1188, %v1189
        %v1216 = vunpack.c.l.s4 1983009808
        %v1217 = vunpack.c.0.s8 %v1216
        %v1218 = vlaneseq
        %v1219 = vshrl.u32 %v1218, 7
        %v1220 = vsub.s32 %v1217, %v1219
        %v1221 = vrot.slane %v1214, %v1220
        %v1222 = vcombine.low %v1197, %v1205
        %v1223 = vcombine.high %v1197, %v1205
        %v1225 = vunpack.c.l.s4 1934713408
        %v1226 = vunpack.c.0.s8 %v1225
        %v1227 = vlaneseq
        %v1228 = vshrl.u32 %v1227, 7
        %v1229 = vsub.s32 %v1226, %v1228
        %v1230 = vrot.slane %v1222, %v1229
        %v1232 = vunpack.c.l.s4 1934713408
        %v1233 = vunpack.c.0.s8 %v1232
        %v1234 = vlaneseq
        %v1235 = vshrl.u32 %v1234, 7
        %v1236 = vsub.s32 %v1233, %v1235
        %v1237 = vrot.slane %v1223, %v1236
        %v1238 = vcombine.low %v1213, %v1221
        %v1239 = vcombine.high %v1213, %v1221
        %v1241 = vunpack.c.l.s4 1934713408
        %v1242 = vunpack.c.0.s8 %v1241
        %v1243 = vlaneseq
        %v1244 = vshrl.u32 %v1243, 7
        %v1245 = vsub.s32 %v1242, %v1244
        %v1246 = vrot.slane %v1238, %v1245
        %v1248 = vunpack.c.l.s4 1934713408
        %v1249 = vunpack.c.0.s8 %v1248
        %v1250 = vlaneseq
        %v1251 = vshrl.u32 %v1250, 7
        %v1252 = vsub.s32 %v1249, %v1251
        %v1253 = vrot.slane %v1239, %v1252
        %v1254 = vcombine.low %v1230, %v1246
        %v1255 = vcombine.high %v1230, %v1246
        %v1256 = vcombine.low %v1237, %v1253
        %v1257 = vcombine.high %v1237, %v1253
        %1258 = vrot.lane.b32.xlu0 %v811, 96
        %v1259 = vpop.permute.xlu0 %1258
        %1260 = vrot.lane.b32.xlu0 %v1114, 96
        %v1261 = vpop.permute.xlu0 %1260
        %1262 = vrot.lane.b32.xlu0 %v1117, 96
        %v1263 = vpop.permute.xlu0 %1262
        %1264 = vrot.lane.b32.xlu0 %v1120, 96
        %v1265 = vpop.permute.xlu0 %1264
        %v1270 = vcombine.low %v1259, %v1263
        %v1271 = vcombine.high %v1259, %v1263
        %v1273 = vunpack.c.l.s4 1983009808
        %v1274 = vunpack.c.0.s8 %v1273
        %v1275 = vlaneseq
        %v1276 = vshrl.u32 %v1275, 7
        %v1277 = vsub.s32 %v1274, %v1276
        %v1278 = vrot.slane %v1270, %v1277
        %v1280 = vunpack.c.l.s4 1983009808
        %v1281 = vunpack.c.0.s8 %v1280
        %v1282 = vlaneseq
        %v1283 = vshrl.u32 %v1282, 7
        %v1284 = vsub.s32 %v1281, %v1283
        %v1285 = vrot.slane %v1271, %v1284
        %v1286 = vcombine.low %v1261, %v1265
        %v1287 = vcombine.high %v1261, %v1265
        %v1289 = vunpack.c.l.s4 1983009808
        %v1290 = vunpack.c.0.s8 %v1289
        %v1291 = vlaneseq
        %v1292 = vshrl.u32 %v1291, 7
        %v1293 = vsub.s32 %v1290, %v1292
        %v1294 = vrot.slane %v1286, %v1293
        %v1296 = vunpack.c.l.s4 1983009808
        %v1297 = vunpack.c.0.s8 %v1296
        %v1298 = vlaneseq
        %v1299 = vshrl.u32 %v1298, 7
        %v1300 = vsub.s32 %v1297, %v1299
        %v1301 = vrot.slane %v1287, %v1300
        %v1302 = vcombine.low %v1278, %v1294
        %v1303 = vcombine.high %v1278, %v1294
        %v1305 = vunpack.c.l.s4 1934713408
        %v1306 = vunpack.c.0.s8 %v1305
        %v1307 = vlaneseq
        %v1308 = vshrl.u32 %v1307, 7
        %v1309 = vsub.s32 %v1306, %v1308
        %v1310 = vrot.slane %v1302, %v1309
        %v1312 = vunpack.c.l.s4 1934713408
        %v1313 = vunpack.c.0.s8 %v1312
        %v1314 = vlaneseq
        %v1315 = vshrl.u32 %v1314, 7
        %v1316 = vsub.s32 %v1313, %v1315
        %v1317 = vrot.slane %v1303, %v1316
        %v1318 = vcombine.low %v1285, %v1301
        %v1319 = vcombine.high %v1285, %v1301
        %v1321 = vunpack.c.l.s4 1934713408
        %v1322 = vunpack.c.0.s8 %v1321
        %v1323 = vlaneseq
        %v1324 = vshrl.u32 %v1323, 7
        %v1325 = vsub.s32 %v1322, %v1324
        %v1326 = vrot.slane %v1318, %v1325
        %v1328 = vunpack.c.l.s4 1934713408
        %v1329 = vunpack.c.0.s8 %v1328
        %v1330 = vlaneseq
        %v1331 = vshrl.u32 %v1330, 7
        %v1332 = vsub.s32 %v1329, %v1331
        %v1333 = vrot.slane %v1319, %v1332
        %v1334 = vcombine.high %v1310, 0.0
        %v1335 = vcombine.high %v1317, 0.0
        %v1336 = vcombine.high %v1326, 0.0
        %v1337 = vcombine.high %v1333, 0.0
        %v1338 = vcombine.low %v1310, %v1317
        %v1340 = vunpack.c.l.s4 1983009808
        %v1341 = vunpack.c.0.s8 %v1340
        %v1342 = vlaneseq
        %v1343 = vshrl.u32 %v1342, 7
        %v1344 = vsub.s32 %v1341, %v1343
        %v1345 = vrot.slane %v1338, %v1344
        %v1346 = vcombine.low %v1334, %v1335
        %v1348 = vunpack.c.l.s4 1983009808
        %v1349 = vunpack.c.0.s8 %v1348
        %v1350 = vlaneseq
        %v1351 = vshrl.u32 %v1350, 7
        %v1352 = vsub.s32 %v1349, %v1351
        %v1353 = vrot.slane %v1346, %v1352
        %v1354 = vcombine.low %v1326, %v1333
        %v1356 = vunpack.c.l.s4 1983009808
        %v1357 = vunpack.c.0.s8 %v1356
        %v1358 = vlaneseq
        %v1359 = vshrl.u32 %v1358, 7
        %v1360 = vsub.s32 %v1357, %v1359
        %v1361 = vrot.slane %v1354, %v1360
        %v1362 = vcombine.low %v1336, %v1337
        %v1364 = vunpack.c.l.s4 1983009808
        %v1365 = vunpack.c.0.s8 %v1364
        %v1366 = vlaneseq
        %v1367 = vshrl.u32 %v1366, 7
        %v1368 = vsub.s32 %v1365, %v1367
        %v1369 = vrot.slane %v1362, %v1368
        %v1370 = vcombine.low %v1345, %v1353
        %v1371 = vcombine.high %v1345, %v1353
        %v1373 = vunpack.c.l.s4 1934713408
        %v1374 = vunpack.c.0.s8 %v1373
        %v1375 = vlaneseq
        %v1376 = vshrl.u32 %v1375, 7
        %v1377 = vsub.s32 %v1374, %v1376
        %v1378 = vrot.slane %v1370, %v1377
        %v1380 = vunpack.c.l.s4 1934713408
        %v1381 = vunpack.c.0.s8 %v1380
        %v1382 = vlaneseq
        %v1383 = vshrl.u32 %v1382, 7
        %v1384 = vsub.s32 %v1381, %v1383
        %v1385 = vrot.slane %v1371, %v1384
        %v1386 = vcombine.low %v1361, %v1369
        %v1387 = vcombine.high %v1361, %v1369
        %v1389 = vunpack.c.l.s4 1934713408
        %v1390 = vunpack.c.0.s8 %v1389
        %v1391 = vlaneseq
        %v1392 = vshrl.u32 %v1391, 7
        %v1393 = vsub.s32 %v1390, %v1392
        %v1394 = vrot.slane %v1386, %v1393
        %v1396 = vunpack.c.l.s4 1934713408
        %v1397 = vunpack.c.0.s8 %v1396
        %v1398 = vlaneseq
        %v1399 = vshrl.u32 %v1398, 7
        %v1400 = vsub.s32 %v1397, %v1399
        %v1401 = vrot.slane %v1387, %v1400
        %v1402 = vcombine.low %v1378, %v1394
        %v1403 = vcombine.high %v1378, %v1394
        %v1404 = vcombine.low %v1385, %v1401
        %v1405 = vcombine.high %v1385, %v1401
        %v1406 = vpack.c.bf16 %v1254, %v1254
        %v1407 = vpack.c.bf16 %v1255, %v1255
        %v1408 = vpack.c.bf16 %v1256, %v1256
        %v1409 = vpack.c.bf16 %v1257, %v1257
        %v1410 = vpack.c.bf16 %v1402, %v1402
        %v1411 = vpack.c.bf16 %v1403, %v1403
        %v1412 = vpack.c.bf16 %v1404, %v1404
        %v1413 = vpack.c.bf16 %v1405, %v1405
        %vm1414 = vcmask 64512
        %v1416 = vsel %vm1414, %v1108, 0
        %v1419 = vsel %vm1414, %v1406, 0
        %1421 = vmatprep.subr.bf16.mxu0 0
        %1422 = vmatpush1.bf16.xpose.msra.mxu0 %v1419
        %1423 = vmatprep.subr.bf16.mxu0 0
        %1424 = vmatpush1.bf16.xpose.msra.mxu0 0
        %1425 = vmatprep.subr.bf16.mxu0 0
        %1426 = vmatpush1.bf16.xpose.msra.mxu0 0
        %1427 = vmatprep.subr.bf16.mxu0 0
        %1428 = vmatpush1.bf16.xpose.msra.mxu0 0
        %1429 = vmatprep.subr.bf16.mxu0 0
        %1430 = vmatpush1.bf16.xpose.msra.mxu0 0
        %1431 = vmatprep.subr.bf16.mxu0 0
        %1432 = vmatpush1.bf16.xpose.msra.mxu0 0
        %1433 = vmatprep.subr.bf16.mxu0 0
        %1434 = vmatpush1.bf16.xpose.msra.mxu0 0
        %1435 = vmatprep.subr.bf16.mxu0 0
        %1436 = vmatpush1.bf16.xpose.msra.mxu0 0
        %1437 = vmatprep.subr.bf16.mxu0 0
        %1438 = vmatpush1.bf16.xpose.msra.mxu0 0
        %1439 = vmatprep.subr.bf16.mxu0 0
        %1440 = vmatpush1.bf16.xpose.msra.mxu0 0
        %1441 = vmatprep.subr.bf16.mxu0 0
        %1442 = vmatpush1.bf16.xpose.msra.mxu0 0
        %1443 = vmatprep.subr.bf16.mxu0 0
        %1444 = vmatpush1.bf16.xpose.msra.mxu0 0
        %1445 = vmatprep.subr.bf16.mxu0 0
        %1446 = vmatpush1.bf16.xpose.msra.mxu0 0
        %1447 = vmatprep.subr.bf16.mxu0 0
        %1448 = vmatpush1.bf16.xpose.msra.mxu0 0
        %1449 = vmatprep.subr.bf16.mxu0 0
        %1450 = vmatpush1.bf16.xpose.msra.mxu0 0
        %1451 = vmatprep.subr.bf16.mxu0 0
        %1452 = vmatpush1.bf16.xpose.msra.mxu0 0
        %1453 = vmatprep.mubr.bf16.mxu0 0
        %1454 = vmatmul.mubr.bf16.gmra.mrb[0].mxu0 %v1416
        %v1455 = vpop.f32.mrb[0].mxu0
        %v1456 = vadd.f32 0.0, %v1455
        %v1457 = vpop.f32.mrb[0].mxu0
        %v1458 = vpop.f32.mrb[0].mxu0
        %v1459 = vadd.f32 0.0, %v1458
        %v1460 = vpop.f32.mrb[0].mxu0
        %1461 = vdwg.mxu0
        %v1463 = vsel %vm1414, %v1109, 0
        %v1466 = vsel %vm1414, %v1407, 0
        %1468 = vmatprep.subr.bf16.mxu0 0
        %1469 = vmatpush1.bf16.xpose.msra.mxu0 %v1466
        %1470 = vmatprep.subr.bf16.mxu0 0
        %1471 = vmatpush1.bf16.xpose.msra.mxu0 0
        %1472 = vmatprep.subr.bf16.mxu0 0
        %1473 = vmatpush1.bf16.xpose.msra.mxu0 0
        %1474 = vmatprep.subr.bf16.mxu0 0
        %1475 = vmatpush1.bf16.xpose.msra.mxu0 0
        %1476 = vmatprep.subr.bf16.mxu0 0
        %1477 = vmatpush1.bf16.xpose.msra.mxu0 0
        %1478 = vmatprep.subr.bf16.mxu0 0
        %1479 = vmatpush1.bf16.xpose.msra.mxu0 0
        %1480 = vmatprep.subr.bf16.mxu0 0
        %1481 = vmatpush1.bf16.xpose.msra.mxu0 0
        %1482 = vmatprep.subr.bf16.mxu0 0
        %1483 = vmatpush1.bf16.xpose.msra.mxu0 0
        %1484 = vmatprep.subr.bf16.mxu0 0
        %1485 = vmatpush1.bf16.xpose.msra.mxu0 0
        %1486 = vmatprep.subr.bf16.mxu0 0
        %1487 = vmatpush1.bf16.xpose.msra.mxu0 0
        %1488 = vmatprep.subr.bf16.mxu0 0
        %1489 = vmatpush1.bf16.xpose.msra.mxu0 0
        %1490 = vmatprep.subr.bf16.mxu0 0
        %1491 = vmatpush1.bf16.xpose.msra.mxu0 0
        %1492 = vmatprep.subr.bf16.mxu0 0
        %1493 = vmatpush1.bf16.xpose.msra.mxu0 0
        %1494 = vmatprep.subr.bf16.mxu0 0
        %1495 = vmatpush1.bf16.xpose.msra.mxu0 0
        %1496 = vmatprep.subr.bf16.mxu0 0
        %1497 = vmatpush1.bf16.xpose.msra.mxu0 0
        %1498 = vmatprep.subr.bf16.mxu0 0
        %1499 = vmatpush1.bf16.xpose.msra.mxu0 0
        %1500 = vmatprep.mubr.bf16.mxu0 0
        %1501 = vmatmul.mubr.bf16.gmra.mrb[0].mxu0 %v1463
        %v1502 = vpop.f32.mrb[0].mxu0
        %v1503 = vadd.f32 0.0, %v1502
        %v1504 = vpop.f32.mrb[0].mxu0
        %v1505 = vpop.f32.mrb[0].mxu0
        %v1506 = vadd.f32 0.0, %v1505
        %v1507 = vpop.f32.mrb[0].mxu0
        %1508 = vdwg.mxu0
        %v1510 = vsel %vm1414, %v1110, 0
        %v1513 = vsel %vm1414, %v1408, 0
        %1515 = vmatprep.subr.bf16.mxu0 0
        %1516 = vmatpush1.bf16.xpose.msra.mxu0 %v1513
        %1517 = vmatprep.subr.bf16.mxu0 0
        %1518 = vmatpush1.bf16.xpose.msra.mxu0 0
        %1519 = vmatprep.subr.bf16.mxu0 0
        %1520 = vmatpush1.bf16.xpose.msra.mxu0 0
        %1521 = vmatprep.subr.bf16.mxu0 0
        %1522 = vmatpush1.bf16.xpose.msra.mxu0 0
        %1523 = vmatprep.subr.bf16.mxu0 0
        %1524 = vmatpush1.bf16.xpose.msra.mxu0 0
        %1525 = vmatprep.subr.bf16.mxu0 0
        %1526 = vmatpush1.bf16.xpose.msra.mxu0 0
        %1527 = vmatprep.subr.bf16.mxu0 0
        %1528 = vmatpush1.bf16.xpose.msra.mxu0 0
        %1529 = vmatprep.subr.bf16.mxu0 0
        %1530 = vmatpush1.bf16.xpose.msra.mxu0 0
        %1531 = vmatprep.subr.bf16.mxu0 0
        %1532 = vmatpush1.bf16.xpose.msra.mxu0 0
        %1533 = vmatprep.subr.bf16.mxu0 0
        %1534 = vmatpush1.bf16.xpose.msra.mxu0 0
        %1535 = vmatprep.subr.bf16.mxu0 0
        %1536 = vmatpush1.bf16.xpose.msra.mxu0 0
        %1537 = vmatprep.subr.bf16.mxu0 0
        %1538 = vmatpush1.bf16.xpose.msra.mxu0 0
        %1539 = vmatprep.subr.bf16.mxu0 0
        %1540 = vmatpush1.bf16.xpose.msra.mxu0 0
        %1541 = vmatprep.subr.bf16.mxu0 0
        %1542 = vmatpush1.bf16.xpose.msra.mxu0 0
        %1543 = vmatprep.subr.bf16.mxu0 0
        %1544 = vmatpush1.bf16.xpose.msra.mxu0 0
        %1545 = vmatprep.subr.bf16.mxu0 0
        %1546 = vmatpush1.bf16.xpose.msra.mxu0 0
        %1547 = vmatprep.mubr.bf16.mxu0 0
        %1548 = vmatmul.mubr.bf16.gmra.mrb[0].mxu0 %v1510
        %v1549 = vpop.f32.mrb[0].mxu0
        %v1550 = vadd.f32 0.0, %v1549
        %v1551 = vpop.f32.mrb[0].mxu0
        %v1552 = vpop.f32.mrb[0].mxu0
        %v1553 = vadd.f32 0.0, %v1552
        %v1554 = vpop.f32.mrb[0].mxu0
        %1555 = vdwg.mxu0
        %v1557 = vsel %vm1414, %v1111, 0
        %v1560 = vsel %vm1414, %v1409, 0
        %1562 = vmatprep.subr.bf16.mxu0 0
        %1563 = vmatpush1.bf16.xpose.msra.mxu0 %v1560
        %1564 = vmatprep.subr.bf16.mxu0 0
        %1565 = vmatpush1.bf16.xpose.msra.mxu0 0
        %1566 = vmatprep.subr.bf16.mxu0 0
        %1567 = vmatpush1.bf16.xpose.msra.mxu0 0
        %1568 = vmatprep.subr.bf16.mxu0 0
        %1569 = vmatpush1.bf16.xpose.msra.mxu0 0
        %1570 = vmatprep.subr.bf16.mxu0 0
        %1571 = vmatpush1.bf16.xpose.msra.mxu0 0
        %1572 = vmatprep.subr.bf16.mxu0 0
        %1573 = vmatpush1.bf16.xpose.msra.mxu0 0
        %1574 = vmatprep.subr.bf16.mxu0 0
        %1575 = vmatpush1.bf16.xpose.msra.mxu0 0
        %1576 = vmatprep.subr.bf16.mxu0 0
        %1577 = vmatpush1.bf16.xpose.msra.mxu0 0
        %1578 = vmatprep.subr.bf16.mxu0 0
        %1579 = vmatpush1.bf16.xpose.msra.mxu0 0
        %1580 = vmatprep.subr.bf16.mxu0 0
        %1581 = vmatpush1.bf16.xpose.msra.mxu0 0
        %1582 = vmatprep.subr.bf16.mxu0 0
        %1583 = vmatpush1.bf16.xpose.msra.mxu0 0
        %1584 = vmatprep.subr.bf16.mxu0 0
        %1585 = vmatpush1.bf16.xpose.msra.mxu0 0
        %1586 = vmatprep.subr.bf16.mxu0 0
        %1587 = vmatpush1.bf16.xpose.msra.mxu0 0
        %1588 = vmatprep.subr.bf16.mxu0 0
        %1589 = vmatpush1.bf16.xpose.msra.mxu0 0
        %1590 = vmatprep.subr.bf16.mxu0 0
        %1591 = vmatpush1.bf16.xpose.msra.mxu0 0
        %1592 = vmatprep.subr.bf16.mxu0 0
        %1593 = vmatpush1.bf16.xpose.msra.mxu0 0
        %1594 = vmatprep.mubr.bf16.mxu0 0
        %1595 = vmatmul.mubr.bf16.gmra.mrb[0].mxu0 %v1557
        %v1596 = vpop.f32.mrb[0].mxu0
        %v1597 = vadd.f32 0.0, %v1596
        %v1598 = vpop.f32.mrb[0].mxu0
        %v1599 = vpop.f32.mrb[0].mxu0
        %v1600 = vadd.f32 0.0, %v1599
        %v1601 = vpop.f32.mrb[0].mxu0
        %1602 = vdwg.mxu0
        %v1603 = vsel %vm1414, %v1456, -inf
        %1604 = vmax.xlane.f32.xlu0 %v1603
        %v1605 = vpop.xlane.xlu0 %1604
        %v1606 = vsel %vm1414, %v1459, -inf
        %1607 = vmax.xlane.f32.xlu0 %v1606
        %v1608 = vpop.xlane.xlu0 %1607
        %v1609 = vsel %vm1414, %v1503, -inf
        %1610 = vmax.xlane.f32.xlu0 %v1609
        %v1611 = vpop.xlane.xlu0 %1610
        %v1612 = vsel %vm1414, %v1506, -inf
        %1613 = vmax.xlane.f32.xlu0 %v1612
        %v1614 = vpop.xlane.xlu0 %1613
        %v1615 = vsel %vm1414, %v1550, -inf
        %1616 = vmax.xlane.f32.xlu0 %v1615
        %v1617 = vpop.xlane.xlu0 %1616
        %v1618 = vsel %vm1414, %v1553, -inf
        %1619 = vmax.xlane.f32.xlu0 %v1618
        %v1620 = vpop.xlane.xlu0 %1619
        %v1621 = vsel %vm1414, %v1597, -inf
        %1622 = vmax.xlane.f32.xlu0 %v1621
        %v1623 = vpop.xlane.xlu0 %1622
        %v1624 = vsel %vm1414, %v1600, -inf
        %1625 = vmax.xlane.f32.xlu0 %v1624
        %v1626 = vpop.xlane.xlu0 %1625
        %v1627 = vmax.f32 %v1605, -1e+30
        %v1628 = vmax.f32 %v1608, -1e+30
        %v1629 = vmax.f32 %v1611, -1e+30
        %v1630 = vmax.f32 %v1614, -1e+30
        %v1631 = vmax.f32 %v1617, -1e+30
        %v1632 = vmax.f32 %v1620, -1e+30
        %v1633 = vmax.f32 %v1623, -1e+30
        %v1634 = vmax.f32 %v1626, -1e+30
        %v1635 = vsub.f32 -1e+30, %v1627
        %v1636 = vsub.f32 -1e+30, %v1628
        %v1637 = vsub.f32 -1e+30, %v1629
        %v1638 = vsub.f32 -1e+30, %v1630
        %v1639 = vsub.f32 -1e+30, %v1631
        %v1640 = vsub.f32 -1e+30, %v1632
        %v1641 = vsub.f32 -1e+30, %v1633
        %v1642 = vsub.f32 -1e+30, %v1634
        %v1643 = vmul.f32 %v1635, 1.442695
        %v1644 = vpow.pop %v1643
        %v1645 = vmul.f32 %v1636, 1.442695
        %v1646 = vpow.pop %v1645
        %v1647 = vmul.f32 %v1637, 1.442695
        %v1648 = vpow.pop %v1647
        %v1649 = vmul.f32 %v1638, 1.442695
        %v1650 = vpow.pop %v1649
        %v1651 = vmul.f32 %v1639, 1.442695
        %v1652 = vpow.pop %v1651
        %v1653 = vmul.f32 %v1640, 1.442695
        %v1654 = vpow.pop %v1653
        %v1655 = vmul.f32 %v1641, 1.442695
        %v1656 = vpow.pop %v1655
        %v1657 = vmul.f32 %v1642, 1.442695
        %v1658 = vpow.pop %v1657
        %v1659 = vsub.f32 %v1456, %v1627
        %v1660 = vsub.f32 %v1459, %v1628
        %v1661 = vsub.f32 %v1503, %v1629
        %v1662 = vsub.f32 %v1506, %v1630
        %v1663 = vsub.f32 %v1550, %v1631
        %v1664 = vsub.f32 %v1553, %v1632
        %v1665 = vsub.f32 %v1597, %v1633
        %v1666 = vsub.f32 %v1600, %v1634
        %v1667 = vmul.f32 %v1659, 1.442695
        %v1668 = vpow.pop %v1667
        %v1669 = vmul.f32 %v1660, 1.442695
        %v1670 = vpow.pop %v1669
        %v1671 = vmul.f32 %v1661, 1.442695
        %v1672 = vpow.pop %v1671
        %v1673 = vmul.f32 %v1662, 1.442695
        %v1674 = vpow.pop %v1673
        %v1675 = vmul.f32 %v1663, 1.442695
        %v1676 = vpow.pop %v1675
        %v1677 = vmul.f32 %v1664, 1.442695
        %v1678 = vpow.pop %v1677
        %v1679 = vmul.f32 %v1665, 1.442695
        %v1680 = vpow.pop %v1679
        %v1681 = vmul.f32 %v1666, 1.442695
        %v1682 = vpow.pop %v1681
        %v1683 = vmul.f32 %v1644, 0.0
        %v1684 = vmul.f32 %v1646, 0.0
        %v1685 = vmul.f32 %v1648, 0.0
        %v1686 = vmul.f32 %v1650, 0.0
        %v1687 = vmul.f32 %v1652, 0.0
        %v1688 = vmul.f32 %v1654, 0.0
        %v1689 = vmul.f32 %v1656, 0.0
        %v1690 = vmul.f32 %v1658, 0.0
        %v1691 = vsel %vm1414, %v1668, 0.0
        %1692 = vadd.xlane.f32.xlu0 %v1691
        %v1693 = vpop.xlane.xlu0 %1692
        %v1694 = vsel %vm1414, %v1670, 0.0
        %1695 = vadd.xlane.f32.xlu0 %v1694
        %v1696 = vpop.xlane.xlu0 %1695
        %v1697 = vsel %vm1414, %v1672, 0.0
        %1698 = vadd.xlane.f32.xlu0 %v1697
        %v1699 = vpop.xlane.xlu0 %1698
        %v1700 = vsel %vm1414, %v1674, 0.0
        %1701 = vadd.xlane.f32.xlu0 %v1700
        %v1702 = vpop.xlane.xlu0 %1701
        %v1703 = vsel %vm1414, %v1676, 0.0
        %1704 = vadd.xlane.f32.xlu0 %v1703
        %v1705 = vpop.xlane.xlu0 %1704
        %v1706 = vsel %vm1414, %v1678, 0.0
        %1707 = vadd.xlane.f32.xlu0 %v1706
        %v1708 = vpop.xlane.xlu0 %1707
        %v1709 = vsel %vm1414, %v1680, 0.0
        %1710 = vadd.xlane.f32.xlu0 %v1709
        %v1711 = vpop.xlane.xlu0 %1710
        %v1712 = vsel %vm1414, %v1682, 0.0
        %1713 = vadd.xlane.f32.xlu0 %v1712
        %v1714 = vpop.xlane.xlu0 %1713
        %v1715 = vadd.f32 %v1683, %v1693
        %v1716 = vadd.f32 %v1684, %v1696
        %v1717 = vadd.f32 %v1685, %v1699
        %v1718 = vadd.f32 %v1686, %v1702
        %v1719 = vadd.f32 %v1687, %v1705
        %v1720 = vadd.f32 %v1688, %v1708
        %v1721 = vadd.f32 %v1689, %v1711
        %v1722 = vadd.f32 %v1690, %v1714
        %v1723 = vpack.c.bf16 %v1670, %v1668
        %v1724 = vpack.c.bf16 %v1674, %v1672
        %v1725 = vpack.c.bf16 %v1678, %v1676
        %v1726 = vpack.c.bf16 %v1682, %v1680
        %v1728 = vsel %vm1414, %v1723, 0
        %vm1730 = vcmask 1043456
        %v1732 = vsel %vm1730, %v1410, 0
        %1734 = vmatprep.subr.bf16.mxu0 0
        %1735 = vmatpush1.bf16.msra.mxu0 %v1732
        %1736 = vmatprep.subr.bf16.mxu0 0
        %1737 = vmatpush1.bf16.msra.mxu0 0
        %1738 = vmatprep.subr.bf16.mxu0 0
        %1739 = vmatpush1.bf16.msra.mxu0 0
        %1740 = vmatprep.subr.bf16.mxu0 0
        %1741 = vmatpush1.bf16.msra.mxu0 0
        %1742 = vmatprep.subr.bf16.mxu0 0
        %1743 = vmatpush1.bf16.msra.mxu0 0
        %1744 = vmatprep.subr.bf16.mxu0 0
        %1745 = vmatpush1.bf16.msra.mxu0 0
        %1746 = vmatprep.subr.bf16.mxu0 0
        %1747 = vmatpush1.bf16.msra.mxu0 0
        %1748 = vmatprep.subr.bf16.mxu0 0
        %1749 = vmatpush1.bf16.msra.mxu0 0
        %1750 = vmatprep.subr.bf16.mxu0 0
        %1751 = vmatpush1.bf16.msra.mxu0 0
        %1752 = vmatprep.subr.bf16.mxu0 0
        %1753 = vmatpush1.bf16.msra.mxu0 0
        %1754 = vmatprep.subr.bf16.mxu0 0
        %1755 = vmatpush1.bf16.msra.mxu0 0
        %1756 = vmatprep.subr.bf16.mxu0 0
        %1757 = vmatpush1.bf16.msra.mxu0 0
        %1758 = vmatprep.subr.bf16.mxu0 0
        %1759 = vmatpush1.bf16.msra.mxu0 0
        %1760 = vmatprep.subr.bf16.mxu0 0
        %1761 = vmatpush1.bf16.msra.mxu0 0
        %1762 = vmatprep.subr.bf16.mxu0 0
        %1763 = vmatpush1.bf16.msra.mxu0 0
        %1764 = vmatprep.subr.bf16.mxu0 0
        %1765 = vmatpush1.bf16.msra.mxu0 0
        %1766 = vmatprep.mubr.bf16.mxu0 0
        %1767 = vmatmul.mubr.bf16.gmra.mrb[0].mxu0 %v1728
        %v1768 = vpop.f32.mrb[0].mxu0
        %v1769 = vadd.f32 0.0, %v1768
        %v1770 = vpop.f32.mrb[0].mxu0
        %v1771 = vpop.f32.mrb[0].mxu0
        %v1772 = vadd.f32 0.0, %v1771
        %v1773 = vpop.f32.mrb[0].mxu0
        %1774 = vdwg.mxu0
        %v1776 = vsel %vm1414, %v1724, 0
        %v1779 = vsel %vm1730, %v1411, 0
        %1781 = vmatprep.subr.bf16.mxu0 0
        %1782 = vmatpush1.bf16.msra.mxu0 %v1779
        %1783 = vmatprep.subr.bf16.mxu0 0
        %1784 = vmatpush1.bf16.msra.mxu0 0
        %1785 = vmatprep.subr.bf16.mxu0 0
        %1786 = vmatpush1.bf16.msra.mxu0 0
        %1787 = vmatprep.subr.bf16.mxu0 0
        %1788 = vmatpush1.bf16.msra.mxu0 0
        %1789 = vmatprep.subr.bf16.mxu0 0
        %1790 = vmatpush1.bf16.msra.mxu0 0
        %1791 = vmatprep.subr.bf16.mxu0 0
        %1792 = vmatpush1.bf16.msra.mxu0 0
        %1793 = vmatprep.subr.bf16.mxu0 0
        %1794 = vmatpush1.bf16.msra.mxu0 0
        %1795 = vmatprep.subr.bf16.mxu0 0
        %1796 = vmatpush1.bf16.msra.mxu0 0
        %1797 = vmatprep.subr.bf16.mxu0 0
        %1798 = vmatpush1.bf16.msra.mxu0 0
        %1799 = vmatprep.subr.bf16.mxu0 0
        %1800 = vmatpush1.bf16.msra.mxu0 0
        %1801 = vmatprep.subr.bf16.mxu0 0
        %1802 = vmatpush1.bf16.msra.mxu0 0
        %1803 = vmatprep.subr.bf16.mxu0 0
        %1804 = vmatpush1.bf16.msra.mxu0 0
        %1805 = vmatprep.subr.bf16.mxu0 0
        %1806 = vmatpush1.bf16.msra.mxu0 0
        %1807 = vmatprep.subr.bf16.mxu0 0
        %1808 = vmatpush1.bf16.msra.mxu0 0
        %1809 = vmatprep.subr.bf16.mxu0 0
        %1810 = vmatpush1.bf16.msra.mxu0 0
        %1811 = vmatprep.subr.bf16.mxu0 0
        %1812 = vmatpush1.bf16.msra.mxu0 0
        %1813 = vmatprep.mubr.bf16.mxu0 0
        %1814 = vmatmul.mubr.bf16.gmra.mrb[0].mxu0 %v1776
        %v1815 = vpop.f32.mrb[0].mxu0
        %v1816 = vadd.f32 0.0, %v1815
        %v1817 = vpop.f32.mrb[0].mxu0
        %v1818 = vpop.f32.mrb[0].mxu0
        %v1819 = vadd.f32 0.0, %v1818
        %v1820 = vpop.f32.mrb[0].mxu0
        %1821 = vdwg.mxu0
        %v1823 = vsel %vm1414, %v1725, 0
        %v1826 = vsel %vm1730, %v1412, 0
        %1828 = vmatprep.subr.bf16.mxu0 0
        %1829 = vmatpush1.bf16.msra.mxu0 %v1826
        %1830 = vmatprep.subr.bf16.mxu0 0
        %1831 = vmatpush1.bf16.msra.mxu0 0
        %1832 = vmatprep.subr.bf16.mxu0 0
        %1833 = vmatpush1.bf16.msra.mxu0 0
        %1834 = vmatprep.subr.bf16.mxu0 0
        %1835 = vmatpush1.bf16.msra.mxu0 0
        %1836 = vmatprep.subr.bf16.mxu0 0
        %1837 = vmatpush1.bf16.msra.mxu0 0
        %1838 = vmatprep.subr.bf16.mxu0 0
        %1839 = vmatpush1.bf16.msra.mxu0 0
        %1840 = vmatprep.subr.bf16.mxu0 0
        %1841 = vmatpush1.bf16.msra.mxu0 0
        %1842 = vmatprep.subr.bf16.mxu0 0
        %1843 = vmatpush1.bf16.msra.mxu0 0
        %1844 = vmatprep.subr.bf16.mxu0 0
        %1845 = vmatpush1.bf16.msra.mxu0 0
        %1846 = vmatprep.subr.bf16.mxu0 0
        %1847 = vmatpush1.bf16.msra.mxu0 0
        %1848 = vmatprep.subr.bf16.mxu0 0
        %1849 = vmatpush1.bf16.msra.mxu0 0
        %1850 = vmatprep.subr.bf16.mxu0 0
        %1851 = vmatpush1.bf16.msra.mxu0 0
        %1852 = vmatprep.subr.bf16.mxu0 0
        %1853 = vmatpush1.bf16.msra.mxu0 0
        %1854 = vmatprep.subr.bf16.mxu0 0
        %1855 = vmatpush1.bf16.msra.mxu0 0
        %1856 = vmatprep.subr.bf16.mxu0 0
        %1857 = vmatpush1.bf16.msra.mxu0 0
        %1858 = vmatprep.subr.bf16.mxu0 0
        %1859 = vmatpush1.bf16.msra.mxu0 0
        %1860 = vmatprep.mubr.bf16.mxu0 0
        %1861 = vmatmul.mubr.bf16.gmra.mrb[0].mxu0 %v1823
        %v1862 = vpop.f32.mrb[0].mxu0
        %v1863 = vadd.f32 0.0, %v1862
        %v1864 = vpop.f32.mrb[0].mxu0
        %v1865 = vpop.f32.mrb[0].mxu0
        %v1866 = vadd.f32 0.0, %v1865
        %v1867 = vpop.f32.mrb[0].mxu0
        %1868 = vdwg.mxu0
        %v1870 = vsel %vm1414, %v1726, 0
        %v1873 = vsel %vm1730, %v1413, 0
        %1875 = vmatprep.subr.bf16.mxu0 0
        %1876 = vmatpush1.bf16.msra.mxu0 %v1873
        %1877 = vmatprep.subr.bf16.mxu0 0
        %1878 = vmatpush1.bf16.msra.mxu0 0
        %1879 = vmatprep.subr.bf16.mxu0 0
        %1880 = vmatpush1.bf16.msra.mxu0 0
        %1881 = vmatprep.subr.bf16.mxu0 0
        %1882 = vmatpush1.bf16.msra.mxu0 0
        %1883 = vmatprep.subr.bf16.mxu0 0
        %1884 = vmatpush1.bf16.msra.mxu0 0
        %1885 = vmatprep.subr.bf16.mxu0 0
        %1886 = vmatpush1.bf16.msra.mxu0 0
        %1887 = vmatprep.subr.bf16.mxu0 0
        %1888 = vmatpush1.bf16.msra.mxu0 0
        %1889 = vmatprep.subr.bf16.mxu0 0
        %1890 = vmatpush1.bf16.msra.mxu0 0
        %1891 = vmatprep.subr.bf16.mxu0 0
        %1892 = vmatpush1.bf16.msra.mxu0 0
        %1893 = vmatprep.subr.bf16.mxu0 0
        %1894 = vmatpush1.bf16.msra.mxu0 0
        %1895 = vmatprep.subr.bf16.mxu0 0
        %1896 = vmatpush1.bf16.msra.mxu0 0
        %1897 = vmatprep.subr.bf16.mxu0 0
        %1898 = vmatpush1.bf16.msra.mxu0 0
        %1899 = vmatprep.subr.bf16.mxu0 0
        %1900 = vmatpush1.bf16.msra.mxu0 0
        %1901 = vmatprep.subr.bf16.mxu0 0
        %1902 = vmatpush1.bf16.msra.mxu0 0
        %1903 = vmatprep.subr.bf16.mxu0 0
        %1904 = vmatpush1.bf16.msra.mxu0 0
        %1905 = vmatprep.subr.bf16.mxu0 0
        %1906 = vmatpush1.bf16.msra.mxu0 0
        %1907 = vmatprep.mubr.bf16.mxu0 0
        %1908 = vmatmul.mubr.bf16.gmra.mrb[0].mxu0 %v1870
        %v1909 = vpop.f32.mrb[0].mxu0
        %v1910 = vadd.f32 0.0, %v1909
        %v1911 = vpop.f32.mrb[0].mxu0
        %v1912 = vpop.f32.mrb[0].mxu0
        %v1913 = vadd.f32 0.0, %v1912
        %v1914 = vpop.f32.mrb[0].mxu0
        %1915 = vdwg.mxu0
        %v1916 = vadd.f32 %v1683, %v1769
        %v1917 = vadd.f32 %v1684, %v1772
        %v1918 = vadd.f32 %v1685, %v1816
        %v1919 = vadd.f32 %v1686, %v1819
        %v1920 = vadd.f32 %v1687, %v1863
        %v1921 = vadd.f32 %v1688, %v1866
        %v1922 = vadd.f32 %v1689, %v1910
        %v1923 = vadd.f32 %v1690, %v1913
        %v1924 = vrcp.pop %v1715
        %v1925 = vrcp.pop %v1716
        %v1926 = vrcp.pop %v1717
        %v1927 = vrcp.pop %v1718
        %v1928 = vrcp.pop %v1719
        %v1929 = vrcp.pop %v1720
        %v1930 = vrcp.pop %v1721
        %v1931 = vrcp.pop %v1722
        %v1932 = vmul.f32 %v1916, %v1924
        %v1933 = vmul.f32 %v1917, %v1925
        %v1934 = vmul.f32 %v1918, %v1926
        %v1935 = vmul.f32 %v1919, %v1927
        %v1936 = vmul.f32 %v1920, %v1928
        %v1937 = vmul.f32 %v1921, %v1929
        %v1938 = vmul.f32 %v1922, %v1930
        %v1939 = vmul.f32 %v1923, %v1931
        %v1940 = vcombine.low %v1932, %v1936
        %v1941 = vcombine.high %v1932, %v1936
        %v1943 = vunpack.c.l.s4 1983009808
        %v1944 = vunpack.c.0.s8 %v1943
        %v1945 = vlaneseq
        %v1946 = vshrl.u32 %v1945, 7
        %v1947 = vsub.s32 %v1944, %v1946
        %v1948 = vrot.slane %v1940, %v1947
        %v1950 = vunpack.c.l.s4 1983009808
        %v1951 = vunpack.c.0.s8 %v1950
        %v1952 = vlaneseq
        %v1953 = vshrl.u32 %v1952, 7
        %v1954 = vsub.s32 %v1951, %v1953
        %v1955 = vrot.slane %v1941, %v1954
        %v1956 = vcombine.low %v1934, %v1938
        %v1957 = vcombine.high %v1934, %v1938
        %v1959 = vunpack.c.l.s4 1983009808
        %v1960 = vunpack.c.0.s8 %v1959
        %v1961 = vlaneseq
        %v1962 = vshrl.u32 %v1961, 7
        %v1963 = vsub.s32 %v1960, %v1962
        %v1964 = vrot.slane %v1956, %v1963
        %v1966 = vunpack.c.l.s4 1983009808
        %v1967 = vunpack.c.0.s8 %v1966
        %v1968 = vlaneseq
        %v1969 = vshrl.u32 %v1968, 7
        %v1970 = vsub.s32 %v1967, %v1969
        %v1971 = vrot.slane %v1957, %v1970
        %v1972 = vcombine.low %v1948, %v1964
        %v1973 = vcombine.high %v1948, %v1964
        %v1975 = vunpack.c.l.s4 1934713408
        %v1976 = vunpack.c.0.s8 %v1975
        %v1977 = vlaneseq
        %v1978 = vshrl.u32 %v1977, 7
        %v1979 = vsub.s32 %v1976, %v1978
        %v1980 = vrot.slane %v1972, %v1979
        %v1982 = vunpack.c.l.s4 1934713408
        %v1983 = vunpack.c.0.s8 %v1982
        %v1984 = vlaneseq
        %v1985 = vshrl.u32 %v1984, 7
        %v1986 = vsub.s32 %v1983, %v1985
        %v1987 = vrot.slane %v1973, %v1986
        %v1988 = vcombine.low %v1955, %v1971
        %v1989 = vcombine.high %v1955, %v1971
        %v1991 = vunpack.c.l.s4 1934713408
        %v1992 = vunpack.c.0.s8 %v1991
        %v1993 = vlaneseq
        %v1994 = vshrl.u32 %v1993, 7
        %v1995 = vsub.s32 %v1992, %v1994
        %v1996 = vrot.slane %v1988, %v1995
        %v1998 = vunpack.c.l.s4 1934713408
        %v1999 = vunpack.c.0.s8 %v1998
        %v2000 = vlaneseq
        %v2001 = vshrl.u32 %v2000, 7
        %v2002 = vsub.s32 %v1999, %v2001
        %v2003 = vrot.slane %v1989, %v2002
        %v2004 = vcombine.high %v1980, 0.0
        %v2005 = vcombine.high %v1987, 0.0
        %v2006 = vcombine.high %v1996, 0.0
        %v2007 = vcombine.high %v2003, 0.0
        %v2008 = vcombine.low %v1933, %v1937
        %v2009 = vcombine.high %v1933, %v1937
        %v2011 = vunpack.c.l.s4 1983009808
        %v2012 = vunpack.c.0.s8 %v2011
        %v2013 = vlaneseq
        %v2014 = vshrl.u32 %v2013, 7
        %v2015 = vsub.s32 %v2012, %v2014
        %v2016 = vrot.slane %v2008, %v2015
        %v2018 = vunpack.c.l.s4 1983009808
        %v2019 = vunpack.c.0.s8 %v2018
        %v2020 = vlaneseq
        %v2021 = vshrl.u32 %v2020, 7
        %v2022 = vsub.s32 %v2019, %v2021
        %v2023 = vrot.slane %v2009, %v2022
        %v2024 = vcombine.low %v1935, %v1939
        %v2025 = vcombine.high %v1935, %v1939
        %v2027 = vunpack.c.l.s4 1983009808
        %v2028 = vunpack.c.0.s8 %v2027
        %v2029 = vlaneseq
        %v2030 = vshrl.u32 %v2029, 7
        %v2031 = vsub.s32 %v2028, %v2030
        %v2032 = vrot.slane %v2024, %v2031
        %v2034 = vunpack.c.l.s4 1983009808
        %v2035 = vunpack.c.0.s8 %v2034
        %v2036 = vlaneseq
        %v2037 = vshrl.u32 %v2036, 7
        %v2038 = vsub.s32 %v2035, %v2037
        %v2039 = vrot.slane %v2025, %v2038
        %v2040 = vcombine.low %v2016, %v2032
        %v2041 = vcombine.high %v2016, %v2032
        %v2043 = vunpack.c.l.s4 1934713408
        %v2044 = vunpack.c.0.s8 %v2043
        %v2045 = vlaneseq
        %v2046 = vshrl.u32 %v2045, 7
        %v2047 = vsub.s32 %v2044, %v2046
        %v2048 = vrot.slane %v2040, %v2047
        %v2050 = vunpack.c.l.s4 1934713408
        %v2051 = vunpack.c.0.s8 %v2050
        %v2052 = vlaneseq
        %v2053 = vshrl.u32 %v2052, 7
        %v2054 = vsub.s32 %v2051, %v2053
        %v2055 = vrot.slane %v2041, %v2054
        %v2056 = vcombine.low %v2023, %v2039
        %v2057 = vcombine.high %v2023, %v2039
        %v2059 = vunpack.c.l.s4 1934713408
        %v2060 = vunpack.c.0.s8 %v2059
        %v2061 = vlaneseq
        %v2062 = vshrl.u32 %v2061, 7
        %v2063 = vsub.s32 %v2060, %v2062
        %v2064 = vrot.slane %v2056, %v2063
        %v2066 = vunpack.c.l.s4 1934713408
        %v2067 = vunpack.c.0.s8 %v2066
        %v2068 = vlaneseq
        %v2069 = vshrl.u32 %v2068, 7
        %v2070 = vsub.s32 %v2067, %v2069
        %v2071 = vrot.slane %v2057, %v2070
        %v2072 = vcombine.high %v2048, 0.0
        %v2073 = vcombine.high %v2055, 0.0
        %v2074 = vcombine.high %v2064, 0.0
        %v2075 = vcombine.high %v2071, 0.0
        %v2076 = vcombine.low %v1980, %v1987
        %v2078 = vunpack.c.l.s4 1983009808
        %v2079 = vunpack.c.0.s8 %v2078
        %v2080 = vlaneseq
        %v2081 = vshrl.u32 %v2080, 7
        %v2082 = vsub.s32 %v2079, %v2081
        %v2083 = vrot.slane %v2076, %v2082
        %v2084 = vcombine.low %v2004, %v2005
        %v2086 = vunpack.c.l.s4 1983009808
        %v2087 = vunpack.c.0.s8 %v2086
        %v2088 = vlaneseq
        %v2089 = vshrl.u32 %v2088, 7
        %v2090 = vsub.s32 %v2087, %v2089
        %v2091 = vrot.slane %v2084, %v2090
        %v2092 = vcombine.low %v1996, %v2003
        %v2094 = vunpack.c.l.s4 1983009808
        %v2095 = vunpack.c.0.s8 %v2094
        %v2096 = vlaneseq
        %v2097 = vshrl.u32 %v2096, 7
        %v2098 = vsub.s32 %v2095, %v2097
        %v2099 = vrot.slane %v2092, %v2098
        %v2100 = vcombine.low %v2006, %v2007
        %v2102 = vunpack.c.l.s4 1983009808
        %v2103 = vunpack.c.0.s8 %v2102
        %v2104 = vlaneseq
        %v2105 = vshrl.u32 %v2104, 7
        %v2106 = vsub.s32 %v2103, %v2105
        %v2107 = vrot.slane %v2100, %v2106
        %v2108 = vcombine.low %v2083, %v2091
        %v2109 = vcombine.high %v2083, %v2091
        %v2111 = vunpack.c.l.s4 1934713408
        %v2112 = vunpack.c.0.s8 %v2111
        %v2113 = vlaneseq
        %v2114 = vshrl.u32 %v2113, 7
        %v2115 = vsub.s32 %v2112, %v2114
        %v2116 = vrot.slane %v2108, %v2115
        %v2118 = vunpack.c.l.s4 1934713408
        %v2119 = vunpack.c.0.s8 %v2118
        %v2120 = vlaneseq
        %v2121 = vshrl.u32 %v2120, 7
        %v2122 = vsub.s32 %v2119, %v2121
        %v2123 = vrot.slane %v2109, %v2122
        %v2124 = vcombine.low %v2099, %v2107
        %v2125 = vcombine.high %v2099, %v2107
        %v2127 = vunpack.c.l.s4 1934713408
        %v2128 = vunpack.c.0.s8 %v2127
        %v2129 = vlaneseq
        %v2130 = vshrl.u32 %v2129, 7
        %v2131 = vsub.s32 %v2128, %v2130
        %v2132 = vrot.slane %v2124, %v2131
        %v2134 = vunpack.c.l.s4 1934713408
        %v2135 = vunpack.c.0.s8 %v2134
        %v2136 = vlaneseq
        %v2137 = vshrl.u32 %v2136, 7
        %v2138 = vsub.s32 %v2135, %v2137
        %v2139 = vrot.slane %v2125, %v2138
        %v2140 = vcombine.low %v2116, %v2132
        %v2141 = vcombine.high %v2116, %v2132
        %v2142 = vcombine.low %v2123, %v2139
        %v2143 = vcombine.high %v2123, %v2139
        %v2144 = vcombine.low %v2048, %v2055
        %v2146 = vunpack.c.l.s4 1983009808
        %v2147 = vunpack.c.0.s8 %v2146
        %v2148 = vlaneseq
        %v2149 = vshrl.u32 %v2148, 7
        %v2150 = vsub.s32 %v2147, %v2149
        %v2151 = vrot.slane %v2144, %v2150
        %v2152 = vcombine.low %v2072, %v2073
        %v2154 = vunpack.c.l.s4 1983009808
        %v2155 = vunpack.c.0.s8 %v2154
        %v2156 = vlaneseq
        %v2157 = vshrl.u32 %v2156, 7
        %v2158 = vsub.s32 %v2155, %v2157
        %v2159 = vrot.slane %v2152, %v2158
        %v2160 = vcombine.low %v2064, %v2071
        %v2162 = vunpack.c.l.s4 1983009808
        %v2163 = vunpack.c.0.s8 %v2162
        %v2164 = vlaneseq
        %v2165 = vshrl.u32 %v2164, 7
        %v2166 = vsub.s32 %v2163, %v2165
        %v2167 = vrot.slane %v2160, %v2166
        %v2168 = vcombine.low %v2074, %v2075
        %v2170 = vunpack.c.l.s4 1983009808
        %v2171 = vunpack.c.0.s8 %v2170
        %v2172 = vlaneseq
        %v2173 = vshrl.u32 %v2172, 7
        %v2174 = vsub.s32 %v2171, %v2173
        %v2175 = vrot.slane %v2168, %v2174
        %v2176 = vcombine.low %v2151, %v2159
        %v2177 = vcombine.high %v2151, %v2159
        %v2179 = vunpack.c.l.s4 1934713408
        %v2180 = vunpack.c.0.s8 %v2179
        %v2181 = vlaneseq
        %v2182 = vshrl.u32 %v2181, 7
        %v2183 = vsub.s32 %v2180, %v2182
        %v2184 = vrot.slane %v2176, %v2183
        %v2186 = vunpack.c.l.s4 1934713408
        %v2187 = vunpack.c.0.s8 %v2186
        %v2188 = vlaneseq
        %v2189 = vshrl.u32 %v2188, 7
        %v2190 = vsub.s32 %v2187, %v2189
        %v2191 = vrot.slane %v2177, %v2190
        %v2192 = vcombine.low %v2167, %v2175
        %v2193 = vcombine.high %v2167, %v2175
        %v2195 = vunpack.c.l.s4 1934713408
        %v2196 = vunpack.c.0.s8 %v2195
        %v2197 = vlaneseq
        %v2198 = vshrl.u32 %v2197, 7
        %v2199 = vsub.s32 %v2196, %v2198
        %v2200 = vrot.slane %v2192, %v2199
        %v2202 = vunpack.c.l.s4 1934713408
        %v2203 = vunpack.c.0.s8 %v2202
        %v2204 = vlaneseq
        %v2205 = vshrl.u32 %v2204, 7
        %v2206 = vsub.s32 %v2203, %v2205
        %v2207 = vrot.slane %v2193, %v2206
        %v2208 = vcombine.low %v2184, %v2200
        %v2209 = vcombine.high %v2184, %v2200
        %v2210 = vcombine.low %v2191, %v2207
        %v2211 = vcombine.high %v2191, %v2207
        %2214 = vrot.lane.b32.xlu0 %v2141, 8
        %v2215 = vpop.permute.xlu0 %2214
        %2216 = vrot.lane.b32.xlu0 %v2209, 8
        %v2217 = vpop.permute.xlu0 %2216
        %2222 = vrot.lane.b32.xlu0 %v2142, 16
        %v2223 = vpop.permute.xlu0 %2222
        %2224 = vrot.lane.b32.xlu0 %v2210, 16
        %v2225 = vpop.permute.xlu0 %2224
        %2230 = vrot.lane.b32.xlu0 %v2143, 24
        %v2231 = vpop.permute.xlu0 %2230
        %2232 = vrot.lane.b32.xlu0 %v2211, 24
        %v2233 = vpop.permute.xlu0 %2232
        %v2236 = vsel %vm1414, %v2140, %v2215
        %v2237 = vsel %vm1414, %v2208, %v2217
        %vm2238 = vcmask 130048
        %v2239 = vsel %vm2238, %v2236, %v2223
        %v2240 = vsel %vm2238, %v2237, %v2225
        %vm2241 = vcmask 195584
        %v2242 = vsel %vm2241, %v2239, %v2231
        %v2243 = vsel %vm2241, %v2240, %v2233
        %v2244 = vpack.c.bf16 %v2243, %v2242
        %v2245 = vld [vmem:[#allocation19] sm:$0xf]
        %v2246 = vld [vmem:[#allocation19 + $0x4] sm:$0xf]
        %v2247 = vld [vmem:[#allocation19 + $0x8] sm:$0xf]
        %v2248 = vld [vmem:[#allocation19 + $0xc] sm:$0xf]
        %v2249 = vld [vmem:[#allocation20] sm:$0x1]
        %v2251 = vlaneseq
        %v2252 = vshrl.u32 %v2251, 7
        %v2253 = vsub.s32 0, %v2252
        %v2254 = vrot.slane %v2249, %v2253
        %v2260 = vunpack.c.l.b16 %v2245
        %v2261 = vunpack.c.l.b16 %v2246
        %v2262 = vunpack.c.l.b16 %v2247
        %v2263 = vunpack.c.l.b16 %v2248
        %v2264 = vpack.c.b16 %v2261, %v2260
        %v2265 = vpack.c.b16 %v2263, %v2262
        %v2269 = vsel %vm606, %v2244, 0
        %2271 = vmatprep.subr.bf16.mxu0 0
        %2272 = vmatpush1.bf16.msra.mxu0 %v2264
        %2273 = vmatprep.subr.bf16.mxu0 0
        %2274 = vmatpush1.bf16.msra.mxu0 %v2265
        %2275 = vmatprep.subr.bf16.mxu0 0
        %2276 = vmatpush1.bf16.msra.mxu0 0
        %2277 = vmatprep.subr.bf16.mxu0 0
        %2278 = vmatpush1.bf16.msra.mxu0 0
        %2279 = vmatprep.subr.bf16.mxu0 0
        %2280 = vmatpush1.bf16.msra.mxu0 0
        %2281 = vmatprep.subr.bf16.mxu0 0
        %2282 = vmatpush1.bf16.msra.mxu0 0
        %2283 = vmatprep.subr.bf16.mxu0 0
        %2284 = vmatpush1.bf16.msra.mxu0 0
        %2285 = vmatprep.subr.bf16.mxu0 0
        %2286 = vmatpush1.bf16.msra.mxu0 0
        %2287 = vmatprep.subr.bf16.mxu0 0
        %2288 = vmatpush1.bf16.msra.mxu0 0
        %2289 = vmatprep.subr.bf16.mxu0 0
        %2290 = vmatpush1.bf16.msra.mxu0 0
        %2291 = vmatprep.subr.bf16.mxu0 0
        %2292 = vmatpush1.bf16.msra.mxu0 0
        %2293 = vmatprep.subr.bf16.mxu0 0
        %2294 = vmatpush1.bf16.msra.mxu0 0
        %2295 = vmatprep.subr.bf16.mxu0 0
        %2296 = vmatpush1.bf16.msra.mxu0 0
        %2297 = vmatprep.subr.bf16.mxu0 0
        %2298 = vmatpush1.bf16.msra.mxu0 0
        %2299 = vmatprep.subr.bf16.mxu0 0
        %2300 = vmatpush1.bf16.msra.mxu0 0
        %2301 = vmatprep.subr.bf16.mxu0 0
        %2302 = vmatpush1.bf16.msra.mxu0 0
        %2303 = vmatprep.mubr.bf16.mxu0 0
        %2304 = vmatmul.mubr.bf16.gmra.mrb[0].mxu0 %v2269
        %v2305 = vpop.f32.mrb[0].mxu0
        %v2306 = vadd.f32 %v2254, %v2305
        %v2307 = vpop.f32.mrb[0].mxu0
        %v2308 = vpop.f32.mrb[0].mxu0
        %v2309 = vadd.f32 %v2254, %v2308
        %v2310 = vpop.f32.mrb[0].mxu0
        %2311 = vdwg.mxu0
        %v2312 = vadd.f32 %v601, %v2306
        %v2313 = vadd.f32 %v602, %v2309
        %2314 = vst.msk [vmem:[%s599] sm:$0xff] %vm606, %v2312
        %2315 = vst.msk [vmem:[%s599 + $0x8] sm:$0xff] %vm606, %v2313
        %s2316 = sand.u32 %s307, 1
        %s2317 = scalar_lea.sflag [#allocation4], %s2316
        %s2318 = sand.u32 %s307, 1
        %s2319 = smul.addr %s2318, 16
        %s2320 = scalar_lea.vmem [#allocation22], %s2319
        // Predicated region
        $region117: #{decoder_forward.7} parent=67 // pred_check
          %p2321 = pneg %p317
        $region118: #{decoder_forward.7} parent=67 // pred_check_branch
          %2323 = sbr.rel (%p2321) target = $region120
        $region119: #{decoder_forward.7} parent=67 // pred_region
          %s2325 = ssub.s32 256, 256
          %2326 = vsyncadd %s2317, %s2325
          %s2327 = smul.addr %s37, 2
          %s2328 = smul.addr %s2327, 128
          %s2329 = scalar_lea.hbm %s12, %s2328
          %s2330 = sshll.u32 %s2320, 4
          %s2331 = int_to_ptr.vmem [resolvable:$true] %s2330
          %2336 = dma.vmem_to_hbm [thread:$0]  %s2331, 256, %s2329, %s2317, 128, 128, 8
        $region120: #{decoder_forward.7} parent=67 // pred_fallthru
          _
      $region68: #{decoder_forward.7} parent=5 // pred_fallthru
        _
      %p2337 = scmp.le.s32.totalorder 2, %s32
      // Predicated region
      $region121: #{decoder_forward.7} parent=5 // pred_check
        %p2338 = pneg %p2337
      $region122: #{decoder_forward.7} parent=5 // pred_check_branch
        %2340 = sbr.rel (%p2338) target = $region124
      $region123: #{decoder_forward.7} parent=5 // pred_region
        %s2341 = ssub.s32 %s32, 2
        // Predicated region
        $region125: #{decoder_forward.7} parent=123 // pred_check
          %p2342 = pneg %p323
        $region126: #{decoder_forward.7} parent=123 // pred_check_branch
          %2344 = sbr.rel (%p2342) target = $region128
        $region127: #{decoder_forward.7} parent=123 // pred_region
          %s2345 = sand.u32 %s308, 1
          %s2346 = scalar_lea.sflag [#allocation4], %s2345
          %s2347 = sand.u32 %s308, 1
          %s2348 = smul.addr %s2347, 16
          %s2349 = scalar_lea.vmem [#allocation22], %s2348
          %2350 = dma.done %s2346, 256
        $region128: #{decoder_forward.7} parent=123 // pred_fallthru
          _
      $region124: #{decoder_forward.7} parent=5 // pred_fallthru
        _
    $region6: #{decoder_forward.7} parent=1 // loop_footer
      %s36 = sadd.s32 1, %s32
    $region7: #{decoder_forward.7} parent=1 // loop_footer_branch
      %31 = sbr.rel target = $region3
    $region8: #{decoder_forward.7} parent=1 // loop_exit
      _
    %2351 = vsyncpa [#allocation3], 1
    %s2352 = scalar_lea.sflag [#allocation3], 1
    %2353 = vsyncpa %s2352, 1
    %2354 = vsyncpa [#allocation6], 1
    %s2355 = scalar_lea.sflag [#allocation6], 1
    %2356 = vsyncpa %s2355, 1
    %2357 = vsyncpa [#allocation9], 1
    %2358 = vsyncpa [#allocation12], 1
    %2359 = vsyncpa [#allocation15], 1
    %2360 = vsyncpa [#allocation18], 1
    %2361 = vsyncpa [#allocation21], 1
    %2362 = vsyncpa [#allocation4], 1
    %s2363 = scalar_lea.sflag [#allocation4], 1
    %2364 = vsyncpa %s2363, 1

// kernel: decoder_forward.6
$region0: #{decoder_forward.6}
  #allocation0 [shape = 'u32[]', space=smem, size = 0x4, offset = 0x4, fixed_abs, tag = 'smem constant byte address 0x4 - core index']
  #allocation1 [shape = 'u32[144,128]{1,0:T(1,128)}', space=vmem, size = 0x12000, scoped, tag = 'internal scratch']
  %s0 = inlined_call_operand.hbm [shape: f32[2,16,32], index: 0, kind: input, shape index: {}]
  %s1 = inlined_call_operand.hbm [shape: f32[1,32], index: 1, kind: input, shape index: {}]
  %s2 = inlined_call_operand.hbm [shape: f32[1,32], index: 2, kind: input, shape index: {}]
  %s3 = inlined_call_operand.hbm [shape: bf16[32,96], index: 3, kind: input, shape index: {}]
  %s4 = inlined_call_operand.hbm [shape: f32[1,96], index: 4, kind: input, shape index: {}]
  %s5 = inlined_call_operand.hbm [shape: bf16[32,32], index: 5, kind: input, shape index: {}]
  %s6 = inlined_call_operand.hbm [shape: f32[1,32], index: 6, kind: input, shape index: {}]
  %s7 = inlined_call_operand.hbm [shape: f32[2,16,32], index: 7, kind: output, shape index: {}]
  %s8 = sld [smem:[#allocation0]]
  $region89: #{decoder_forward.6} parent=0
    _
  %s10 = ssub.s32 1, %s8
  %s11 = scalar_select 0, %s10, %s8
  $region1: #{decoder_forward.6} parent=0
    #allocation2 [shape = 'u8[16384]{0}', space=vmem, size = 0x4000, scoped, tag = 'input window, operand 0']
    #allocation3 [shape = 's32[2]{0}', space=sflag, size = 0x8, scoped, tag = 'scoped memory for decoder_forward.6']
    #allocation4 [shape = 's32[2]{0}', space=sflag, size = 0x8, scoped, tag = 'scoped memory for decoder_forward.6']
    #allocation5 [shape = 'u8[512]{0}', space=vmem, size = 0x400, scoped, tag = 'input window, operand 1, single buffered']
    #allocation6 [shape = 's32[1]{0}', space=sflag, size = 0x4, scoped, tag = 'scoped memory for decoder_forward.6']
    #allocation7 [shape = 'u8[512]{0}', space=vmem, size = 0x400, scoped, tag = 'input window, operand 2, single buffered']
    #allocation8 [shape = 'u8[8192]{0}', space=vmem, size = 0x2000, scoped, tag = 'input window, operand 3, single buffered']
    #allocation9 [shape = 's32[1]{0}', space=sflag, size = 0x4, scoped, tag = 'scoped memory for decoder_forward.6']
    #allocation10 [shape = 'u8[512]{0}', space=vmem, size = 0x400, scoped, tag = 'input window, operand 4, single buffered']
    #allocation11 [shape = 'u8[8192]{0}', space=vmem, size = 0x2000, scoped, tag = 'input window, operand 5, single buffered']
    #allocation12 [shape = 's32[1]{0}', space=sflag, size = 0x4, scoped, tag = 'scoped memory for decoder_forward.6']
    #allocation13 [shape = 'u8[512]{0}', space=vmem, size = 0x400, scoped, tag = 'input window, operand 6, single buffered']
    #allocation14 [shape = 'u8[16384]{0}', space=vmem, size = 0x4000, scoped, tag = 'output window, operand 0']
    %12 = vsyncpa [#allocation3], 0
    %s13 = scalar_lea.sflag [#allocation3], 1
    %14 = vsyncpa %s13, 0
    %15 = vsyncpa [#allocation6], 0
    %16 = vsyncpa [#allocation9], 0
    %17 = vsyncpa [#allocation12], 0
    %18 = vsyncpa [#allocation4], 0
    %s19 = scalar_lea.sflag [#allocation4], 1
    %20 = vsyncpa %s19, 0
    loop: start=0, step=1, limit=4
    $region2: #{decoder_forward.6} parent=1 // loop_pre_header
      _
    $region3: #{decoder_forward.6} parent=1 // loop_header
      %s22 = sphi 0, %s26
      %p23 = scmp.ge.s32.totalorder %s22, 4
      %s32 = sphi 0, %s34
      %s35 = sphi 0, %s32
      %s36 = sphi 0, %s35
      %s52 = sphi 0, %s36
      %s56 = sphi 0, %s56
      %s58 = sphi 0, %s56
      %s59 = sphi 0, %s58
      %s73 = sphi 0, %s59
      %s77 = sphi 0, %s77
      %s79 = sphi 0, %s77
      %s80 = sphi 0, %s79
      %s94 = sphi 0, %s80
      %s98 = sphi 0, %s98
      %s100 = sphi 0, %s98
      %s101 = sphi 0, %s100
      %s115 = sphi 0, %s101
      %s119 = sphi 0, %s119
      %s121 = sphi 0, %s119
      %s122 = sphi 0, %s121
      %s136 = sphi 0, %s122
      %s140 = sphi 0, %s140
      %s142 = sphi 0, %s140
      %s143 = sphi 0, %s142
      %s157 = sphi 0, %s143
      %s161 = sphi 0, %s161
      %s163 = sphi 0, %s161
      %s164 = sphi 0, %s163
      %s178 = sphi 0, %s164
      %s184 = sphi 0, %s186
      %s187 = sphi 0, %s184
      %s188 = sphi 0, %s187
      %s204 = sphi 0, %s188
    $region4: #{decoder_forward.6} parent=1 // loop_header_branch
      %25 = sbr.rel (%p23) target = $region8
    $region5: #{decoder_forward.6} parent=1 // loop_body
      %s27 = ssub.s32 %s22, 1
      %s28 = ssub.s32 %s22, 2
      %s29 = sadd.s32 %s22, 1
      %s30 = ssub.s32 %s22, %s29
      %p31 = scmp.eq.s32.totalorder %s30, 0
      %s33 = sadd.s32 %s32, 1
      %s34 = scalar_select %p31, %s32, %s33
      %p37 = pneg %p31
      %p38 = scmp.eq.s32.totalorder %s22, 1
      %p39 = por %p37, %p38
      %p40 = scmp.ne.s32.totalorder %s32, %s35
      %p41 = scmp.eq.s32.totalorder %s22, 0
      %p42 = por %p40, %p41
      %p43 = scmp.ne.s32.totalorder %s32, %s35
      %p44 = scmp.eq.s32.totalorder %s27, 1
      %p45 = por %p43, %p44
      %p46 = scmp.ne.s32.totalorder %s35, %s36
      %p47 = scmp.eq.s32.totalorder %s27, 0
      %p48 = por %p46, %p47
      %p49 = scmp.ne.s32.totalorder %s35, %s36
      %p50 = scmp.eq.s32.totalorder %s28, 1
      %p51 = por %p49, %p50
      %p53 = scmp.ne.s32.totalorder %s36, %s52
      %p54 = scmp.eq.s32.totalorder %s28, 0
      %p55 = por %p53, %p54
      %s57 = sadd.s32 %s56, 1
      %p60 = scmp.eq.s32.totalorder %s22, 1
      %p61 = scmp.ne.s32.totalorder %s56, %s58
      %p62 = scmp.eq.s32.totalorder %s22, 0
      %p63 = por %p61, %p62
      %p64 = scmp.ne.s32.totalorder %s56, %s58
      %p65 = scmp.eq.s32.totalorder %s27, 1
      %p66 = por %p64, %p65
      %p67 = scmp.ne.s32.totalorder %s58, %s59
      %p68 = scmp.eq.s32.totalorder %s27, 0
      %p69 = por %p67, %p68
      %p70 = scmp.ne.s32.totalorder %s58, %s59
      %p71 = scmp.eq.s32.totalorder %s28, 1
      %p72 = por %p70, %p71
      %p74 = scmp.ne.s32.totalorder %s59, %s73
      %p75 = scmp.eq.s32.totalorder %s28, 0
      %p76 = por %p74, %p75
      %s78 = sadd.s32 %s77, 1
      %p81 = scmp.eq.s32.totalorder %s22, 1
      %p82 = scmp.ne.s32.totalorder %s77, %s79
      %p83 = scmp.eq.s32.totalorder %s22, 0
      %p84 = por %p82, %p83
      %p85 = scmp.ne.s32.totalorder %s77, %s79
      %p86 = scmp.eq.s32.totalorder %s27, 1
      %p87 = por %p85, %p86
      %p88 = scmp.ne.s32.totalorder %s79, %s80
      %p89 = scmp.eq.s32.totalorder %s27, 0
      %p90 = por %p88, %p89
      %p91 = scmp.ne.s32.totalorder %s79, %s80
      %p92 = scmp.eq.s32.totalorder %s28, 1
      %p93 = por %p91, %p92
      %p95 = scmp.ne.s32.totalorder %s80, %s94
      %p96 = scmp.eq.s32.totalorder %s28, 0
      %p97 = por %p95, %p96
      %s99 = sadd.s32 %s98, 1
      %p102 = scmp.eq.s32.totalorder %s22, 1
      %p103 = scmp.ne.s32.totalorder %s98, %s100
      %p104 = scmp.eq.s32.totalorder %s22, 0
      %p105 = por %p103, %p104
      %p106 = scmp.ne.s32.totalorder %s98, %s100
      %p107 = scmp.eq.s32.totalorder %s27, 1
      %p108 = por %p106, %p107
      %p109 = scmp.ne.s32.totalorder %s100, %s101
      %p110 = scmp.eq.s32.totalorder %s27, 0
      %p111 = por %p109, %p110
      %p112 = scmp.ne.s32.totalorder %s100, %s101
      %p113 = scmp.eq.s32.totalorder %s28, 1
      %p114 = por %p112, %p113
      %p116 = scmp.ne.s32.totalorder %s101, %s115
      %p117 = scmp.eq.s32.totalorder %s28, 0
      %p118 = por %p116, %p117
      %s120 = sadd.s32 %s119, 1
      %p123 = scmp.eq.s32.totalorder %s22, 1
      %p124 = scmp.ne.s32.totalorder %s119, %s121
      %p125 = scmp.eq.s32.totalorder %s22, 0
      %p126 = por %p124, %p125
      %p127 = scmp.ne.s32.totalorder %s119, %s121
      %p128 = scmp.eq.s32.totalorder %s27, 1
      %p129 = por %p127, %p128
      %p130 = scmp.ne.s32.totalorder %s121, %s122
      %p131 = scmp.eq.s32.totalorder %s27, 0
      %p132 = por %p130, %p131
      %p133 = scmp.ne.s32.totalorder %s121, %s122
      %p134 = scmp.eq.s32.totalorder %s28, 1
      %p135 = por %p133, %p134
      %p137 = scmp.ne.s32.totalorder %s122, %s136
      %p138 = scmp.eq.s32.totalorder %s28, 0
      %p139 = por %p137, %p138
      %s141 = sadd.s32 %s140, 1
      %p144 = scmp.eq.s32.totalorder %s22, 1
      %p145 = scmp.ne.s32.totalorder %s140, %s142
      %p146 = scmp.eq.s32.totalorder %s22, 0
      %p147 = por %p145, %p146
      %p148 = scmp.ne.s32.totalorder %s140, %s142
      %p149 = scmp.eq.s32.totalorder %s27, 1
      %p150 = por %p148, %p149
      %p151 = scmp.ne.s32.totalorder %s142, %s143
      %p152 = scmp.eq.s32.totalorder %s27, 0
      %p153 = por %p151, %p152
      %p154 = scmp.ne.s32.totalorder %s142, %s143
      %p155 = scmp.eq.s32.totalorder %s28, 1
      %p156 = por %p154, %p155
      %p158 = scmp.ne.s32.totalorder %s143, %s157
      %p159 = scmp.eq.s32.totalorder %s28, 0
      %p160 = por %p158, %p159
      %s162 = sadd.s32 %s161, 1
      %p165 = scmp.eq.s32.totalorder %s22, 1
      %p166 = scmp.ne.s32.totalorder %s161, %s163
      %p167 = scmp.eq.s32.totalorder %s22, 0
      %p168 = por %p166, %p167
      %p169 = scmp.ne.s32.totalorder %s161, %s163
      %p170 = scmp.eq.s32.totalorder %s27, 1
      %p171 = por %p169, %p170
      %p172 = scmp.ne.s32.totalorder %s163, %s164
      %p173 = scmp.eq.s32.totalorder %s27, 0
      %p174 = por %p172, %p173
      %p175 = scmp.ne.s32.totalorder %s163, %s164
      %p176 = scmp.eq.s32.totalorder %s28, 1
      %p177 = por %p175, %p176
      %p179 = scmp.ne.s32.totalorder %s164, %s178
      %p180 = scmp.eq.s32.totalorder %s28, 0
      %p181 = por %p179, %p180
      %s182 = ssub.s32 %s22, %s29
      %p183 = scmp.eq.s32.totalorder %s182, 0
      %s185 = sadd.s32 %s184, 1
      %s186 = scalar_select %p183, %s184, %s185
      %p189 = pneg %p183
      %p190 = scmp.eq.s32.totalorder %s22, 1
      %p191 = por %p189, %p190
      %p192 = scmp.ne.s32.totalorder %s184, %s187
      %p193 = scmp.eq.s32.totalorder %s22, 0
      %p194 = por %p192, %p193
      %p195 = scmp.ne.s32.totalorder %s184, %s187
      %p196 = scmp.eq.s32.totalorder %s27, 1
      %p197 = por %p195, %p196
      %p198 = scmp.ne.s32.totalorder %s187, %s188
      %p199 = scmp.eq.s32.totalorder %s27, 0
      %p200 = por %p198, %p199
      %p201 = scmp.ne.s32.totalorder %s187, %s188
      %p202 = scmp.eq.s32.totalorder %s28, 1
      %p203 = por %p201, %p202
      %p205 = scmp.ne.s32.totalorder %s188, %s204
      %p206 = scmp.eq.s32.totalorder %s28, 0
      %p207 = por %p205, %p206
      %p208 = scmp.le.s32.totalorder 1, %s22
      %p209 = scmp.lt.s32.totalorder %s22, 3
      %p210 = pnand %p208, %p209
      %p211 = pneg %p210
      // Predicated region
      $region9: #{decoder_forward.6} parent=5 // pred_check
        _
      $region10: #{decoder_forward.6} parent=5 // pred_check_branch
        %213 = sbr.rel (%p210) target = $region12
      $region11: #{decoder_forward.6} parent=5 // pred_region
        %s214 = ssub.s32 %s22, 1
        // Predicated region
        $region13: #{decoder_forward.6} parent=11 // pred_check
          %p215 = pneg %p69
        $region14: #{decoder_forward.6} parent=11 // pred_check_branch
          %217 = sbr.rel (%p215) target = $region16
        $region15: #{decoder_forward.6} parent=11 // pred_region
          %s219 = ssub.s32 16, 16
          %220 = vsyncadd [#allocation6], %s219
          %s222 = sshll.u32 [#allocation5], 4
          %s223 = int_to_ptr.vmem [resolvable:$true] %s222
          %225 = dma.hbm_to_vmem [thread:$0]  %s1, 16, %s223, [#allocation6]
        $region16: #{decoder_forward.6} parent=11 // pred_fallthru
          _
        // Predicated region
        $region17: #{decoder_forward.6} parent=11 // pred_check
          %p226 = pneg %p90
        $region18: #{decoder_forward.6} parent=11 // pred_check_branch
          %228 = sbr.rel (%p226) target = $region20
        $region19: #{decoder_forward.6} parent=11 // pred_region
          %s230 = ssub.s32 16, 16
          %231 = vsyncadd [#allocation6], %s230
          %s233 = sshll.u32 [#allocation7], 4
          %s234 = int_to_ptr.vmem [resolvable:$true] %s233
          %236 = dma.hbm_to_vmem [thread:$0]  %s2, 16, %s234, [#allocation6]
        $region20: #{decoder_forward.6} parent=11 // pred_fallthru
          _
        // Predicated region
        $region21: #{decoder_forward.6} parent=11 // pred_check
          %p237 = pneg %p111
        $region22: #{decoder_forward.6} parent=11 // pred_check_branch
          %239 = sbr.rel (%p237) target = $region24
        $region23: #{decoder_forward.6} parent=11 // pred_region
          %s241 = ssub.s32 256, 256
          %242 = vsyncadd [#allocation9], %s241
          %s243 = sshll.u32 [#allocation8], 4
          %s244 = int_to_ptr.vmem [resolvable:$true] %s243
          %249 = dma.hbm_to_vmem [thread:$0]  %s3, 256, %s244, [#allocation9], 64, 64, 4
        $region24: #{decoder_forward.6} parent=11 // pred_fallthru
          _
        // Predicated region
        $region25: #{decoder_forward.6} parent=11 // pred_check
          %p250 = pneg %p132
        $region26: #{decoder_forward.6} parent=11 // pred_check_branch
          %252 = sbr.rel (%p250) target = $region28
        $region27: #{decoder_forward.6} parent=11 // pred_region
          %s254 = ssub.s32 16, 16
          %255 = vsyncadd [#allocation9], %s254
          %s257 = sshll.u32 [#allocation10], 4
          %s258 = int_to_ptr.vmem [resolvable:$true] %s257
          %260 = dma.hbm_to_vmem [thread:$0]  %s4, 16, %s258, [#allocation9]
        $region28: #{decoder_forward.6} parent=11 // pred_fallthru
          _
        // Predicated region
        $region29: #{decoder_forward.6} parent=11 // pred_check
          %p261 = pneg %p153
        $region30: #{decoder_forward.6} parent=11 // pred_check_branch
          %263 = sbr.rel (%p261) target = $region32
        $region31: #{decoder_forward.6} parent=11 // pred_region
          %s265 = ssub.s32 256, 256
          %266 = vsyncadd [#allocation12], %s265
          %s267 = sshll.u32 [#allocation11], 4
          %s268 = int_to_ptr.vmem [resolvable:$true] %s267
          %273 = dma.hbm_to_vmem [thread:$0]  %s5, 256, %s268, [#allocation12], 64, 64, 4
        $region32: #{decoder_forward.6} parent=11 // pred_fallthru
          _
        // Predicated region
        $region33: #{decoder_forward.6} parent=11 // pred_check
          %p274 = pneg %p174
        $region34: #{decoder_forward.6} parent=11 // pred_check_branch
          %276 = sbr.rel (%p274) target = $region36
        $region35: #{decoder_forward.6} parent=11 // pred_region
          %s278 = ssub.s32 16, 16
          %279 = vsyncadd [#allocation12], %s278
          %s281 = sshll.u32 [#allocation13], 4
          %s282 = int_to_ptr.vmem [resolvable:$true] %s281
          %284 = dma.hbm_to_vmem [thread:$0]  %s6, 16, %s282, [#allocation12]
        $region36: #{decoder_forward.6} parent=11 // pred_fallthru
          _
      $region12: #{decoder_forward.6} parent=5 // pred_fallthru
        _
      %p285 = scmp.lt.s32.totalorder %s22, 2
      // Predicated region
      $region37: #{decoder_forward.6} parent=5 // pred_check
        %p286 = pneg %p285
      $region38: #{decoder_forward.6} parent=5 // pred_check_branch
        %288 = sbr.rel (%p286) target = $region40
      $region39: #{decoder_forward.6} parent=5 // pred_region
        // Predicated region
        $region41: #{decoder_forward.6} parent=39 // pred_check
          %p289 = pneg %p42
        $region42: #{decoder_forward.6} parent=39 // pred_check_branch
          %291 = sbr.rel (%p289) target = $region44
        $region43: #{decoder_forward.6} parent=39 // pred_region
          %s292 = sand.u32 %s32, 1
          %s293 = scalar_lea.sflag [#allocation3], %s292
          %s294 = sand.u32 %s32, 1
          %s295 = smul.addr %s294, 16
          %s296 = scalar_lea.vmem [#allocation2], %s295
          %s298 = ssub.s32 256, 256
          %299 = vsyncadd %s293, %s298
          %s300 = smul.addr %s22, 2
          %s301 = smul.addr %s300, 128
          %s302 = scalar_lea.hbm %s0, %s301
          %s303 = sshll.u32 %s296, 4
          %s304 = int_to_ptr.vmem [resolvable:$true] %s303
          %309 = dma.hbm_to_vmem [thread:$0]  %s302, 256, %s304, %s293, 128, 128, 8
        $region44: #{decoder_forward.6} parent=39 // pred_fallthru
          _
      $region40: #{decoder_forward.6} parent=5 // pred_fallthru
        _
      %p310 = scmp.le.s32.totalorder 1, %s22
      %p311 = scmp.lt.s32.totalorder %s22, 3
      %p312 = pnand %p310, %p311
      %p313 = pneg %p312
      // Predicated region
      $region45: #{decoder_forward.6} parent=5 // pred_check
        _
      $region46: #{decoder_forward.6} parent=5 // pred_check_branch
        %315 = sbr.rel (%p312) target = $region48
      $region47: #{decoder_forward.6} parent=5 // pred_region
        %s316 = ssub.s32 %s22, 1
        %s317 = sand.u32 %s35, 1
        %s318 = scalar_lea.sflag [#allocation3], %s317
        %s319 = sand.u32 %s35, 1
        %s320 = smul.addr %s319, 16
        %s321 = scalar_lea.vmem [#allocation2], %s320
        // Predicated region
        $region49: #{decoder_forward.6} parent=47 // pred_check
          %p322 = pneg %p48
        $region50: #{decoder_forward.6} parent=47 // pred_check_branch
          %324 = sbr.rel (%p322) target = $region52
        $region51: #{decoder_forward.6} parent=47 // pred_region
          %325 = dma.done %s318, 256
        $region52: #{decoder_forward.6} parent=47 // pred_fallthru
          _
        // Predicated region
        $region53: #{decoder_forward.6} parent=47 // pred_check
          %p326 = pneg %p69
        $region54: #{decoder_forward.6} parent=47 // pred_check_branch
          %328 = sbr.rel (%p326) target = $region56
        $region55: #{decoder_forward.6} parent=47 // pred_region
          %329 = dma.done [#allocation6], 16
        $region56: #{decoder_forward.6} parent=47 // pred_fallthru
          _
        // Predicated region
        $region57: #{decoder_forward.6} parent=47 // pred_check
          %p330 = pneg %p90
        $region58: #{decoder_forward.6} parent=47 // pred_check_branch
          %332 = sbr.rel (%p330) target = $region60
        $region59: #{decoder_forward.6} parent=47 // pred_region
          %333 = dma.done [#allocation6], 16
        $region60: #{decoder_forward.6} parent=47 // pred_fallthru
          _
        // Predicated region
        $region61: #{decoder_forward.6} parent=47 // pred_check
          %p334 = pneg %p111
        $region62: #{decoder_forward.6} parent=47 // pred_check_branch
          %336 = sbr.rel (%p334) target = $region64
        $region63: #{decoder_forward.6} parent=47 // pred_region
          %337 = dma.done [#allocation9], 256
        $region64: #{decoder_forward.6} parent=47 // pred_fallthru
          _
        // Predicated region
        $region65: #{decoder_forward.6} parent=47 // pred_check
          %p338 = pneg %p132
        $region66: #{decoder_forward.6} parent=47 // pred_check_branch
          %340 = sbr.rel (%p338) target = $region68
        $region67: #{decoder_forward.6} parent=47 // pred_region
          %341 = dma.done [#allocation9], 16
        $region68: #{decoder_forward.6} parent=47 // pred_fallthru
          _
        // Predicated region
        $region69: #{decoder_forward.6} parent=47 // pred_check
          %p342 = pneg %p153
        $region70: #{decoder_forward.6} parent=47 // pred_check_branch
          %344 = sbr.rel (%p342) target = $region72
        $region71: #{decoder_forward.6} parent=47 // pred_region
          %345 = dma.done [#allocation12], 256
        $region72: #{decoder_forward.6} parent=47 // pred_fallthru
          _
        // Predicated region
        $region73: #{decoder_forward.6} parent=47 // pred_check
          %p346 = pneg %p174
        $region74: #{decoder_forward.6} parent=47 // pred_check_branch
          %348 = sbr.rel (%p346) target = $region76
        $region75: #{decoder_forward.6} parent=47 // pred_region
          %349 = dma.done [#allocation12], 16
        $region76: #{decoder_forward.6} parent=47 // pred_fallthru
          _
        %s350 = sand.u32 %s35, 1
        %s351 = scalar_lea.sflag [#allocation3], %s350
        %s352 = sand.u32 %s35, 1
        %s353 = smul.addr %s352, 16
        %s354 = scalar_lea.vmem [#allocation2], %s353
        %p355 = pneg %p48
        %p356 = pneg %p45
        %p357 = pneg %p69
        %p358 = pneg %p66
        %p359 = pneg %p90
        %p360 = pneg %p87
        %p361 = pneg %p111
        %p362 = pneg %p108
        %p363 = pneg %p132
        %p364 = pneg %p129
        %p365 = pneg %p153
        %p366 = pneg %p150
        %p367 = pneg %p174
        %p368 = pneg %p171
        %p369 = pneg %p200
        %p370 = pneg %p197
        %s371 = sand.u32 %s187, 1
        %s372 = scalar_lea.sflag [#allocation4], %s371
        %s373 = sand.u32 %s187, 1
        %s374 = smul.addr %s373, 16
        %s375 = scalar_lea.vmem [#allocation14], %s374
        %v377 = vld [vmem:[%s321] sm:$0xff]
        %v378 = vld [vmem:[%s321 + $0x8] sm:$0xff]
        %v379 = vld [vmem:[#allocation5] sm:$0x1]
        %v380 = vld [vmem:[#allocation7] sm:$0x1]
        %vm381 = vcmask 261120
        %v382 = vsel %vm381, %v377, 0.0
        %383 = vadd.xlane.f32.xlu0 %v382
        %v384 = vpop.xlane.xlu0 %383
        %v385 = vsel %vm381, %v378, 0.0
        %386 = vadd.xlane.f32.xlu0 %v385
        %v387 = vpop.xlane.xlu0 %386
        %v388 = vrcp.pop 32.0
        %v389 = vmul.f32 %v384, %v388
        %v390 = vmul.f32 %v387, %v388
        %v391 = vsub.f32 %v377, %v389
        %v392 = vsub.f32 %v378, %v390
        %v393 = vmul.f32 %v391, %v391
        %v394 = vmul.f32 %v392, %v392
        %v395 = vsel %vm381, %v393, 0.0
        %396 = vadd.xlane.f32.xlu0 %v395
        %v397 = vpop.xlane.xlu0 %396
        %v398 = vsel %vm381, %v394, 0.0
        %399 = vadd.xlane.f32.xlu0 %v398
        %v400 = vpop.xlane.xlu0 %399
        %v401 = vmul.f32 %v397, %v388
        %v402 = vmul.f32 %v400, %v388
        %v403 = vadd.f32 %v401, 1e-05
        %v404 = vadd.f32 %v402, 1e-05
        %v405 = vrsqrt.pop %v403
        %v406 = vrsqrt.pop %v404
        %v407 = vmul.f32 %v391, %v405
        %v408 = vmul.f32 %v392, %v406
        %v410 = vlaneseq
        %v411 = vshrl.u32 %v410, 7
        %v412 = vsub.s32 0, %v411
        %v413 = vrot.slane %v379, %v412
        %v415 = vmul.f32 %v407, %v413
        %v416 = vmul.f32 %v408, %v413
        %v418 = vlaneseq
        %v419 = vshrl.u32 %v418, 7
        %v420 = vsub.s32 0, %v419
        %v421 = vrot.slane %v380, %v420
        %v423 = vadd.f32 %v415, %v421
        %v424 = vadd.f32 %v416, %v421
        %v425 = vpack.c.bf16 %v424, %v423
        %v426 = vld [vmem:[#allocation8] sm:$0xf]
        %v427 = vld [vmem:[#allocation8 + $0x4] sm:$0xf]
        %v428 = vld [vmem:[#allocation8 + $0x8] sm:$0xf]
        %v429 = vld [vmem:[#allocation8 + $0xc] sm:$0xf]
        %v430 = vld [vmem:[#allocation10] sm:$0x1]
        %v432 = vlaneseq
        %v433 = vshrl.u32 %v432, 7
        %v434 = vsub.s32 0, %v433
        %v435 = vrot.slane %v430, %v434
        %v441 = vunpack.c.l.b16 %v426
        %v442 = vunpack.c.l.b16 %v427
        %v443 = vunpack.c.l.b16 %v428
        %v444 = vunpack.c.l.b16 %v429
        %v445 = vpack.c.b16 %v442, %v441
        %v446 = vpack.c.b16 %v444, %v443
        %v450 = vsel %vm381, %v425, 0
        %452 = vmatprep.subr.bf16.mxu0 0
        %453 = vmatpush1.bf16.msra.mxu0 %v445
        %454 = vmatprep.subr.bf16.mxu0 0
        %455 = vmatpush1.bf16.msra.mxu0 %v446
        %456 = vmatprep.subr.bf16.mxu0 0
        %457 = vmatpush1.bf16.msra.mxu0 0
        %458 = vmatprep.subr.bf16.mxu0 0
        %459 = vmatpush1.bf16.msra.mxu0 0
        %460 = vmatprep.subr.bf16.mxu0 0
        %461 = vmatpush1.bf16.msra.mxu0 0
        %462 = vmatprep.subr.bf16.mxu0 0
        %463 = vmatpush1.bf16.msra.mxu0 0
        %464 = vmatprep.subr.bf16.mxu0 0
        %465 = vmatpush1.bf16.msra.mxu0 0
        %466 = vmatprep.subr.bf16.mxu0 0
        %467 = vmatpush1.bf16.msra.mxu0 0
        %468 = vmatprep.subr.bf16.mxu0 0
        %469 = vmatpush1.bf16.msra.mxu0 0
        %470 = vmatprep.subr.bf16.mxu0 0
        %471 = vmatpush1.bf16.msra.mxu0 0
        %472 = vmatprep.subr.bf16.mxu0 0
        %473 = vmatpush1.bf16.msra.mxu0 0
        %474 = vmatprep.subr.bf16.mxu0 0
        %475 = vmatpush1.bf16.msra.mxu0 0
        %476 = vmatprep.subr.bf16.mxu0 0
        %477 = vmatpush1.bf16.msra.mxu0 0
        %478 = vmatprep.subr.bf16.mxu0 0
        %479 = vmatpush1.bf16.msra.mxu0 0
        %480 = vmatprep.subr.bf16.mxu0 0
        %481 = vmatpush1.bf16.msra.mxu0 0
        %482 = vmatprep.subr.bf16.mxu0 0
        %483 = vmatpush1.bf16.msra.mxu0 0
        %484 = vmatprep.mubr.bf16.mxu0 0
        %485 = vmatmul.mubr.bf16.gmra.mrb[0].mxu0 %v450
        %v486 = vpop.f32.mrb[0].mxu0
        %v487 = vadd.f32 %v435, %v486
        %v488 = vpop.f32.mrb[0].mxu0
        %v489 = vpop.f32.mrb[0].mxu0
        %v490 = vadd.f32 %v435, %v489
        %v491 = vpop.f32.mrb[0].mxu0
        %492 = vdwg.mxu0
        %v493 = vmul.f32 %v487, 0.35355338
        %v494 = vmul.f32 %v490, 0.35355338
        %497 = vrot.lane.b32.xlu0 %v493, 120
        %v498 = vpop.permute.xlu0 %497
        %499 = vrot.lane.b32.xlu0 %v494, 120
        %v500 = vpop.permute.xlu0 %499
        %503 = vrot.lane.b32.xlu0 %v493, 112
        %v504 = vpop.permute.xlu0 %503
        %505 = vrot.lane.b32.xlu0 %v494, 112
        %v506 = vpop.permute.xlu0 %505
        %509 = vrot.lane.b32.xlu0 %v493, 104
        %v510 = vpop.permute.xlu0 %509
        %511 = vrot.lane.b32.xlu0 %v494, 104
        %v512 = vpop.permute.xlu0 %511
        %v515 = vcombine.low %v493, %v504
        %v516 = vcombine.high %v493, %v504
        %v518 = vunpack.c.l.s4 1983009808
        %v519 = vunpack.c.0.s8 %v518
        %v520 = vlaneseq
        %v521 = vshrl.u32 %v520, 7
        %v522 = vsub.s32 %v519, %v521
        %v523 = vrot.slane %v515, %v522
        %v525 = vunpack.c.l.s4 1983009808
        %v526 = vunpack.c.0.s8 %v525
        %v527 = vlaneseq
        %v528 = vshrl.u32 %v527, 7
        %v529 = vsub.s32 %v526, %v528
        %v530 = vrot.slane %v516, %v529
        %v531 = vcombine.low %v498, %v510
        %v532 = vcombine.high %v498, %v510
        %v534 = vunpack.c.l.s4 1983009808
        %v535 = vunpack.c.0.s8 %v534
        %v536 = vlaneseq
        %v537 = vshrl.u32 %v536, 7
        %v538 = vsub.s32 %v535, %v537
        %v539 = vrot.slane %v531, %v538
        %v541 = vunpack.c.l.s4 1983009808
        %v542 = vunpack.c.0.s8 %v541
        %v543 = vlaneseq
        %v544 = vshrl.u32 %v543, 7
        %v545 = vsub.s32 %v542, %v544
        %v546 = vrot.slane %v532, %v545
        %v547 = vcombine.low %v523, %v539
        %v548 = vcombine.high %v523, %v539
        %v550 = vunpack.c.l.s4 1934713408
        %v551 = vunpack.c.0.s8 %v550
        %v552 = vlaneseq
        %v553 = vshrl.u32 %v552, 7
        %v554 = vsub.s32 %v551, %v553
        %v555 = vrot.slane %v547, %v554
        %v557 = vunpack.c.l.s4 1934713408
        %v558 = vunpack.c.0.s8 %v557
        %v559 = vlaneseq
        %v560 = vshrl.u32 %v559, 7
        %v561 = vsub.s32 %v558, %v560
        %v562 = vrot.slane %v548, %v561
        %v563 = vcombine.low %v530, %v546
        %v564 = vcombine.high %v530, %v546
        %v566 = vunpack.c.l.s4 1934713408
        %v567 = vunpack.c.0.s8 %v566
        %v568 = vlaneseq
        %v569 = vshrl.u32 %v568, 7
        %v570 = vsub.s32 %v567, %v569
        %v571 = vrot.slane %v563, %v570
        %v573 = vunpack.c.l.s4 1934713408
        %v574 = vunpack.c.0.s8 %v573
        %v575 = vlaneseq
        %v576 = vshrl.u32 %v575, 7
        %v577 = vsub.s32 %v574, %v576
        %v578 = vrot.slane %v564, %v577
        %v579 = vcombine.high %v555, 0.0
        %v580 = vcombine.high %v562, 0.0
        %v581 = vcombine.high %v571, 0.0
        %v582 = vcombine.high %v578, 0.0
        %v583 = vcombine.low %v494, %v506
        %v584 = vcombine.high %v494, %v506
        %v586 = vunpack.c.l.s4 1983009808
        %v587 = vunpack.c.0.s8 %v586
        %v588 = vlaneseq
        %v589 = vshrl.u32 %v588, 7
        %v590 = vsub.s32 %v587, %v589
        %v591 = vrot.slane %v583, %v590
        %v593 = vunpack.c.l.s4 1983009808
        %v594 = vunpack.c.0.s8 %v593
        %v595 = vlaneseq
        %v596 = vshrl.u32 %v595, 7
        %v597 = vsub.s32 %v594, %v596
        %v598 = vrot.slane %v584, %v597
        %v599 = vcombine.low %v500, %v512
        %v600 = vcombine.high %v500, %v512
        %v602 = vunpack.c.l.s4 1983009808
        %v603 = vunpack.c.0.s8 %v602
        %v604 = vlaneseq
        %v605 = vshrl.u32 %v604, 7
        %v606 = vsub.s32 %v603, %v605
        %v607 = vrot.slane %v599, %v606
        %v609 = vunpack.c.l.s4 1983009808
        %v610 = vunpack.c.0.s8 %v609
        %v611 = vlaneseq
        %v612 = vshrl.u32 %v611, 7
        %v613 = vsub.s32 %v610, %v612
        %v614 = vrot.slane %v600, %v613
        %v615 = vcombine.low %v591, %v607
        %v616 = vcombine.high %v591, %v607
        %v618 = vunpack.c.l.s4 1934713408
        %v619 = vunpack.c.0.s8 %v618
        %v620 = vlaneseq
        %v621 = vshrl.u32 %v620, 7
        %v622 = vsub.s32 %v619, %v621
        %v623 = vrot.slane %v615, %v622
        %v625 = vunpack.c.l.s4 1934713408
        %v626 = vunpack.c.0.s8 %v625
        %v627 = vlaneseq
        %v628 = vshrl.u32 %v627, 7
        %v629 = vsub.s32 %v626, %v628
        %v630 = vrot.slane %v616, %v629
        %v631 = vcombine.low %v598, %v614
        %v632 = vcombine.high %v598, %v614
        %v634 = vunpack.c.l.s4 1934713408
        %v635 = vunpack.c.0.s8 %v634
        %v636 = vlaneseq
        %v637 = vshrl.u32 %v636, 7
        %v638 = vsub.s32 %v635, %v637
        %v639 = vrot.slane %v631, %v638
        %v641 = vunpack.c.l.s4 1934713408
        %v642 = vunpack.c.0.s8 %v641
        %v643 = vlaneseq
        %v644 = vshrl.u32 %v643, 7
        %v645 = vsub.s32 %v642, %v644
        %v646 = vrot.slane %v632, %v645
        %v647 = vcombine.high %v623, 0.0
        %v648 = vcombine.high %v630, 0.0
        %v649 = vcombine.high %v639, 0.0
        %v650 = vcombine.high %v646, 0.0
        %v651 = vcombine.low %v555, %v562
        %v653 = vunpack.c.l.s4 1983009808
        %v654 = vunpack.c.0.s8 %v653
        %v655 = vlaneseq
        %v656 = vshrl.u32 %v655, 7
        %v657 = vsub.s32 %v654, %v656
        %v658 = vrot.slane %v651, %v657
        %v659 = vcombine.low %v579, %v580
        %v661 = vunpack.c.l.s4 1983009808
        %v662 = vunpack.c.0.s8 %v661
        %v663 = vlaneseq
        %v664 = vshrl.u32 %v663, 7
        %v665 = vsub.s32 %v662, %v664
        %v666 = vrot.slane %v659, %v665
        %v667 = vcombine.low %v571, %v578
        %v669 = vunpack.c.l.s4 1983009808
        %v670 = vunpack.c.0.s8 %v669
        %v671 = vlaneseq
        %v672 = vshrl.u32 %v671, 7
        %v673 = vsub.s32 %v670, %v672
        %v674 = vrot.slane %v667, %v673
        %v675 = vcombine.low %v581, %v582
        %v677 = vunpack.c.l.s4 1983009808
        %v678 = vunpack.c.0.s8 %v677
        %v679 = vlaneseq
        %v680 = vshrl.u32 %v679, 7
        %v681 = vsub.s32 %v678, %v680
        %v682 = vrot.slane %v675, %v681
        %v683 = vcombine.low %v658, %v666
        %v684 = vcombine.high %v658, %v666
        %v686 = vunpack.c.l.s4 1934713408
        %v687 = vunpack.c.0.s8 %v686
        %v688 = vlaneseq
        %v689 = vshrl.u32 %v688, 7
        %v690 = vsub.s32 %v687, %v689
        %v691 = vrot.slane %v683, %v690
        %v693 = vunpack.c.l.s4 1934713408
        %v694 = vunpack.c.0.s8 %v693
        %v695 = vlaneseq
        %v696 = vshrl.u32 %v695, 7
        %v697 = vsub.s32 %v694, %v696
        %v698 = vrot.slane %v684, %v697
        %v699 = vcombine.low %v674, %v682
        %v700 = vcombine.high %v674, %v682
        %v702 = vunpack.c.l.s4 1934713408
        %v703 = vunpack.c.0.s8 %v702
        %v704 = vlaneseq
        %v705 = vshrl.u32 %v704, 7
        %v706 = vsub.s32 %v703, %v705
        %v707 = vrot.slane %v699, %v706
        %v709 = vunpack.c.l.s4 1934713408
        %v710 = vunpack.c.0.s8 %v709
        %v711 = vlaneseq
        %v712 = vshrl.u32 %v711, 7
        %v713 = vsub.s32 %v710, %v712
        %v714 = vrot.slane %v700, %v713
        %v715 = vcombine.low %v691, %v707
        %v716 = vcombine.high %v691, %v707
        %v717 = vcombine.low %v698, %v714
        %v718 = vcombine.high %v698, %v714
        %v719 = vcombine.low %v623, %v630
        %v721 = vunpack.c.l.s4 1983009808
        %v722 = vunpack.c.0.s8 %v721
        %v723 = vlaneseq
        %v724 = vshrl.u32 %v723, 7
        %v725 = vsub.s32 %v722, %v724
        %v726 = vrot.slane %v719, %v725
        %v727 = vcombine.low %v647, %v648
        %v729 = vunpack.c.l.s4 1983009808
        %v730 = vunpack.c.0.s8 %v729
        %v731 = vlaneseq
        %v732 = vshrl.u32 %v731, 7
        %v733 = vsub.s32 %v730, %v732
        %v734 = vrot.slane %v727, %v733
        %v735 = vcombine.low %v639, %v646
        %v737 = vunpack.c.l.s4 1983009808
        %v738 = vunpack.c.0.s8 %v737
        %v739 = vlaneseq
        %v740 = vshrl.u32 %v739, 7
        %v741 = vsub.s32 %v738, %v740
        %v742 = vrot.slane %v735, %v741
        %v743 = vcombine.low %v649, %v650
        %v745 = vunpack.c.l.s4 1983009808
        %v746 = vunpack.c.0.s8 %v745
        %v747 = vlaneseq
        %v748 = vshrl.u32 %v747, 7
        %v749 = vsub.s32 %v746, %v748
        %v750 = vrot.slane %v743, %v749
        %v751 = vcombine.low %v726, %v734
        %v752 = vcombine.high %v726, %v734
        %v754 = vunpack.c.l.s4 1934713408
        %v755 = vunpack.c.0.s8 %v754
        %v756 = vlaneseq
        %v757 = vshrl.u32 %v756, 7
        %v758 = vsub.s32 %v755, %v757
        %v759 = vrot.slane %v751, %v758
        %v761 = vunpack.c.l.s4 1934713408
        %v762 = vunpack.c.0.s8 %v761
        %v763 = vlaneseq
        %v764 = vshrl.u32 %v763, 7
        %v765 = vsub.s32 %v762, %v764
        %v766 = vrot.slane %v752, %v765
        %v767 = vcombine.low %v742, %v750
        %v768 = vcombine.high %v742, %v750
        %v770 = vunpack.c.l.s4 1934713408
        %v771 = vunpack.c.0.s8 %v770
        %v772 = vlaneseq
        %v773 = vshrl.u32 %v772, 7
        %v774 = vsub.s32 %v771, %v773
        %v775 = vrot.slane %v767, %v774
        %v777 = vunpack.c.l.s4 1934713408
        %v778 = vunpack.c.0.s8 %v777
        %v779 = vlaneseq
        %v780 = vshrl.u32 %v779, 7
        %v781 = vsub.s32 %v778, %v780
        %v782 = vrot.slane %v768, %v781
        %v783 = vcombine.low %v759, %v775
        %v784 = vcombine.high %v759, %v775
        %v785 = vcombine.low %v766, %v782
        %v786 = vcombine.high %v766, %v782
        %v787 = vpack.c.bf16 %v783, %v715
        %v788 = vpack.c.bf16 %v784, %v716
        %v789 = vpack.c.bf16 %v785, %v717
        %v790 = vpack.c.bf16 %v786, %v718
        %793 = vrot.lane.b32.xlu0 %v487, 120
        %v794 = vpop.permute.xlu0 %793
        %795 = vrot.lane.b32.xlu0 %v490, 120
        %v796 = vpop.permute.xlu0 %795
        %797 = vrot.lane.b32.xlu0 %v487, 112
        %v798 = vpop.permute.xlu0 %797
        %799 = vrot.lane.b32.xlu0 %v490, 112
        %v800 = vpop.permute.xlu0 %799
        %801 = vrot.lane.b32.xlu0 %v487, 104
        %v802 = vpop.permute.xlu0 %801
        %803 = vrot.lane.b32.xlu0 %v490, 104
        %v804 = vpop.permute.xlu0 %803
        %805 = vrot.lane.b32.xlu0 %v487, 96
        %v806 = vpop.permute.xlu0 %805
        %807 = vrot.lane.b32.xlu0 %v490, 96
        %v808 = vpop.permute.xlu0 %807
        %809 = vrot.lane.b32.xlu0 %v794, 96
        %v810 = vpop.permute.xlu0 %809
        %811 = vrot.lane.b32.xlu0 %v796, 96
        %v812 = vpop.permute.xlu0 %811
        %813 = vrot.lane.b32.xlu0 %v798, 96
        %v814 = vpop.permute.xlu0 %813
        %815 = vrot.lane.b32.xlu0 %v800, 96
        %v816 = vpop.permute.xlu0 %815
        %817 = vrot.lane.b32.xlu0 %v802, 96
        %v818 = vpop.permute.xlu0 %817
        %819 = vrot.lane.b32.xlu0 %v804, 96
        %v820 = vpop.permute.xlu0 %819
        %v829 = vcombine.low %v806, %v814
        %v830 = vcombine.high %v806, %v814
        %v832 = vunpack.c.l.s4 1983009808
        %v833 = vunpack.c.0.s8 %v832
        %v834 = vlaneseq
        %v835 = vshrl.u32 %v834, 7
        %v836 = vsub.s32 %v833, %v835
        %v837 = vrot.slane %v829, %v836
        %v839 = vunpack.c.l.s4 1983009808
        %v840 = vunpack.c.0.s8 %v839
        %v841 = vlaneseq
        %v842 = vshrl.u32 %v841, 7
        %v843 = vsub.s32 %v840, %v842
        %v844 = vrot.slane %v830, %v843
        %v845 = vcombine.low %v810, %v818
        %v846 = vcombine.high %v810, %v818
        %v848 = vunpack.c.l.s4 1983009808
        %v849 = vunpack.c.0.s8 %v848
        %v850 = vlaneseq
        %v851 = vshrl.u32 %v850, 7
        %v852 = vsub.s32 %v849, %v851
        %v853 = vrot.slane %v845, %v852
        %v855 = vunpack.c.l.s4 1983009808
        %v856 = vunpack.c.0.s8 %v855
        %v857 = vlaneseq
        %v858 = vshrl.u32 %v857, 7
        %v859 = vsub.s32 %v856, %v858
        %v860 = vrot.slane %v846, %v859
        %v861 = vcombine.low %v837, %v853
        %v862 = vcombine.high %v837, %v853
        %v864 = vunpack.c.l.s4 1934713408
        %v865 = vunpack.c.0.s8 %v864
        %v866 = vlaneseq
        %v867 = vshrl.u32 %v866, 7
        %v868 = vsub.s32 %v865, %v867
        %v869 = vrot.slane %v861, %v868
        %v871 = vunpack.c.l.s4 1934713408
        %v872 = vunpack.c.0.s8 %v871
        %v873 = vlaneseq
        %v874 = vshrl.u32 %v873, 7
        %v875 = vsub.s32 %v872, %v874
        %v876 = vrot.slane %v862, %v875
        %v877 = vcombine.low %v844, %v860
        %v878 = vcombine.high %v844, %v860
        %v880 = vunpack.c.l.s4 1934713408
        %v881 = vunpack.c.0.s8 %v880
        %v882 = vlaneseq
        %v883 = vshrl.u32 %v882, 7
        %v884 = vsub.s32 %v881, %v883
        %v885 = vrot.slane %v877, %v884
        %v887 = vunpack.c.l.s4 1934713408
        %v888 = vunpack.c.0.s8 %v887
        %v889 = vlaneseq
        %v890 = vshrl.u32 %v889, 7
        %v891 = vsub.s32 %v888, %v890
        %v892 = vrot.slane %v878, %v891
        %v893 = vcombine.high %v869, 0.0
        %v894 = vcombine.high %v876, 0.0
        %v895 = vcombine.high %v885, 0.0
        %v896 = vcombine.high %v892, 0.0
        %v897 = vcombine.low %v808, %v816
        %v898 = vcombine.high %v808, %v816
        %v900 = vunpack.c.l.s4 1983009808
        %v901 = vunpack.c.0.s8 %v900
        %v902 = vlaneseq
        %v903 = vshrl.u32 %v902, 7
        %v904 = vsub.s32 %v901, %v903
        %v905 = vrot.slane %v897, %v904
        %v907 = vunpack.c.l.s4 1983009808
        %v908 = vunpack.c.0.s8 %v907
        %v909 = vlaneseq
        %v910 = vshrl.u32 %v909, 7
        %v911 = vsub.s32 %v908, %v910
        %v912 = vrot.slane %v898, %v911
        %v913 = vcombine.low %v812, %v820
        %v914 = vcombine.high %v812, %v820
        %v916 = vunpack.c.l.s4 1983009808
        %v917 = vunpack.c.0.s8 %v916
        %v918 = vlaneseq
        %v919 = vshrl.u32 %v918, 7
        %v920 = vsub.s32 %v917, %v919
        %v921 = vrot.slane %v913, %v920
        %v923 = vunpack.c.l.s4 1983009808
        %v924 = vunpack.c.0.s8 %v923
        %v925 = vlaneseq
        %v926 = vshrl.u32 %v925, 7
        %v927 = vsub.s32 %v924, %v926
        %v928 = vrot.slane %v914, %v927
        %v929 = vcombine.low %v905, %v921
        %v930 = vcombine.high %v905, %v921
        %v932 = vunpack.c.l.s4 1934713408
        %v933 = vunpack.c.0.s8 %v932
        %v934 = vlaneseq
        %v935 = vshrl.u32 %v934, 7
        %v936 = vsub.s32 %v933, %v935
        %v937 = vrot.slane %v929, %v936
        %v939 = vunpack.c.l.s4 1934713408
        %v940 = vunpack.c.0.s8 %v939
        %v941 = vlaneseq
        %v942 = vshrl.u32 %v941, 7
        %v943 = vsub.s32 %v940, %v942
        %v944 = vrot.slane %v930, %v943
        %v945 = vcombine.low %v912, %v928
        %v946 = vcombine.high %v912, %v928
        %v948 = vunpack.c.l.s4 1934713408
        %v949 = vunpack.c.0.s8 %v948
        %v950 = vlaneseq
        %v951 = vshrl.u32 %v950, 7
        %v952 = vsub.s32 %v949, %v951
        %v953 = vrot.slane %v945, %v952
        %v955 = vunpack.c.l.s4 1934713408
        %v956 = vunpack.c.0.s8 %v955
        %v957 = vlaneseq
        %v958 = vshrl.u32 %v957, 7
        %v959 = vsub.s32 %v956, %v958
        %v960 = vrot.slane %v946, %v959
        %v961 = vcombine.high %v937, 0.0
        %v962 = vcombine.high %v944, 0.0
        %v963 = vcombine.high %v953, 0.0
        %v964 = vcombine.high %v960, 0.0
        %v965 = vcombine.low %v869, %v876
        %v967 = vunpack.c.l.s4 1983009808
        %v968 = vunpack.c.0.s8 %v967
        %v969 = vlaneseq
        %v970 = vshrl.u32 %v969, 7
        %v971 = vsub.s32 %v968, %v970
        %v972 = vrot.slane %v965, %v971
        %v973 = vcombine.low %v893, %v894
        %v975 = vunpack.c.l.s4 1983009808
        %v976 = vunpack.c.0.s8 %v975
        %v977 = vlaneseq
        %v978 = vshrl.u32 %v977, 7
        %v979 = vsub.s32 %v976, %v978
        %v980 = vrot.slane %v973, %v979
        %v981 = vcombine.low %v885, %v892
        %v983 = vunpack.c.l.s4 1983009808
        %v984 = vunpack.c.0.s8 %v983
        %v985 = vlaneseq
        %v986 = vshrl.u32 %v985, 7
        %v987 = vsub.s32 %v984, %v986
        %v988 = vrot.slane %v981, %v987
        %v989 = vcombine.low %v895, %v896
        %v991 = vunpack.c.l.s4 1983009808
        %v992 = vunpack.c.0.s8 %v991
        %v993 = vlaneseq
        %v994 = vshrl.u32 %v993, 7
        %v995 = vsub.s32 %v992, %v994
        %v996 = vrot.slane %v989, %v995
        %v997 = vcombine.low %v972, %v980
        %v998 = vcombine.high %v972, %v980
        %v1000 = vunpack.c.l.s4 1934713408
        %v1001 = vunpack.c.0.s8 %v1000
        %v1002 = vlaneseq
        %v1003 = vshrl.u32 %v1002, 7
        %v1004 = vsub.s32 %v1001, %v1003
        %v1005 = vrot.slane %v997, %v1004
        %v1007 = vunpack.c.l.s4 1934713408
        %v1008 = vunpack.c.0.s8 %v1007
        %v1009 = vlaneseq
        %v1010 = vshrl.u32 %v1009, 7
        %v1011 = vsub.s32 %v1008, %v1010
        %v1012 = vrot.slane %v998, %v1011
        %v1013 = vcombine.low %v988, %v996
        %v1014 = vcombine.high %v988, %v996
        %v1016 = vunpack.c.l.s4 1934713408
        %v1017 = vunpack.c.0.s8 %v1016
        %v1018 = vlaneseq
        %v1019 = vshrl.u32 %v1018, 7
        %v1020 = vsub.s32 %v1017, %v1019
        %v1021 = vrot.slane %v1013, %v1020
        %v1023 = vunpack.c.l.s4 1934713408
        %v1024 = vunpack.c.0.s8 %v1023
        %v1025 = vlaneseq
        %v1026 = vshrl.u32 %v1025, 7
        %v1027 = vsub.s32 %v1024, %v1026
        %v1028 = vrot.slane %v1014, %v1027
        %v1029 = vcombine.low %v1005, %v1021
        %v1030 = vcombine.high %v1005, %v1021
        %v1031 = vcombine.low %v1012, %v1028
        %v1032 = vcombine.high %v1012, %v1028
        %v1033 = vcombine.low %v937, %v944
        %v1035 = vunpack.c.l.s4 1983009808
        %v1036 = vunpack.c.0.s8 %v1035
        %v1037 = vlaneseq
        %v1038 = vshrl.u32 %v1037, 7
        %v1039 = vsub.s32 %v1036, %v1038
        %v1040 = vrot.slane %v1033, %v1039
        %v1041 = vcombine.low %v961, %v962
        %v1043 = vunpack.c.l.s4 1983009808
        %v1044 = vunpack.c.0.s8 %v1043
        %v1045 = vlaneseq
        %v1046 = vshrl.u32 %v1045, 7
        %v1047 = vsub.s32 %v1044, %v1046
        %v1048 = vrot.slane %v1041, %v1047
        %v1049 = vcombine.low %v953, %v960
        %v1051 = vunpack.c.l.s4 1983009808
        %v1052 = vunpack.c.0.s8 %v1051
        %v1053 = vlaneseq
        %v1054 = vshrl.u32 %v1053, 7
        %v1055 = vsub.s32 %v1052, %v1054
        %v1056 = vrot.slane %v1049, %v1055
        %v1057 = vcombine.low %v963, %v964
        %v1059 = vunpack.c.l.s4 1983009808
        %v1060 = vunpack.c.0.s8 %v1059
        %v1061 = vlaneseq
        %v1062 = vshrl.u32 %v1061, 7
        %v1063 = vsub.s32 %v1060, %v1062
        %v1064 = vrot.slane %v1057, %v1063
        %v1065 = vcombine.low %v1040, %v1048
        %v1066 = vcombine.high %v1040, %v1048
        %v1068 = vunpack.c.l.s4 1934713408
        %v1069 = vunpack.c.0.s8 %v1068
        %v1070 = vlaneseq
        %v1071 = vshrl.u32 %v1070, 7
        %v1072 = vsub.s32 %v1069, %v1071
        %v1073 = vrot.slane %v1065, %v1072
        %v1075 = vunpack.c.l.s4 1934713408
        %v1076 = vunpack.c.0.s8 %v1075
        %v1077 = vlaneseq
        %v1078 = vshrl.u32 %v1077, 7
        %v1079 = vsub.s32 %v1076, %v1078
        %v1080 = vrot.slane %v1066, %v1079
        %v1081 = vcombine.low %v1056, %v1064
        %v1082 = vcombine.high %v1056, %v1064
        %v1084 = vunpack.c.l.s4 1934713408
        %v1085 = vunpack.c.0.s8 %v1084
        %v1086 = vlaneseq
        %v1087 = vshrl.u32 %v1086, 7
        %v1088 = vsub.s32 %v1085, %v1087
        %v1089 = vrot.slane %v1081, %v1088
        %v1091 = vunpack.c.l.s4 1934713408
        %v1092 = vunpack.c.0.s8 %v1091
        %v1093 = vlaneseq
        %v1094 = vshrl.u32 %v1093, 7
        %v1095 = vsub.s32 %v1092, %v1094
        %v1096 = vrot.slane %v1082, %v1095
        %v1097 = vcombine.low %v1073, %v1089
        %v1098 = vcombine.high %v1073, %v1089
        %v1099 = vcombine.low %v1080, %v1096
        %v1100 = vcombine.high %v1080, %v1096
        %1101 = vrot.lane.b32.xlu0 %v487, 64
        %v1102 = vpop.permute.xlu0 %1101
        %1103 = vrot.lane.b32.xlu0 %v490, 64
        %v1104 = vpop.permute.xlu0 %1103
        %1105 = vrot.lane.b32.xlu0 %v794, 64
        %v1106 = vpop.permute.xlu0 %1105
        %1107 = vrot.lane.b32.xlu0 %v796, 64
        %v1108 = vpop.permute.xlu0 %1107
        %1109 = vrot.lane.b32.xlu0 %v798, 64
        %v1110 = vpop.permute.xlu0 %1109
        %1111 = vrot.lane.b32.xlu0 %v800, 64
        %v1112 = vpop.permute.xlu0 %1111
        %1113 = vrot.lane.b32.xlu0 %v802, 64
        %v1114 = vpop.permute.xlu0 %1113
        %1115 = vrot.lane.b32.xlu0 %v804, 64
        %v1116 = vpop.permute.xlu0 %1115
        %v1125 = vcombine.low %v1102, %v1110
        %v1126 = vcombine.high %v1102, %v1110
        %v1128 = vunpack.c.l.s4 1983009808
        %v1129 = vunpack.c.0.s8 %v1128
        %v1130 = vlaneseq
        %v1131 = vshrl.u32 %v1130, 7
        %v1132 = vsub.s32 %v1129, %v1131
        %v1133 = vrot.slane %v1125, %v1132
        %v1135 = vunpack.c.l.s4 1983009808
        %v1136 = vunpack.c.0.s8 %v1135
        %v1137 = vlaneseq
        %v1138 = vshrl.u32 %v1137, 7
        %v1139 = vsub.s32 %v1136, %v1138
        %v1140 = vrot.slane %v1126, %v1139
        %v1141 = vcombine.low %v1106, %v1114
        %v1142 = vcombine.high %v1106, %v1114
        %v1144 = vunpack.c.l.s4 1983009808
        %v1145 = vunpack.c.0.s8 %v1144
        %v1146 = vlaneseq
        %v1147 = vshrl.u32 %v1146, 7
        %v1148 = vsub.s32 %v1145, %v1147
        %v1149 = vrot.slane %v1141, %v1148
        %v1151 = vunpack.c.l.s4 1983009808
        %v1152 = vunpack.c.0.s8 %v1151
        %v1153 = vlaneseq
        %v1154 = vshrl.u32 %v1153, 7
        %v1155 = vsub.s32 %v1152, %v1154
        %v1156 = vrot.slane %v1142, %v1155
        %v1157 = vcombine.low %v1133, %v1149
        %v1158 = vcombine.high %v1133, %v1149
        %v1160 = vunpack.c.l.s4 1934713408
        %v1161 = vunpack.c.0.s8 %v1160
        %v1162 = vlaneseq
        %v1163 = vshrl.u32 %v1162, 7
        %v1164 = vsub.s32 %v1161, %v1163
        %v1165 = vrot.slane %v1157, %v1164
        %v1167 = vunpack.c.l.s4 1934713408
        %v1168 = vunpack.c.0.s8 %v1167
        %v1169 = vlaneseq
        %v1170 = vshrl.u32 %v1169, 7
        %v1171 = vsub.s32 %v1168, %v1170
        %v1172 = vrot.slane %v1158, %v1171
        %v1173 = vcombine.low %v1140, %v1156
        %v1174 = vcombine.high %v1140, %v1156
        %v1176 = vunpack.c.l.s4 1934713408
        %v1177 = vunpack.c.0.s8 %v1176
        %v1178 = vlaneseq
        %v1179 = vshrl.u32 %v1178, 7
        %v1180 = vsub.s32 %v1177, %v1179
        %v1181 = vrot.slane %v1173, %v1180
        %v1183 = vunpack.c.l.s4 1934713408
        %v1184 = vunpack.c.0.s8 %v1183
        %v1185 = vlaneseq
        %v1186 = vshrl.u32 %v1185, 7
        %v1187 = vsub.s32 %v1184, %v1186
        %v1188 = vrot.slane %v1174, %v1187
        %v1189 = vcombine.high %v1165, 0.0
        %v1190 = vcombine.high %v1172, 0.0
        %v1191 = vcombine.high %v1181, 0.0
        %v1192 = vcombine.high %v1188, 0.0
        %v1193 = vcombine.low %v1104, %v1112
        %v1194 = vcombine.high %v1104, %v1112
        %v1196 = vunpack.c.l.s4 1983009808
        %v1197 = vunpack.c.0.s8 %v1196
        %v1198 = vlaneseq
        %v1199 = vshrl.u32 %v1198, 7
        %v1200 = vsub.s32 %v1197, %v1199
        %v1201 = vrot.slane %v1193, %v1200
        %v1203 = vunpack.c.l.s4 1983009808
        %v1204 = vunpack.c.0.s8 %v1203
        %v1205 = vlaneseq
        %v1206 = vshrl.u32 %v1205, 7
        %v1207 = vsub.s32 %v1204, %v1206
        %v1208 = vrot.slane %v1194, %v1207
        %v1209 = vcombine.low %v1108, %v1116
        %v1210 = vcombine.high %v1108, %v1116
        %v1212 = vunpack.c.l.s4 1983009808
        %v1213 = vunpack.c.0.s8 %v1212
        %v1214 = vlaneseq
        %v1215 = vshrl.u32 %v1214, 7
        %v1216 = vsub.s32 %v1213, %v1215
        %v1217 = vrot.slane %v1209, %v1216
        %v1219 = vunpack.c.l.s4 1983009808
        %v1220 = vunpack.c.0.s8 %v1219
        %v1221 = vlaneseq
        %v1222 = vshrl.u32 %v1221, 7
        %v1223 = vsub.s32 %v1220, %v1222
        %v1224 = vrot.slane %v1210, %v1223
        %v1225 = vcombine.low %v1201, %v1217
        %v1226 = vcombine.high %v1201, %v1217
        %v1228 = vunpack.c.l.s4 1934713408
        %v1229 = vunpack.c.0.s8 %v1228
        %v1230 = vlaneseq
        %v1231 = vshrl.u32 %v1230, 7
        %v1232 = vsub.s32 %v1229, %v1231
        %v1233 = vrot.slane %v1225, %v1232
        %v1235 = vunpack.c.l.s4 1934713408
        %v1236 = vunpack.c.0.s8 %v1235
        %v1237 = vlaneseq
        %v1238 = vshrl.u32 %v1237, 7
        %v1239 = vsub.s32 %v1236, %v1238
        %v1240 = vrot.slane %v1226, %v1239
        %v1241 = vcombine.low %v1208, %v1224
        %v1242 = vcombine.high %v1208, %v1224
        %v1244 = vunpack.c.l.s4 1934713408
        %v1245 = vunpack.c.0.s8 %v1244
        %v1246 = vlaneseq
        %v1247 = vshrl.u32 %v1246, 7
        %v1248 = vsub.s32 %v1245, %v1247
        %v1249 = vrot.slane %v1241, %v1248
        %v1251 = vunpack.c.l.s4 1934713408
        %v1252 = vunpack.c.0.s8 %v1251
        %v1253 = vlaneseq
        %v1254 = vshrl.u32 %v1253, 7
        %v1255 = vsub.s32 %v1252, %v1254
        %v1256 = vrot.slane %v1242, %v1255
        %v1257 = vcombine.high %v1233, 0.0
        %v1258 = vcombine.high %v1240, 0.0
        %v1259 = vcombine.high %v1249, 0.0
        %v1260 = vcombine.high %v1256, 0.0
        %v1261 = vcombine.low %v1165, %v1172
        %v1263 = vunpack.c.l.s4 1983009808
        %v1264 = vunpack.c.0.s8 %v1263
        %v1265 = vlaneseq
        %v1266 = vshrl.u32 %v1265, 7
        %v1267 = vsub.s32 %v1264, %v1266
        %v1268 = vrot.slane %v1261, %v1267
        %v1269 = vcombine.low %v1189, %v1190
        %v1271 = vunpack.c.l.s4 1983009808
        %v1272 = vunpack.c.0.s8 %v1271
        %v1273 = vlaneseq
        %v1274 = vshrl.u32 %v1273, 7
        %v1275 = vsub.s32 %v1272, %v1274
        %v1276 = vrot.slane %v1269, %v1275
        %v1277 = vcombine.low %v1181, %v1188
        %v1279 = vunpack.c.l.s4 1983009808
        %v1280 = vunpack.c.0.s8 %v1279
        %v1281 = vlaneseq
        %v1282 = vshrl.u32 %v1281, 7
        %v1283 = vsub.s32 %v1280, %v1282
        %v1284 = vrot.slane %v1277, %v1283
        %v1285 = vcombine.low %v1191, %v1192
        %v1287 = vunpack.c.l.s4 1983009808
        %v1288 = vunpack.c.0.s8 %v1287
        %v1289 = vlaneseq
        %v1290 = vshrl.u32 %v1289, 7
        %v1291 = vsub.s32 %v1288, %v1290
        %v1292 = vrot.slane %v1285, %v1291
        %v1293 = vcombine.low %v1268, %v1276
        %v1294 = vcombine.high %v1268, %v1276
        %v1296 = vunpack.c.l.s4 1934713408
        %v1297 = vunpack.c.0.s8 %v1296
        %v1298 = vlaneseq
        %v1299 = vshrl.u32 %v1298, 7
        %v1300 = vsub.s32 %v1297, %v1299
        %v1301 = vrot.slane %v1293, %v1300
        %v1303 = vunpack.c.l.s4 1934713408
        %v1304 = vunpack.c.0.s8 %v1303
        %v1305 = vlaneseq
        %v1306 = vshrl.u32 %v1305, 7
        %v1307 = vsub.s32 %v1304, %v1306
        %v1308 = vrot.slane %v1294, %v1307
        %v1309 = vcombine.low %v1284, %v1292
        %v1310 = vcombine.high %v1284, %v1292
        %v1312 = vunpack.c.l.s4 1934713408
        %v1313 = vunpack.c.0.s8 %v1312
        %v1314 = vlaneseq
        %v1315 = vshrl.u32 %v1314, 7
        %v1316 = vsub.s32 %v1313, %v1315
        %v1317 = vrot.slane %v1309, %v1316
        %v1319 = vunpack.c.l.s4 1934713408
        %v1320 = vunpack.c.0.s8 %v1319
        %v1321 = vlaneseq
        %v1322 = vshrl.u32 %v1321, 7
        %v1323 = vsub.s32 %v1320, %v1322
        %v1324 = vrot.slane %v1310, %v1323
        %v1325 = vcombine.low %v1301, %v1317
        %v1326 = vcombine.high %v1301, %v1317
        %v1327 = vcombine.low %v1308, %v1324
        %v1328 = vcombine.high %v1308, %v1324
        %v1329 = vcombine.low %v1233, %v1240
        %v1331 = vunpack.c.l.s4 1983009808
        %v1332 = vunpack.c.0.s8 %v1331
        %v1333 = vlaneseq
        %v1334 = vshrl.u32 %v1333, 7
        %v1335 = vsub.s32 %v1332, %v1334
        %v1336 = vrot.slane %v1329, %v1335
        %v1337 = vcombine.low %v1257, %v1258
        %v1339 = vunpack.c.l.s4 1983009808
        %v1340 = vunpack.c.0.s8 %v1339
        %v1341 = vlaneseq
        %v1342 = vshrl.u32 %v1341, 7
        %v1343 = vsub.s32 %v1340, %v1342
        %v1344 = vrot.slane %v1337, %v1343
        %v1345 = vcombine.low %v1249, %v1256
        %v1347 = vunpack.c.l.s4 1983009808
        %v1348 = vunpack.c.0.s8 %v1347
        %v1349 = vlaneseq
        %v1350 = vshrl.u32 %v1349, 7
        %v1351 = vsub.s32 %v1348, %v1350
        %v1352 = vrot.slane %v1345, %v1351
        %v1353 = vcombine.low %v1259, %v1260
        %v1355 = vunpack.c.l.s4 1983009808
        %v1356 = vunpack.c.0.s8 %v1355
        %v1357 = vlaneseq
        %v1358 = vshrl.u32 %v1357, 7
        %v1359 = vsub.s32 %v1356, %v1358
        %v1360 = vrot.slane %v1353, %v1359
        %v1361 = vcombine.low %v1336, %v1344
        %v1362 = vcombine.high %v1336, %v1344
        %v1364 = vunpack.c.l.s4 1934713408
        %v1365 = vunpack.c.0.s8 %v1364
        %v1366 = vlaneseq
        %v1367 = vshrl.u32 %v1366, 7
        %v1368 = vsub.s32 %v1365, %v1367
        %v1369 = vrot.slane %v1361, %v1368
        %v1371 = vunpack.c.l.s4 1934713408
        %v1372 = vunpack.c.0.s8 %v1371
        %v1373 = vlaneseq
        %v1374 = vshrl.u32 %v1373, 7
        %v1375 = vsub.s32 %v1372, %v1374
        %v1376 = vrot.slane %v1362, %v1375
        %v1377 = vcombine.low %v1352, %v1360
        %v1378 = vcombine.high %v1352, %v1360
        %v1380 = vunpack.c.l.s4 1934713408
        %v1381 = vunpack.c.0.s8 %v1380
        %v1382 = vlaneseq
        %v1383 = vshrl.u32 %v1382, 7
        %v1384 = vsub.s32 %v1381, %v1383
        %v1385 = vrot.slane %v1377, %v1384
        %v1387 = vunpack.c.l.s4 1934713408
        %v1388 = vunpack.c.0.s8 %v1387
        %v1389 = vlaneseq
        %v1390 = vshrl.u32 %v1389, 7
        %v1391 = vsub.s32 %v1388, %v1390
        %v1392 = vrot.slane %v1378, %v1391
        %v1393 = vcombine.low %v1369, %v1385
        %v1394 = vcombine.high %v1369, %v1385
        %v1395 = vcombine.low %v1376, %v1392
        %v1396 = vcombine.high %v1376, %v1392
        %v1397 = vpack.c.bf16 %v1029, %v1029
        %v1398 = vpack.c.bf16 %v1030, %v1030
        %v1399 = vpack.c.bf16 %v1031, %v1031
        %v1400 = vpack.c.bf16 %v1032, %v1032
        %v1401 = vpack.c.bf16 %v1325, %v1325
        %v1402 = vpack.c.bf16 %v1326, %v1326
        %v1403 = vpack.c.bf16 %v1327, %v1327
        %v1404 = vpack.c.bf16 %v1328, %v1328
        %v1405 = vlaneseq
        %v1406 = vshrl.u32 %v1405, 7
        %v1407 = vadd.s32 %v1406, 8
        %v1408 = vlaneseq
        %v1409 = vand.u32 %v1408, 127
        %vm1410 = vcmp.ge.s32.totalorder %v1406, %v1409
        %vm1411 = vcmp.ge.s32.totalorder %v1407, %v1409
        %v1412 = vsel %vm1410, 0.0, -1e+30
        %v1413 = vsel %vm1411, 0.0, -1e+30
        %vm1414 = vcmask 64512
        %v1416 = vsel %vm1414, %v787, 0
        %v1419 = vsel %vm1414, %v1397, 0
        %1421 = vmatprep.subr.bf16.mxu0 0
        %1422 = vmatpush1.bf16.xpose.msra.mxu0 %v1419
        %1423 = vmatprep.subr.bf16.mxu0 0
        %1424 = vmatpush1.bf16.xpose.msra.mxu0 0
        %1425 = vmatprep.subr.bf16.mxu0 0
        %1426 = vmatpush1.bf16.xpose.msra.mxu0 0
        %1427 = vmatprep.subr.bf16.mxu0 0
        %1428 = vmatpush1.bf16.xpose.msra.mxu0 0
        %1429 = vmatprep.subr.bf16.mxu0 0
        %1430 = vmatpush1.bf16.xpose.msra.mxu0 0
        %1431 = vmatprep.subr.bf16.mxu0 0
        %1432 = vmatpush1.bf16.xpose.msra.mxu0 0
        %1433 = vmatprep.subr.bf16.mxu0 0
        %1434 = vmatpush1.bf16.xpose.msra.mxu0 0
        %1435 = vmatprep.subr.bf16.mxu0 0
        %1436 = vmatpush1.bf16.xpose.msra.mxu0 0
        %1437 = vmatprep.subr.bf16.mxu0 0
        %1438 = vmatpush1.bf16.xpose.msra.mxu0 0
        %1439 = vmatprep.subr.bf16.mxu0 0
        %1440 = vmatpush1.bf16.xpose.msra.mxu0 0
        %1441 = vmatprep.subr.bf16.mxu0 0
        %1442 = vmatpush1.bf16.xpose.msra.mxu0 0
        %1443 = vmatprep.subr.bf16.mxu0 0
        %1444 = vmatpush1.bf16.xpose.msra.mxu0 0
        %1445 = vmatprep.subr.bf16.mxu0 0
        %1446 = vmatpush1.bf16.xpose.msra.mxu0 0
        %1447 = vmatprep.subr.bf16.mxu0 0
        %1448 = vmatpush1.bf16.xpose.msra.mxu0 0
        %1449 = vmatprep.subr.bf16.mxu0 0
        %1450 = vmatpush1.bf16.xpose.msra.mxu0 0
        %1451 = vmatprep.subr.bf16.mxu0 0
        %1452 = vmatpush1.bf16.xpose.msra.mxu0 0
        %1453 = vmatprep.mubr.bf16.mxu0 0
        %1454 = vmatmul.mubr.bf16.gmra.mrb[0].mxu0 %v1416
        %v1455 = vpop.f32.mrb[0].mxu0
        %v1456 = vadd.f32 %v1412, %v1455
        %v1457 = vpop.f32.mrb[0].mxu0
        %v1458 = vpop.f32.mrb[0].mxu0
        %v1459 = vadd.f32 %v1413, %v1458
        %v1460 = vpop.f32.mrb[0].mxu0
        %1461 = vdwg.mxu0
        %v1463 = vsel %vm1414, %v788, 0
        %v1466 = vsel %vm1414, %v1398, 0
        %1468 = vmatprep.subr.bf16.mxu0 0
        %1469 = vmatpush1.bf16.xpose.msra.mxu0 %v1466
        %1470 = vmatprep.subr.bf16.mxu0 0
        %1471 = vmatpush1.bf16.xpose.msra.mxu0 0
        %1472 = vmatprep.subr.bf16.mxu0 0
        %1473 = vmatpush1.bf16.xpose.msra.mxu0 0
        %1474 = vmatprep.subr.bf16.mxu0 0
        %1475 = vmatpush1.bf16.xpose.msra.mxu0 0
        %1476 = vmatprep.subr.bf16.mxu0 0
        %1477 = vmatpush1.bf16.xpose.msra.mxu0 0
        %1478 = vmatprep.subr.bf16.mxu0 0
        %1479 = vmatpush1.bf16.xpose.msra.mxu0 0
        %1480 = vmatprep.subr.bf16.mxu0 0
        %1481 = vmatpush1.bf16.xpose.msra.mxu0 0
        %1482 = vmatprep.subr.bf16.mxu0 0
        %1483 = vmatpush1.bf16.xpose.msra.mxu0 0
        %1484 = vmatprep.subr.bf16.mxu0 0
        %1485 = vmatpush1.bf16.xpose.msra.mxu0 0
        %1486 = vmatprep.subr.bf16.mxu0 0
        %1487 = vmatpush1.bf16.xpose.msra.mxu0 0
        %1488 = vmatprep.subr.bf16.mxu0 0
        %1489 = vmatpush1.bf16.xpose.msra.mxu0 0
        %1490 = vmatprep.subr.bf16.mxu0 0
        %1491 = vmatpush1.bf16.xpose.msra.mxu0 0
        %1492 = vmatprep.subr.bf16.mxu0 0
        %1493 = vmatpush1.bf16.xpose.msra.mxu0 0
        %1494 = vmatprep.subr.bf16.mxu0 0
        %1495 = vmatpush1.bf16.xpose.msra.mxu0 0
        %1496 = vmatprep.subr.bf16.mxu0 0
        %1497 = vmatpush1.bf16.xpose.msra.mxu0 0
        %1498 = vmatprep.subr.bf16.mxu0 0
        %1499 = vmatpush1.bf16.xpose.msra.mxu0 0
        %1500 = vmatprep.mubr.bf16.mxu0 0
        %1501 = vmatmul.mubr.bf16.gmra.mrb[0].mxu0 %v1463
        %v1502 = vpop.f32.mrb[0].mxu0
        %v1503 = vadd.f32 %v1412, %v1502
        %v1504 = vpop.f32.mrb[0].mxu0
        %v1505 = vpop.f32.mrb[0].mxu0
        %v1506 = vadd.f32 %v1413, %v1505
        %v1507 = vpop.f32.mrb[0].mxu0
        %1508 = vdwg.mxu0
        %v1510 = vsel %vm1414, %v789, 0
        %v1513 = vsel %vm1414, %v1399, 0
        %1515 = vmatprep.subr.bf16.mxu0 0
        %1516 = vmatpush1.bf16.xpose.msra.mxu0 %v1513
        %1517 = vmatprep.subr.bf16.mxu0 0
        %1518 = vmatpush1.bf16.xpose.msra.mxu0 0
        %1519 = vmatprep.subr.bf16.mxu0 0
        %1520 = vmatpush1.bf16.xpose.msra.mxu0 0
        %1521 = vmatprep.subr.bf16.mxu0 0
        %1522 = vmatpush1.bf16.xpose.msra.mxu0 0
        %1523 = vmatprep.subr.bf16.mxu0 0
        %1524 = vmatpush1.bf16.xpose.msra.mxu0 0
        %1525 = vmatprep.subr.bf16.mxu0 0
        %1526 = vmatpush1.bf16.xpose.msra.mxu0 0
        %1527 = vmatprep.subr.bf16.mxu0 0
        %1528 = vmatpush1.bf16.xpose.msra.mxu0 0
        %1529 = vmatprep.subr.bf16.mxu0 0
        %1530 = vmatpush1.bf16.xpose.msra.mxu0 0
        %1531 = vmatprep.subr.bf16.mxu0 0
        %1532 = vmatpush1.bf16.xpose.msra.mxu0 0
        %1533 = vmatprep.subr.bf16.mxu0 0
        %1534 = vmatpush1.bf16.xpose.msra.mxu0 0
        %1535 = vmatprep.subr.bf16.mxu0 0
        %1536 = vmatpush1.bf16.xpose.msra.mxu0 0
        %1537 = vmatprep.subr.bf16.mxu0 0
        %1538 = vmatpush1.bf16.xpose.msra.mxu0 0
        %1539 = vmatprep.subr.bf16.mxu0 0
        %1540 = vmatpush1.bf16.xpose.msra.mxu0 0
        %1541 = vmatprep.subr.bf16.mxu0 0
        %1542 = vmatpush1.bf16.xpose.msra.mxu0 0
        %1543 = vmatprep.subr.bf16.mxu0 0
        %1544 = vmatpush1.bf16.xpose.msra.mxu0 0
        %1545 = vmatprep.subr.bf16.mxu0 0
        %1546 = vmatpush1.bf16.xpose.msra.mxu0 0
        %1547 = vmatprep.mubr.bf16.mxu0 0
        %1548 = vmatmul.mubr.bf16.gmra.mrb[0].mxu0 %v1510
        %v1549 = vpop.f32.mrb[0].mxu0
        %v1550 = vadd.f32 %v1412, %v1549
        %v1551 = vpop.f32.mrb[0].mxu0
        %v1552 = vpop.f32.mrb[0].mxu0
        %v1553 = vadd.f32 %v1413, %v1552
        %v1554 = vpop.f32.mrb[0].mxu0
        %1555 = vdwg.mxu0
        %v1557 = vsel %vm1414, %v790, 0
        %v1560 = vsel %vm1414, %v1400, 0
        %1562 = vmatprep.subr.bf16.mxu0 0
        %1563 = vmatpush1.bf16.xpose.msra.mxu0 %v1560
        %1564 = vmatprep.subr.bf16.mxu0 0
        %1565 = vmatpush1.bf16.xpose.msra.mxu0 0
        %1566 = vmatprep.subr.bf16.mxu0 0
        %1567 = vmatpush1.bf16.xpose.msra.mxu0 0
        %1568 = vmatprep.subr.bf16.mxu0 0
        %1569 = vmatpush1.bf16.xpose.msra.mxu0 0
        %1570 = vmatprep.subr.bf16.mxu0 0
        %1571 = vmatpush1.bf16.xpose.msra.mxu0 0
        %1572 = vmatprep.subr.bf16.mxu0 0
        %1573 = vmatpush1.bf16.xpose.msra.mxu0 0
        %1574 = vmatprep.subr.bf16.mxu0 0
        %1575 = vmatpush1.bf16.xpose.msra.mxu0 0
        %1576 = vmatprep.subr.bf16.mxu0 0
        %1577 = vmatpush1.bf16.xpose.msra.mxu0 0
        %1578 = vmatprep.subr.bf16.mxu0 0
        %1579 = vmatpush1.bf16.xpose.msra.mxu0 0
        %1580 = vmatprep.subr.bf16.mxu0 0
        %1581 = vmatpush1.bf16.xpose.msra.mxu0 0
        %1582 = vmatprep.subr.bf16.mxu0 0
        %1583 = vmatpush1.bf16.xpose.msra.mxu0 0
        %1584 = vmatprep.subr.bf16.mxu0 0
        %1585 = vmatpush1.bf16.xpose.msra.mxu0 0
        %1586 = vmatprep.subr.bf16.mxu0 0
        %1587 = vmatpush1.bf16.xpose.msra.mxu0 0
        %1588 = vmatprep.subr.bf16.mxu0 0
        %1589 = vmatpush1.bf16.xpose.msra.mxu0 0
        %1590 = vmatprep.subr.bf16.mxu0 0
        %1591 = vmatpush1.bf16.xpose.msra.mxu0 0
        %1592 = vmatprep.subr.bf16.mxu0 0
        %1593 = vmatpush1.bf16.xpose.msra.mxu0 0
        %1594 = vmatprep.mubr.bf16.mxu0 0
        %1595 = vmatmul.mubr.bf16.gmra.mrb[0].mxu0 %v1557
        %v1596 = vpop.f32.mrb[0].mxu0
        %v1597 = vadd.f32 %v1412, %v1596
        %v1598 = vpop.f32.mrb[0].mxu0
        %v1599 = vpop.f32.mrb[0].mxu0
        %v1600 = vadd.f32 %v1413, %v1599
        %v1601 = vpop.f32.mrb[0].mxu0
        %1602 = vdwg.mxu0
        %v1603 = vsel %vm1414, %v1456, -inf
        %1604 = vmax.xlane.f32.xlu0 %v1603
        %v1605 = vpop.xlane.xlu0 %1604
        %v1606 = vsel %vm1414, %v1459, -inf
        %1607 = vmax.xlane.f32.xlu0 %v1606
        %v1608 = vpop.xlane.xlu0 %1607
        %v1609 = vsel %vm1414, %v1503, -inf
        %1610 = vmax.xlane.f32.xlu0 %v1609
        %v1611 = vpop.xlane.xlu0 %1610
        %v1612 = vsel %vm1414, %v1506, -inf
        %1613 = vmax.xlane.f32.xlu0 %v1612
        %v1614 = vpop.xlane.xlu0 %1613
        %v1615 = vsel %vm1414, %v1550, -inf
        %1616 = vmax.xlane.f32.xlu0 %v1615
        %v1617 = vpop.xlane.xlu0 %1616
        %v1618 = vsel %vm1414, %v1553, -inf
        %1619 = vmax.xlane.f32.xlu0 %v1618
        %v1620 = vpop.xlane.xlu0 %1619
        %v1621 = vsel %vm1414, %v1597, -inf
        %1622 = vmax.xlane.f32.xlu0 %v1621
        %v1623 = vpop.xlane.xlu0 %1622
        %v1624 = vsel %vm1414, %v1600, -inf
        %1625 = vmax.xlane.f32.xlu0 %v1624
        %v1626 = vpop.xlane.xlu0 %1625
        %v1627 = vmax.f32 %v1605, -1e+30
        %v1628 = vmax.f32 %v1608, -1e+30
        %v1629 = vmax.f32 %v1611, -1e+30
        %v1630 = vmax.f32 %v1614, -1e+30
        %v1631 = vmax.f32 %v1617, -1e+30
        %v1632 = vmax.f32 %v1620, -1e+30
        %v1633 = vmax.f32 %v1623, -1e+30
        %v1634 = vmax.f32 %v1626, -1e+30
        %v1635 = vsub.f32 -1e+30, %v1627
        %v1636 = vsub.f32 -1e+30, %v1628
        %v1637 = vsub.f32 -1e+30, %v1629
        %v1638 = vsub.f32 -1e+30, %v1630
        %v1639 = vsub.f32 -1e+30, %v1631
        %v1640 = vsub.f32 -1e+30, %v1632
        %v1641 = vsub.f32 -1e+30, %v1633
        %v1642 = vsub.f32 -1e+30, %v1634
        %v1643 = vmul.f32 %v1635, 1.442695
        %v1644 = vpow.pop %v1643
        %v1645 = vmul.f32 %v1636, 1.442695
        %v1646 = vpow.pop %v1645
        %v1647 = vmul.f32 %v1637, 1.442695
        %v1648 = vpow.pop %v1647
        %v1649 = vmul.f32 %v1638, 1.442695
        %v1650 = vpow.pop %v1649
        %v1651 = vmul.f32 %v1639, 1.442695
        %v1652 = vpow.pop %v1651
        %v1653 = vmul.f32 %v1640, 1.442695
        %v1654 = vpow.pop %v1653
        %v1655 = vmul.f32 %v1641, 1.442695
        %v1656 = vpow.pop %v1655
        %v1657 = vmul.f32 %v1642, 1.442695
        %v1658 = vpow.pop %v1657
        %v1659 = vsub.f32 %v1456, %v1627
        %v1660 = vsub.f32 %v1459, %v1628
        %v1661 = vsub.f32 %v1503, %v1629
        %v1662 = vsub.f32 %v1506, %v1630
        %v1663 = vsub.f32 %v1550, %v1631
        %v1664 = vsub.f32 %v1553, %v1632
        %v1665 = vsub.f32 %v1597, %v1633
        %v1666 = vsub.f32 %v1600, %v1634
        %v1667 = vmul.f32 %v1659, 1.442695
        %v1668 = vpow.pop %v1667
        %v1669 = vmul.f32 %v1660, 1.442695
        %v1670 = vpow.pop %v1669
        %v1671 = vmul.f32 %v1661, 1.442695
        %v1672 = vpow.pop %v1671
        %v1673 = vmul.f32 %v1662, 1.442695
        %v1674 = vpow.pop %v1673
        %v1675 = vmul.f32 %v1663, 1.442695
        %v1676 = vpow.pop %v1675
        %v1677 = vmul.f32 %v1664, 1.442695
        %v1678 = vpow.pop %v1677
        %v1679 = vmul.f32 %v1665, 1.442695
        %v1680 = vpow.pop %v1679
        %v1681 = vmul.f32 %v1666, 1.442695
        %v1682 = vpow.pop %v1681
        %v1683 = vmul.f32 %v1644, 0.0
        %v1684 = vmul.f32 %v1646, 0.0
        %v1685 = vmul.f32 %v1648, 0.0
        %v1686 = vmul.f32 %v1650, 0.0
        %v1687 = vmul.f32 %v1652, 0.0
        %v1688 = vmul.f32 %v1654, 0.0
        %v1689 = vmul.f32 %v1656, 0.0
        %v1690 = vmul.f32 %v1658, 0.0
        %v1691 = vsel %vm1414, %v1668, 0.0
        %1692 = vadd.xlane.f32.xlu0 %v1691
        %v1693 = vpop.xlane.xlu0 %1692
        %v1694 = vsel %vm1414, %v1670, 0.0
        %1695 = vadd.xlane.f32.xlu0 %v1694
        %v1696 = vpop.xlane.xlu0 %1695
        %v1697 = vsel %vm1414, %v1672, 0.0
        %1698 = vadd.xlane.f32.xlu0 %v1697
        %v1699 = vpop.xlane.xlu0 %1698
        %v1700 = vsel %vm1414, %v1674, 0.0
        %1701 = vadd.xlane.f32.xlu0 %v1700
        %v1702 = vpop.xlane.xlu0 %1701
        %v1703 = vsel %vm1414, %v1676, 0.0
        %1704 = vadd.xlane.f32.xlu0 %v1703
        %v1705 = vpop.xlane.xlu0 %1704
        %v1706 = vsel %vm1414, %v1678, 0.0
        %1707 = vadd.xlane.f32.xlu0 %v1706
        %v1708 = vpop.xlane.xlu0 %1707
        %v1709 = vsel %vm1414, %v1680, 0.0
        %1710 = vadd.xlane.f32.xlu0 %v1709
        %v1711 = vpop.xlane.xlu0 %1710
        %v1712 = vsel %vm1414, %v1682, 0.0
        %1713 = vadd.xlane.f32.xlu0 %v1712
        %v1714 = vpop.xlane.xlu0 %1713
        %v1715 = vadd.f32 %v1683, %v1693
        %v1716 = vadd.f32 %v1684, %v1696
        %v1717 = vadd.f32 %v1685, %v1699
        %v1718 = vadd.f32 %v1686, %v1702
        %v1719 = vadd.f32 %v1687, %v1705
        %v1720 = vadd.f32 %v1688, %v1708
        %v1721 = vadd.f32 %v1689, %v1711
        %v1722 = vadd.f32 %v1690, %v1714
        %v1723 = vpack.c.bf16 %v1670, %v1668
        %v1724 = vpack.c.bf16 %v1674, %v1672
        %v1725 = vpack.c.bf16 %v1678, %v1676
        %v1726 = vpack.c.bf16 %v1682, %v1680
        %v1728 = vsel %vm1414, %v1723, 0
        %vm1730 = vcmask 1043456
        %v1732 = vsel %vm1730, %v1401, 0
        %1734 = vmatprep.subr.bf16.mxu0 0
        %1735 = vmatpush1.bf16.msra.mxu0 %v1732
        %1736 = vmatprep.subr.bf16.mxu0 0
        %1737 = vmatpush1.bf16.msra.mxu0 0
        %1738 = vmatprep.subr.bf16.mxu0 0
        %1739 = vmatpush1.bf16.msra.mxu0 0
        %1740 = vmatprep.subr.bf16.mxu0 0
        %1741 = vmatpush1.bf16.msra.mxu0 0
        %1742 = vmatprep.subr.bf16.mxu0 0
        %1743 = vmatpush1.bf16.msra.mxu0 0
        %1744 = vmatprep.subr.bf16.mxu0 0
        %1745 = vmatpush1.bf16.msra.mxu0 0
        %1746 = vmatprep.subr.bf16.mxu0 0
        %1747 = vmatpush1.bf16.msra.mxu0 0
        %1748 = vmatprep.subr.bf16.mxu0 0
        %1749 = vmatpush1.bf16.msra.mxu0 0
        %1750 = vmatprep.subr.bf16.mxu0 0
        %1751 = vmatpush1.bf16.msra.mxu0 0
        %1752 = vmatprep.subr.bf16.mxu0 0
        %1753 = vmatpush1.bf16.msra.mxu0 0
        %1754 = vmatprep.subr.bf16.mxu0 0
        %1755 = vmatpush1.bf16.msra.mxu0 0
        %1756 = vmatprep.subr.bf16.mxu0 0
        %1757 = vmatpush1.bf16.msra.mxu0 0
        %1758 = vmatprep.subr.bf16.mxu0 0
        %1759 = vmatpush1.bf16.msra.mxu0 0
        %1760 = vmatprep.subr.bf16.mxu0 0
        %1761 = vmatpush1.bf16.msra.mxu0 0
        %1762 = vmatprep.subr.bf16.mxu0 0
        %1763 = vmatpush1.bf16.msra.mxu0 0
        %1764 = vmatprep.subr.bf16.mxu0 0
        %1765 = vmatpush1.bf16.msra.mxu0 0
        %1766 = vmatprep.mubr.bf16.mxu0 0
        %1767 = vmatmul.mubr.bf16.gmra.mrb[0].mxu0 %v1728
        %v1768 = vpop.f32.mrb[0].mxu0
        %v1769 = vadd.f32 0.0, %v1768
        %v1770 = vpop.f32.mrb[0].mxu0
        %v1771 = vpop.f32.mrb[0].mxu0
        %v1772 = vadd.f32 0.0, %v1771
        %v1773 = vpop.f32.mrb[0].mxu0
        %1774 = vdwg.mxu0
        %v1776 = vsel %vm1414, %v1724, 0
        %v1779 = vsel %vm1730, %v1402, 0
        %1781 = vmatprep.subr.bf16.mxu0 0
        %1782 = vmatpush1.bf16.msra.mxu0 %v1779
        %1783 = vmatprep.subr.bf16.mxu0 0
        %1784 = vmatpush1.bf16.msra.mxu0 0
        %1785 = vmatprep.subr.bf16.mxu0 0
        %1786 = vmatpush1.bf16.msra.mxu0 0
        %1787 = vmatprep.subr.bf16.mxu0 0
        %1788 = vmatpush1.bf16.msra.mxu0 0
        %1789 = vmatprep.subr.bf16.mxu0 0
        %1790 = vmatpush1.bf16.msra.mxu0 0
        %1791 = vmatprep.subr.bf16.mxu0 0
        %1792 = vmatpush1.bf16.msra.mxu0 0
        %1793 = vmatprep.subr.bf16.mxu0 0
        %1794 = vmatpush1.bf16.msra.mxu0 0
        %1795 = vmatprep.subr.bf16.mxu0 0
        %1796 = vmatpush1.bf16.msra.mxu0 0
        %1797 = vmatprep.subr.bf16.mxu0 0
        %1798 = vmatpush1.bf16.msra.mxu0 0
        %1799 = vmatprep.subr.bf16.mxu0 0
        %1800 = vmatpush1.bf16.msra.mxu0 0
        %1801 = vmatprep.subr.bf16.mxu0 0
        %1802 = vmatpush1.bf16.msra.mxu0 0
        %1803 = vmatprep.subr.bf16.mxu0 0
        %1804 = vmatpush1.bf16.msra.mxu0 0
        %1805 = vmatprep.subr.bf16.mxu0 0
        %1806 = vmatpush1.bf16.msra.mxu0 0
        %1807 = vmatprep.subr.bf16.mxu0 0
        %1808 = vmatpush1.bf16.msra.mxu0 0
        %1809 = vmatprep.subr.bf16.mxu0 0
        %1810 = vmatpush1.bf16.msra.mxu0 0
        %1811 = vmatprep.subr.bf16.mxu0 0
        %1812 = vmatpush1.bf16.msra.mxu0 0
        %1813 = vmatprep.mubr.bf16.mxu0 0
        %1814 = vmatmul.mubr.bf16.gmra.mrb[0].mxu0 %v1776
        %v1815 = vpop.f32.mrb[0].mxu0
        %v1816 = vadd.f32 0.0, %v1815
        %v1817 = vpop.f32.mrb[0].mxu0
        %v1818 = vpop.f32.mrb[0].mxu0
        %v1819 = vadd.f32 0.0, %v1818
        %v1820 = vpop.f32.mrb[0].mxu0
        %1821 = vdwg.mxu0
        %v1823 = vsel %vm1414, %v1725, 0
        %v1826 = vsel %vm1730, %v1403, 0
        %1828 = vmatprep.subr.bf16.mxu0 0
        %1829 = vmatpush1.bf16.msra.mxu0 %v1826
        %1830 = vmatprep.subr.bf16.mxu0 0
        %1831 = vmatpush1.bf16.msra.mxu0 0
        %1832 = vmatprep.subr.bf16.mxu0 0
        %1833 = vmatpush1.bf16.msra.mxu0 0
        %1834 = vmatprep.subr.bf16.mxu0 0
        %1835 = vmatpush1.bf16.msra.mxu0 0
        %1836 = vmatprep.subr.bf16.mxu0 0
        %1837 = vmatpush1.bf16.msra.mxu0 0
        %1838 = vmatprep.subr.bf16.mxu0 0
        %1839 = vmatpush1.bf16.msra.mxu0 0
        %1840 = vmatprep.subr.bf16.mxu0 0
        %1841 = vmatpush1.bf16.msra.mxu0 0
        %1842 = vmatprep.subr.bf16.mxu0 0
        %1843 = vmatpush1.bf16.msra.mxu0 0
        %1844 = vmatprep.subr.bf16.mxu0 0
        %1845 = vmatpush1.bf16.msra.mxu0 0
        %1846 = vmatprep.subr.bf16.mxu0 0
        %1847 = vmatpush1.bf16.msra.mxu0 0
        %1848 = vmatprep.subr.bf16.mxu0 0
        %1849 = vmatpush1.bf16.msra.mxu0 0
        %1850 = vmatprep.subr.bf16.mxu0 0
        %1851 = vmatpush1.bf16.msra.mxu0 0
        %1852 = vmatprep.subr.bf16.mxu0 0
        %1853 = vmatpush1.bf16.msra.mxu0 0
        %1854 = vmatprep.subr.bf16.mxu0 0
        %1855 = vmatpush1.bf16.msra.mxu0 0
        %1856 = vmatprep.subr.bf16.mxu0 0
        %1857 = vmatpush1.bf16.msra.mxu0 0
        %1858 = vmatprep.subr.bf16.mxu0 0
        %1859 = vmatpush1.bf16.msra.mxu0 0
        %1860 = vmatprep.mubr.bf16.mxu0 0
        %1861 = vmatmul.mubr.bf16.gmra.mrb[0].mxu0 %v1823
        %v1862 = vpop.f32.mrb[0].mxu0
        %v1863 = vadd.f32 0.0, %v1862
        %v1864 = vpop.f32.mrb[0].mxu0
        %v1865 = vpop.f32.mrb[0].mxu0
        %v1866 = vadd.f32 0.0, %v1865
        %v1867 = vpop.f32.mrb[0].mxu0
        %1868 = vdwg.mxu0
        %v1870 = vsel %vm1414, %v1726, 0
        %v1873 = vsel %vm1730, %v1404, 0
        %1875 = vmatprep.subr.bf16.mxu0 0
        %1876 = vmatpush1.bf16.msra.mxu0 %v1873
        %1877 = vmatprep.subr.bf16.mxu0 0
        %1878 = vmatpush1.bf16.msra.mxu0 0
        %1879 = vmatprep.subr.bf16.mxu0 0
        %1880 = vmatpush1.bf16.msra.mxu0 0
        %1881 = vmatprep.subr.bf16.mxu0 0
        %1882 = vmatpush1.bf16.msra.mxu0 0
        %1883 = vmatprep.subr.bf16.mxu0 0
        %1884 = vmatpush1.bf16.msra.mxu0 0
        %1885 = vmatprep.subr.bf16.mxu0 0
        %1886 = vmatpush1.bf16.msra.mxu0 0
        %1887 = vmatprep.subr.bf16.mxu0 0
        %1888 = vmatpush1.bf16.msra.mxu0 0
        %1889 = vmatprep.subr.bf16.mxu0 0
        %1890 = vmatpush1.bf16.msra.mxu0 0
        %1891 = vmatprep.subr.bf16.mxu0 0
        %1892 = vmatpush1.bf16.msra.mxu0 0
        %1893 = vmatprep.subr.bf16.mxu0 0
        %1894 = vmatpush1.bf16.msra.mxu0 0
        %1895 = vmatprep.subr.bf16.mxu0 0
        %1896 = vmatpush1.bf16.msra.mxu0 0
        %1897 = vmatprep.subr.bf16.mxu0 0
        %1898 = vmatpush1.bf16.msra.mxu0 0
        %1899 = vmatprep.subr.bf16.mxu0 0
        %1900 = vmatpush1.bf16.msra.mxu0 0
        %1901 = vmatprep.subr.bf16.mxu0 0
        %1902 = vmatpush1.bf16.msra.mxu0 0
        %1903 = vmatprep.subr.bf16.mxu0 0
        %1904 = vmatpush1.bf16.msra.mxu0 0
        %1905 = vmatprep.subr.bf16.mxu0 0
        %1906 = vmatpush1.bf16.msra.mxu0 0
        %1907 = vmatprep.mubr.bf16.mxu0 0
        %1908 = vmatmul.mubr.bf16.gmra.mrb[0].mxu0 %v1870
        %v1909 = vpop.f32.mrb[0].mxu0
        %v1910 = vadd.f32 0.0, %v1909
        %v1911 = vpop.f32.mrb[0].mxu0
        %v1912 = vpop.f32.mrb[0].mxu0
        %v1913 = vadd.f32 0.0, %v1912
        %v1914 = vpop.f32.mrb[0].mxu0
        %1915 = vdwg.mxu0
        %v1916 = vadd.f32 %v1683, %v1769
        %v1917 = vadd.f32 %v1684, %v1772
        %v1918 = vadd.f32 %v1685, %v1816
        %v1919 = vadd.f32 %v1686, %v1819
        %v1920 = vadd.f32 %v1687, %v1863
        %v1921 = vadd.f32 %v1688, %v1866
        %v1922 = vadd.f32 %v1689, %v1910
        %v1923 = vadd.f32 %v1690, %v1913
        %v1924 = vpack.c.bf16 %v1097, %v1097
        %v1925 = vpack.c.bf16 %v1098, %v1098
        %v1926 = vpack.c.bf16 %v1099, %v1099
        %v1927 = vpack.c.bf16 %v1100, %v1100
        %v1928 = vpack.c.bf16 %v1393, %v1393
        %v1929 = vpack.c.bf16 %v1394, %v1394
        %v1930 = vpack.c.bf16 %v1395, %v1395
        %v1931 = vpack.c.bf16 %v1396, %v1396
        %v1932 = vadd.s32 %v1409, 8
        %vm1933 = vcmp.ge.s32.totalorder %v1406, %v1932
        %vm1934 = vcmp.ge.s32.totalorder %v1407, %v1932
        %v1935 = vsel %vm1933, 0.0, -1e+30
        %v1936 = vsel %vm1934, 0.0, -1e+30
        %v1938 = vsel %vm1414, %v1924, 0
        %1940 = vmatprep.subr.bf16.mxu0 0
        %1941 = vmatpush1.bf16.xpose.msra.mxu0 %v1938
        %1942 = vmatprep.subr.bf16.mxu0 0
        %1943 = vmatpush1.bf16.xpose.msra.mxu0 0
        %1944 = vmatprep.subr.bf16.mxu0 0
        %1945 = vmatpush1.bf16.xpose.msra.mxu0 0
        %1946 = vmatprep.subr.bf16.mxu0 0
        %1947 = vmatpush1.bf16.xpose.msra.mxu0 0
        %1948 = vmatprep.subr.bf16.mxu0 0
        %1949 = vmatpush1.bf16.xpose.msra.mxu0 0
        %1950 = vmatprep.subr.bf16.mxu0 0
        %1951 = vmatpush1.bf16.xpose.msra.mxu0 0
        %1952 = vmatprep.subr.bf16.mxu0 0
        %1953 = vmatpush1.bf16.xpose.msra.mxu0 0
        %1954 = vmatprep.subr.bf16.mxu0 0
        %1955 = vmatpush1.bf16.xpose.msra.mxu0 0
        %1956 = vmatprep.subr.bf16.mxu0 0
        %1957 = vmatpush1.bf16.xpose.msra.mxu0 0
        %1958 = vmatprep.subr.bf16.mxu0 0
        %1959 = vmatpush1.bf16.xpose.msra.mxu0 0
        %1960 = vmatprep.subr.bf16.mxu0 0
        %1961 = vmatpush1.bf16.xpose.msra.mxu0 0
        %1962 = vmatprep.subr.bf16.mxu0 0
        %1963 = vmatpush1.bf16.xpose.msra.mxu0 0
        %1964 = vmatprep.subr.bf16.mxu0 0
        %1965 = vmatpush1.bf16.xpose.msra.mxu0 0
        %1966 = vmatprep.subr.bf16.mxu0 0
        %1967 = vmatpush1.bf16.xpose.msra.mxu0 0
        %1968 = vmatprep.subr.bf16.mxu0 0
        %1969 = vmatpush1.bf16.xpose.msra.mxu0 0
        %1970 = vmatprep.subr.bf16.mxu0 0
        %1971 = vmatpush1.bf16.xpose.msra.mxu0 0
        %1972 = vmatprep.mubr.bf16.mxu0 0
        %1973 = vmatmul.mubr.bf16.gmra.mrb[0].mxu0 %v1416
        %v1974 = vpop.f32.mrb[0].mxu0
        %v1975 = vadd.f32 %v1935, %v1974
        %v1976 = vpop.f32.mrb[0].mxu0
        %v1977 = vpop.f32.mrb[0].mxu0
        %v1978 = vadd.f32 %v1936, %v1977
        %v1979 = vpop.f32.mrb[0].mxu0
        %1980 = vdwg.mxu0
        %v1982 = vsel %vm1414, %v1925, 0
        %1984 = vmatprep.subr.bf16.mxu0 0
        %1985 = vmatpush1.bf16.xpose.msra.mxu0 %v1982
        %1986 = vmatprep.subr.bf16.mxu0 0
        %1987 = vmatpush1.bf16.xpose.msra.mxu0 0
        %1988 = vmatprep.subr.bf16.mxu0 0
        %1989 = vmatpush1.bf16.xpose.msra.mxu0 0
        %1990 = vmatprep.subr.bf16.mxu0 0
        %1991 = vmatpush1.bf16.xpose.msra.mxu0 0
        %1992 = vmatprep.subr.bf16.mxu0 0
        %1993 = vmatpush1.bf16.xpose.msra.mxu0 0
        %1994 = vmatprep.subr.bf16.mxu0 0
        %1995 = vmatpush1.bf16.xpose.msra.mxu0 0
        %1996 = vmatprep.subr.bf16.mxu0 0
        %1997 = vmatpush1.bf16.xpose.msra.mxu0 0
        %1998 = vmatprep.subr.bf16.mxu0 0
        %1999 = vmatpush1.bf16.xpose.msra.mxu0 0
        %2000 = vmatprep.subr.bf16.mxu0 0
        %2001 = vmatpush1.bf16.xpose.msra.mxu0 0
        %2002 = vmatprep.subr.bf16.mxu0 0
        %2003 = vmatpush1.bf16.xpose.msra.mxu0 0
        %2004 = vmatprep.subr.bf16.mxu0 0
        %2005 = vmatpush1.bf16.xpose.msra.mxu0 0
        %2006 = vmatprep.subr.bf16.mxu0 0
        %2007 = vmatpush1.bf16.xpose.msra.mxu0 0
        %2008 = vmatprep.subr.bf16.mxu0 0
        %2009 = vmatpush1.bf16.xpose.msra.mxu0 0
        %2010 = vmatprep.subr.bf16.mxu0 0
        %2011 = vmatpush1.bf16.xpose.msra.mxu0 0
        %2012 = vmatprep.subr.bf16.mxu0 0
        %2013 = vmatpush1.bf16.xpose.msra.mxu0 0
        %2014 = vmatprep.subr.bf16.mxu0 0
        %2015 = vmatpush1.bf16.xpose.msra.mxu0 0
        %2016 = vmatprep.mubr.bf16.mxu0 0
        %2017 = vmatmul.mubr.bf16.gmra.mrb[0].mxu0 %v1463
        %v2018 = vpop.f32.mrb[0].mxu0
        %v2019 = vadd.f32 %v1935, %v2018
        %v2020 = vpop.f32.mrb[0].mxu0
        %v2021 = vpop.f32.mrb[0].mxu0
        %v2022 = vadd.f32 %v1936, %v2021
        %v2023 = vpop.f32.mrb[0].mxu0
        %2024 = vdwg.mxu0
        %v2026 = vsel %vm1414, %v1926, 0
        %2028 = vmatprep.subr.bf16.mxu0 0
        %2029 = vmatpush1.bf16.xpose.msra.mxu0 %v2026
        %2030 = vmatprep.subr.bf16.mxu0 0
        %2031 = vmatpush1.bf16.xpose.msra.mxu0 0
        %2032 = vmatprep.subr.bf16.mxu0 0
        %2033 = vmatpush1.bf16.xpose.msra.mxu0 0
        %2034 = vmatprep.subr.bf16.mxu0 0
        %2035 = vmatpush1.bf16.xpose.msra.mxu0 0
        %2036 = vmatprep.subr.bf16.mxu0 0
        %2037 = vmatpush1.bf16.xpose.msra.mxu0 0
        %2038 = vmatprep.subr.bf16.mxu0 0
        %2039 = vmatpush1.bf16.xpose.msra.mxu0 0
        %2040 = vmatprep.subr.bf16.mxu0 0
        %2041 = vmatpush1.bf16.xpose.msra.mxu0 0
        %2042 = vmatprep.subr.bf16.mxu0 0
        %2043 = vmatpush1.bf16.xpose.msra.mxu0 0
        %2044 = vmatprep.subr.bf16.mxu0 0
        %2045 = vmatpush1.bf16.xpose.msra.mxu0 0
        %2046 = vmatprep.subr.bf16.mxu0 0
        %2047 = vmatpush1.bf16.xpose.msra.mxu0 0
        %2048 = vmatprep.subr.bf16.mxu0 0
        %2049 = vmatpush1.bf16.xpose.msra.mxu0 0
        %2050 = vmatprep.subr.bf16.mxu0 0
        %2051 = vmatpush1.bf16.xpose.msra.mxu0 0
        %2052 = vmatprep.subr.bf16.mxu0 0
        %2053 = vmatpush1.bf16.xpose.msra.mxu0 0
        %2054 = vmatprep.subr.bf16.mxu0 0
        %2055 = vmatpush1.bf16.xpose.msra.mxu0 0
        %2056 = vmatprep.subr.bf16.mxu0 0
        %2057 = vmatpush1.bf16.xpose.msra.mxu0 0
        %2058 = vmatprep.subr.bf16.mxu0 0
        %2059 = vmatpush1.bf16.xpose.msra.mxu0 0
        %2060 = vmatprep.mubr.bf16.mxu0 0
        %2061 = vmatmul.mubr.bf16.gmra.mrb[0].mxu0 %v1510
        %v2062 = vpop.f32.mrb[0].mxu0
        %v2063 = vadd.f32 %v1935, %v2062
        %v2064 = vpop.f32.mrb[0].mxu0
        %v2065 = vpop.f32.mrb[0].mxu0
        %v2066 = vadd.f32 %v1936, %v2065
        %v2067 = vpop.f32.mrb[0].mxu0
        %2068 = vdwg.mxu0
        %v2070 = vsel %vm1414, %v1927, 0
        %2072 = vmatprep.subr.bf16.mxu0 0
        %2073 = vmatpush1.bf16.xpose.msra.mxu0 %v2070
        %2074 = vmatprep.subr.bf16.mxu0 0
        %2075 = vmatpush1.bf16.xpose.msra.mxu0 0
        %2076 = vmatprep.subr.bf16.mxu0 0
        %2077 = vmatpush1.bf16.xpose.msra.mxu0 0
        %2078 = vmatprep.subr.bf16.mxu0 0
        %2079 = vmatpush1.bf16.xpose.msra.mxu0 0
        %2080 = vmatprep.subr.bf16.mxu0 0
        %2081 = vmatpush1.bf16.xpose.msra.mxu0 0
        %2082 = vmatprep.subr.bf16.mxu0 0
        %2083 = vmatpush1.bf16.xpose.msra.mxu0 0
        %2084 = vmatprep.subr.bf16.mxu0 0
        %2085 = vmatpush1.bf16.xpose.msra.mxu0 0
        %2086 = vmatprep.subr.bf16.mxu0 0
        %2087 = vmatpush1.bf16.xpose.msra.mxu0 0
        %2088 = vmatprep.subr.bf16.mxu0 0
        %2089 = vmatpush1.bf16.xpose.msra.mxu0 0
        %2090 = vmatprep.subr.bf16.mxu0 0
        %2091 = vmatpush1.bf16.xpose.msra.mxu0 0
        %2092 = vmatprep.subr.bf16.mxu0 0
        %2093 = vmatpush1.bf16.xpose.msra.mxu0 0
        %2094 = vmatprep.subr.bf16.mxu0 0
        %2095 = vmatpush1.bf16.xpose.msra.mxu0 0
        %2096 = vmatprep.subr.bf16.mxu0 0
        %2097 = vmatpush1.bf16.xpose.msra.mxu0 0
        %2098 = vmatprep.subr.bf16.mxu0 0
        %2099 = vmatpush1.bf16.xpose.msra.mxu0 0
        %2100 = vmatprep.subr.bf16.mxu0 0
        %2101 = vmatpush1.bf16.xpose.msra.mxu0 0
        %2102 = vmatprep.subr.bf16.mxu0 0
        %2103 = vmatpush1.bf16.xpose.msra.mxu0 0
        %2104 = vmatprep.mubr.bf16.mxu0 0
        %2105 = vmatmul.mubr.bf16.gmra.mrb[0].mxu0 %v1557
        %v2106 = vpop.f32.mrb[0].mxu0
        %v2107 = vadd.f32 %v1935, %v2106
        %v2108 = vpop.f32.mrb[0].mxu0
        %v2109 = vpop.f32.mrb[0].mxu0
        %v2110 = vadd.f32 %v1936, %v2109
        %v2111 = vpop.f32.mrb[0].mxu0
        %2112 = vdwg.mxu0
        %v2113 = vsel %vm1414, %v1975, -inf
        %2114 = vmax.xlane.f32.xlu0 %v2113
        %v2115 = vpop.xlane.xlu0 %2114
        %v2116 = vsel %vm1414, %v1978, -inf
        %2117 = vmax.xlane.f32.xlu0 %v2116
        %v2118 = vpop.xlane.xlu0 %2117
        %v2119 = vsel %vm1414, %v2019, -inf
        %2120 = vmax.xlane.f32.xlu0 %v2119
        %v2121 = vpop.xlane.xlu0 %2120
        %v2122 = vsel %vm1414, %v2022, -inf
        %2123 = vmax.xlane.f32.xlu0 %v2122
        %v2124 = vpop.xlane.xlu0 %2123
        %v2125 = vsel %vm1414, %v2063, -inf
        %2126 = vmax.xlane.f32.xlu0 %v2125
        %v2127 = vpop.xlane.xlu0 %2126
        %v2128 = vsel %vm1414, %v2066, -inf
        %2129 = vmax.xlane.f32.xlu0 %v2128
        %v2130 = vpop.xlane.xlu0 %2129
        %v2131 = vsel %vm1414, %v2107, -inf
        %2132 = vmax.xlane.f32.xlu0 %v2131
        %v2133 = vpop.xlane.xlu0 %2132
        %v2134 = vsel %vm1414, %v2110, -inf
        %2135 = vmax.xlane.f32.xlu0 %v2134
        %v2136 = vpop.xlane.xlu0 %2135
        %v2137 = vmax.f32 %v1627, %v2115
        %v2138 = vmax.f32 %v1628, %v2118
        %v2139 = vmax.f32 %v1629, %v2121
        %v2140 = vmax.f32 %v1630, %v2124
        %v2141 = vmax.f32 %v1631, %v2127
        %v2142 = vmax.f32 %v1632, %v2130
        %v2143 = vmax.f32 %v1633, %v2133
        %v2144 = vmax.f32 %v1634, %v2136
        %v2145 = vsub.f32 %v1627, %v2137
        %v2146 = vsub.f32 %v1628, %v2138
        %v2147 = vsub.f32 %v1629, %v2139
        %v2148 = vsub.f32 %v1630, %v2140
        %v2149 = vsub.f32 %v1631, %v2141
        %v2150 = vsub.f32 %v1632, %v2142
        %v2151 = vsub.f32 %v1633, %v2143
        %v2152 = vsub.f32 %v1634, %v2144
        %v2153 = vmul.f32 %v2145, 1.442695
        %v2154 = vpow.pop %v2153
        %v2155 = vmul.f32 %v2146, 1.442695
        %v2156 = vpow.pop %v2155
        %v2157 = vmul.f32 %v2147, 1.442695
        %v2158 = vpow.pop %v2157
        %v2159 = vmul.f32 %v2148, 1.442695
        %v2160 = vpow.pop %v2159
        %v2161 = vmul.f32 %v2149, 1.442695
        %v2162 = vpow.pop %v2161
        %v2163 = vmul.f32 %v2150, 1.442695
        %v2164 = vpow.pop %v2163
        %v2165 = vmul.f32 %v2151, 1.442695
        %v2166 = vpow.pop %v2165
        %v2167 = vmul.f32 %v2152, 1.442695
        %v2168 = vpow.pop %v2167
        %v2169 = vsub.f32 %v1975, %v2137
        %v2170 = vsub.f32 %v1978, %v2138
        %v2171 = vsub.f32 %v2019, %v2139
        %v2172 = vsub.f32 %v2022, %v2140
        %v2173 = vsub.f32 %v2063, %v2141
        %v2174 = vsub.f32 %v2066, %v2142
        %v2175 = vsub.f32 %v2107, %v2143
        %v2176 = vsub.f32 %v2110, %v2144
        %v2177 = vmul.f32 %v2169, 1.442695
        %v2178 = vpow.pop %v2177
        %v2179 = vmul.f32 %v2170, 1.442695
        %v2180 = vpow.pop %v2179
        %v2181 = vmul.f32 %v2171, 1.442695
        %v2182 = vpow.pop %v2181
        %v2183 = vmul.f32 %v2172, 1.442695
        %v2184 = vpow.pop %v2183
        %v2185 = vmul.f32 %v2173, 1.442695
        %v2186 = vpow.pop %v2185
        %v2187 = vmul.f32 %v2174, 1.442695
        %v2188 = vpow.pop %v2187
        %v2189 = vmul.f32 %v2175, 1.442695
        %v2190 = vpow.pop %v2189
        %v2191 = vmul.f32 %v2176, 1.442695
        %v2192 = vpow.pop %v2191
        %v2193 = vmul.f32 %v2154, %v1715
        %v2194 = vmul.f32 %v2156, %v1716
        %v2195 = vmul.f32 %v2158, %v1717
        %v2196 = vmul.f32 %v2160, %v1718
        %v2197 = vmul.f32 %v2162, %v1719
        %v2198 = vmul.f32 %v2164, %v1720
        %v2199 = vmul.f32 %v2166, %v1721
        %v2200 = vmul.f32 %v2168, %v1722
        %v2201 = vsel %vm1414, %v2178, 0.0
        %2202 = vadd.xlane.f32.xlu0 %v2201
        %v2203 = vpop.xlane.xlu0 %2202
        %v2204 = vsel %vm1414, %v2180, 0.0
        %2205 = vadd.xlane.f32.xlu0 %v2204
        %v2206 = vpop.xlane.xlu0 %2205
        %v2207 = vsel %vm1414, %v2182, 0.0
        %2208 = vadd.xlane.f32.xlu0 %v2207
        %v2209 = vpop.xlane.xlu0 %2208
        %v2210 = vsel %vm1414, %v2184, 0.0
        %2211 = vadd.xlane.f32.xlu0 %v2210
        %v2212 = vpop.xlane.xlu0 %2211
        %v2213 = vsel %vm1414, %v2186, 0.0
        %2214 = vadd.xlane.f32.xlu0 %v2213
        %v2215 = vpop.xlane.xlu0 %2214
        %v2216 = vsel %vm1414, %v2188, 0.0
        %2217 = vadd.xlane.f32.xlu0 %v2216
        %v2218 = vpop.xlane.xlu0 %2217
        %v2219 = vsel %vm1414, %v2190, 0.0
        %2220 = vadd.xlane.f32.xlu0 %v2219
        %v2221 = vpop.xlane.xlu0 %2220
        %v2222 = vsel %vm1414, %v2192, 0.0
        %2223 = vadd.xlane.f32.xlu0 %v2222
        %v2224 = vpop.xlane.xlu0 %2223
        %v2225 = vadd.f32 %v2193, %v2203
        %v2226 = vadd.f32 %v2194, %v2206
        %v2227 = vadd.f32 %v2195, %v2209
        %v2228 = vadd.f32 %v2196, %v2212
        %v2229 = vadd.f32 %v2197, %v2215
        %v2230 = vadd.f32 %v2198, %v2218
        %v2231 = vadd.f32 %v2199, %v2221
        %v2232 = vadd.f32 %v2200, %v2224
        %v2233 = vmul.f32 %v2154, %v1916
        %v2234 = vmul.f32 %v2156, %v1917
        %v2235 = vmul.f32 %v2158, %v1918
        %v2236 = vmul.f32 %v2160, %v1919
        %v2237 = vmul.f32 %v2162, %v1920
        %v2238 = vmul.f32 %v2164, %v1921
        %v2239 = vmul.f32 %v2166, %v1922
        %v2240 = vmul.f32 %v2168, %v1923
        %v2241 = vpack.c.bf16 %v2180, %v2178
        %v2242 = vpack.c.bf16 %v2184, %v2182
        %v2243 = vpack.c.bf16 %v2188, %v2186
        %v2244 = vpack.c.bf16 %v2192, %v2190
        %v2246 = vsel %vm1414, %v2241, 0
        %v2249 = vsel %vm1730, %v1928, 0
        %2251 = vmatprep.subr.bf16.mxu0 0
        %2252 = vmatpush1.bf16.msra.mxu0 %v2249
        %2253 = vmatprep.subr.bf16.mxu0 0
        %2254 = vmatpush1.bf16.msra.mxu0 0
        %2255 = vmatprep.subr.bf16.mxu0 0
        %2256 = vmatpush1.bf16.msra.mxu0 0
        %2257 = vmatprep.subr.bf16.mxu0 0
        %2258 = vmatpush1.bf16.msra.mxu0 0
        %2259 = vmatprep.subr.bf16.mxu0 0
        %2260 = vmatpush1.bf16.msra.mxu0 0
        %2261 = vmatprep.subr.bf16.mxu0 0
        %2262 = vmatpush1.bf16.msra.mxu0 0
        %2263 = vmatprep.subr.bf16.mxu0 0
        %2264 = vmatpush1.bf16.msra.mxu0 0
        %2265 = vmatprep.subr.bf16.mxu0 0
        %2266 = vmatpush1.bf16.msra.mxu0 0
        %2267 = vmatprep.subr.bf16.mxu0 0
        %2268 = vmatpush1.bf16.msra.mxu0 0
        %2269 = vmatprep.subr.bf16.mxu0 0
        %2270 = vmatpush1.bf16.msra.mxu0 0
        %2271 = vmatprep.subr.bf16.mxu0 0
        %2272 = vmatpush1.bf16.msra.mxu0 0
        %2273 = vmatprep.subr.bf16.mxu0 0
        %2274 = vmatpush1.bf16.msra.mxu0 0
        %2275 = vmatprep.subr.bf16.mxu0 0
        %2276 = vmatpush1.bf16.msra.mxu0 0
        %2277 = vmatprep.subr.bf16.mxu0 0
        %2278 = vmatpush1.bf16.msra.mxu0 0
        %2279 = vmatprep.subr.bf16.mxu0 0
        %2280 = vmatpush1.bf16.msra.mxu0 0
        %2281 = vmatprep.subr.bf16.mxu0 0
        %2282 = vmatpush1.bf16.msra.mxu0 0
        %2283 = vmatprep.mubr.bf16.mxu0 0
        %2284 = vmatmul.mubr.bf16.gmra.mrb[0].mxu0 %v2246
        %v2285 = vpop.f32.mrb[0].mxu0
        %v2286 = vadd.f32 0.0, %v2285
        %v2287 = vpop.f32.mrb[0].mxu0
        %v2288 = vpop.f32.mrb[0].mxu0
        %v2289 = vadd.f32 0.0, %v2288
        %v2290 = vpop.f32.mrb[0].mxu0
        %2291 = vdwg.mxu0
        %v2293 = vsel %vm1414, %v2242, 0
        %v2296 = vsel %vm1730, %v1929, 0
        %2298 = vmatprep.subr.bf16.mxu0 0
        %2299 = vmatpush1.bf16.msra.mxu0 %v2296
        %2300 = vmatprep.subr.bf16.mxu0 0
        %2301 = vmatpush1.bf16.msra.mxu0 0
        %2302 = vmatprep.subr.bf16.mxu0 0
        %2303 = vmatpush1.bf16.msra.mxu0 0
        %2304 = vmatprep.subr.bf16.mxu0 0
        %2305 = vmatpush1.bf16.msra.mxu0 0
        %2306 = vmatprep.subr.bf16.mxu0 0
        %2307 = vmatpush1.bf16.msra.mxu0 0
        %2308 = vmatprep.subr.bf16.mxu0 0
        %2309 = vmatpush1.bf16.msra.mxu0 0
        %2310 = vmatprep.subr.bf16.mxu0 0
        %2311 = vmatpush1.bf16.msra.mxu0 0
        %2312 = vmatprep.subr.bf16.mxu0 0
        %2313 = vmatpush1.bf16.msra.mxu0 0
        %2314 = vmatprep.subr.bf16.mxu0 0
        %2315 = vmatpush1.bf16.msra.mxu0 0
        %2316 = vmatprep.subr.bf16.mxu0 0
        %2317 = vmatpush1.bf16.msra.mxu0 0
        %2318 = vmatprep.subr.bf16.mxu0 0
        %2319 = vmatpush1.bf16.msra.mxu0 0
        %2320 = vmatprep.subr.bf16.mxu0 0
        %2321 = vmatpush1.bf16.msra.mxu0 0
        %2322 = vmatprep.subr.bf16.mxu0 0
        %2323 = vmatpush1.bf16.msra.mxu0 0
        %2324 = vmatprep.subr.bf16.mxu0 0
        %2325 = vmatpush1.bf16.msra.mxu0 0
        %2326 = vmatprep.subr.bf16.mxu0 0
        %2327 = vmatpush1.bf16.msra.mxu0 0
        %2328 = vmatprep.subr.bf16.mxu0 0
        %2329 = vmatpush1.bf16.msra.mxu0 0
        %2330 = vmatprep.mubr.bf16.mxu0 0
        %2331 = vmatmul.mubr.bf16.gmra.mrb[0].mxu0 %v2293
        %v2332 = vpop.f32.mrb[0].mxu0
        %v2333 = vadd.f32 0.0, %v2332
        %v2334 = vpop.f32.mrb[0].mxu0
        %v2335 = vpop.f32.mrb[0].mxu0
        %v2336 = vadd.f32 0.0, %v2335
        %v2337 = vpop.f32.mrb[0].mxu0
        %2338 = vdwg.mxu0
        %v2340 = vsel %vm1414, %v2243, 0
        %v2343 = vsel %vm1730, %v1930, 0
        %2345 = vmatprep.subr.bf16.mxu0 0
        %2346 = vmatpush1.bf16.msra.mxu0 %v2343
        %2347 = vmatprep.subr.bf16.mxu0 0
        %2348 = vmatpush1.bf16.msra.mxu0 0
        %2349 = vmatprep.subr.bf16.mxu0 0
        %2350 = vmatpush1.bf16.msra.mxu0 0
        %2351 = vmatprep.subr.bf16.mxu0 0
        %2352 = vmatpush1.bf16.msra.mxu0 0
        %2353 = vmatprep.subr.bf16.mxu0 0
        %2354 = vmatpush1.bf16.msra.mxu0 0
        %2355 = vmatprep.subr.bf16.mxu0 0
        %2356 = vmatpush1.bf16.msra.mxu0 0
        %2357 = vmatprep.subr.bf16.mxu0 0
        %2358 = vmatpush1.bf16.msra.mxu0 0
        %2359 = vmatprep.subr.bf16.mxu0 0
        %2360 = vmatpush1.bf16.msra.mxu0 0
        %2361 = vmatprep.subr.bf16.mxu0 0
        %2362 = vmatpush1.bf16.msra.mxu0 0
        %2363 = vmatprep.subr.bf16.mxu0 0
        %2364 = vmatpush1.bf16.msra.mxu0 0
        %2365 = vmatprep.subr.bf16.mxu0 0
        %2366 = vmatpush1.bf16.msra.mxu0 0
        %2367 = vmatprep.subr.bf16.mxu0 0
        %2368 = vmatpush1.bf16.msra.mxu0 0
        %2369 = vmatprep.subr.bf16.mxu0 0
        %2370 = vmatpush1.bf16.msra.mxu0 0
        %2371 = vmatprep.subr.bf16.mxu0 0
        %2372 = vmatpush1.bf16.msra.mxu0 0
        %2373 = vmatprep.subr.bf16.mxu0 0
        %2374 = vmatpush1.bf16.msra.mxu0 0
        %2375 = vmatprep.subr.bf16.mxu0 0
        %2376 = vmatpush1.bf16.msra.mxu0 0
        %2377 = vmatprep.mubr.bf16.mxu0 0
        %2378 = vmatmul.mubr.bf16.gmra.mrb[0].mxu0 %v2340
        %v2379 = vpop.f32.mrb[0].mxu0
        %v2380 = vadd.f32 0.0, %v2379
        %v2381 = vpop.f32.mrb[0].mxu0
        %v2382 = vpop.f32.mrb[0].mxu0
        %v2383 = vadd.f32 0.0, %v2382
        %v2384 = vpop.f32.mrb[0].mxu0
        %2385 = vdwg.mxu0
        %v2387 = vsel %vm1414, %v2244, 0
        %v2390 = vsel %vm1730, %v1931, 0
        %2392 = vmatprep.subr.bf16.mxu0 0
        %2393 = vmatpush1.bf16.msra.mxu0 %v2390
        %2394 = vmatprep.subr.bf16.mxu0 0
        %2395 = vmatpush1.bf16.msra.mxu0 0
        %2396 = vmatprep.subr.bf16.mxu0 0
        %2397 = vmatpush1.bf16.msra.mxu0 0
        %2398 = vmatprep.subr.bf16.mxu0 0
        %2399 = vmatpush1.bf16.msra.mxu0 0
        %2400 = vmatprep.subr.bf16.mxu0 0
        %2401 = vmatpush1.bf16.msra.mxu0 0
        %2402 = vmatprep.subr.bf16.mxu0 0
        %2403 = vmatpush1.bf16.msra.mxu0 0
        %2404 = vmatprep.subr.bf16.mxu0 0
        %2405 = vmatpush1.bf16.msra.mxu0 0
        %2406 = vmatprep.subr.bf16.mxu0 0
        %2407 = vmatpush1.bf16.msra.mxu0 0
        %2408 = vmatprep.subr.bf16.mxu0 0
        %2409 = vmatpush1.bf16.msra.mxu0 0
        %2410 = vmatprep.subr.bf16.mxu0 0
        %2411 = vmatpush1.bf16.msra.mxu0 0
        %2412 = vmatprep.subr.bf16.mxu0 0
        %2413 = vmatpush1.bf16.msra.mxu0 0
        %2414 = vmatprep.subr.bf16.mxu0 0
        %2415 = vmatpush1.bf16.msra.mxu0 0
        %2416 = vmatprep.subr.bf16.mxu0 0
        %2417 = vmatpush1.bf16.msra.mxu0 0
        %2418 = vmatprep.subr.bf16.mxu0 0
        %2419 = vmatpush1.bf16.msra.mxu0 0
        %2420 = vmatprep.subr.bf16.mxu0 0
        %2421 = vmatpush1.bf16.msra.mxu0 0
        %2422 = vmatprep.subr.bf16.mxu0 0
        %2423 = vmatpush1.bf16.msra.mxu0 0
        %2424 = vmatprep.mubr.bf16.mxu0 0
        %2425 = vmatmul.mubr.bf16.gmra.mrb[0].mxu0 %v2387
        %v2426 = vpop.f32.mrb[0].mxu0
        %v2427 = vadd.f32 0.0, %v2426
        %v2428 = vpop.f32.mrb[0].mxu0
        %v2429 = vpop.f32.mrb[0].mxu0
        %v2430 = vadd.f32 0.0, %v2429
        %v2431 = vpop.f32.mrb[0].mxu0
        %2432 = vdwg.mxu0
        %v2433 = vadd.f32 %v2233, %v2286
        %v2434 = vadd.f32 %v2234, %v2289
        %v2435 = vadd.f32 %v2235, %v2333
        %v2436 = vadd.f32 %v2236, %v2336
        %v2437 = vadd.f32 %v2237, %v2380
        %v2438 = vadd.f32 %v2238, %v2383
        %v2439 = vadd.f32 %v2239, %v2427
        %v2440 = vadd.f32 %v2240, %v2430
        %v2441 = vrcp.pop %v2225
        %v2442 = vrcp.pop %v2226
        %v2443 = vrcp.pop %v2227
        %v2444 = vrcp.pop %v2228
        %v2445 = vrcp.pop %v2229
        %v2446 = vrcp.pop %v2230
        %v2447 = vrcp.pop %v2231
        %v2448 = vrcp.pop %v2232
        %v2449 = vmul.f32 %v2433, %v2441
        %v2450 = vmul.f32 %v2434, %v2442
        %v2451 = vmul.f32 %v2435, %v2443
        %v2452 = vmul.f32 %v2436, %v2444
        %v2453 = vmul.f32 %v2437, %v2445
        %v2454 = vmul.f32 %v2438, %v2446
        %v2455 = vmul.f32 %v2439, %v2447
        %v2456 = vmul.f32 %v2440, %v2448
        %v2457 = vcombine.low %v2449, %v2453
        %v2458 = vcombine.high %v2449, %v2453
        %v2460 = vunpack.c.l.s4 1983009808
        %v2461 = vunpack.c.0.s8 %v2460
        %v2462 = vlaneseq
        %v2463 = vshrl.u32 %v2462, 7
        %v2464 = vsub.s32 %v2461, %v2463
        %v2465 = vrot.slane %v2457, %v2464
        %v2467 = vunpack.c.l.s4 1983009808
        %v2468 = vunpack.c.0.s8 %v2467
        %v2469 = vlaneseq
        %v2470 = vshrl.u32 %v2469, 7
        %v2471 = vsub.s32 %v2468, %v2470
        %v2472 = vrot.slane %v2458, %v2471
        %v2473 = vcombine.low %v2451, %v2455
        %v2474 = vcombine.high %v2451, %v2455
        %v2476 = vunpack.c.l.s4 1983009808
        %v2477 = vunpack.c.0.s8 %v2476
        %v2478 = vlaneseq
        %v2479 = vshrl.u32 %v2478, 7
        %v2480 = vsub.s32 %v2477, %v2479
        %v2481 = vrot.slane %v2473, %v2480
        %v2483 = vunpack.c.l.s4 1983009808
        %v2484 = vunpack.c.0.s8 %v2483
        %v2485 = vlaneseq
        %v2486 = vshrl.u32 %v2485, 7
        %v2487 = vsub.s32 %v2484, %v2486
        %v2488 = vrot.slane %v2474, %v2487
        %v2489 = vcombine.low %v2465, %v2481
        %v2490 = vcombine.high %v2465, %v2481
        %v2492 = vunpack.c.l.s4 1934713408
        %v2493 = vunpack.c.0.s8 %v2492
        %v2494 = vlaneseq
        %v2495 = vshrl.u32 %v2494, 7
        %v2496 = vsub.s32 %v2493, %v2495
        %v2497 = vrot.slane %v2489, %v2496
        %v2499 = vunpack.c.l.s4 1934713408
        %v2500 = vunpack.c.0.s8 %v2499
        %v2501 = vlaneseq
        %v2502 = vshrl.u32 %v2501, 7
        %v2503 = vsub.s32 %v2500, %v2502
        %v2504 = vrot.slane %v2490, %v2503
        %v2505 = vcombine.low %v2472, %v2488
        %v2506 = vcombine.high %v2472, %v2488
        %v2508 = vunpack.c.l.s4 1934713408
        %v2509 = vunpack.c.0.s8 %v2508
        %v2510 = vlaneseq
        %v2511 = vshrl.u32 %v2510, 7
        %v2512 = vsub.s32 %v2509, %v2511
        %v2513 = vrot.slane %v2505, %v2512
        %v2515 = vunpack.c.l.s4 1934713408
        %v2516 = vunpack.c.0.s8 %v2515
        %v2517 = vlaneseq
        %v2518 = vshrl.u32 %v2517, 7
        %v2519 = vsub.s32 %v2516, %v2518
        %v2520 = vrot.slane %v2506, %v2519
        %v2521 = vcombine.high %v2497, 0.0
        %v2522 = vcombine.high %v2504, 0.0
        %v2523 = vcombine.high %v2513, 0.0
        %v2524 = vcombine.high %v2520, 0.0
        %v2525 = vcombine.low %v2450, %v2454
        %v2526 = vcombine.high %v2450, %v2454
        %v2528 = vunpack.c.l.s4 1983009808
        %v2529 = vunpack.c.0.s8 %v2528
        %v2530 = vlaneseq
        %v2531 = vshrl.u32 %v2530, 7
        %v2532 = vsub.s32 %v2529, %v2531
        %v2533 = vrot.slane %v2525, %v2532
        %v2535 = vunpack.c.l.s4 1983009808
        %v2536 = vunpack.c.0.s8 %v2535
        %v2537 = vlaneseq
        %v2538 = vshrl.u32 %v2537, 7
        %v2539 = vsub.s32 %v2536, %v2538
        %v2540 = vrot.slane %v2526, %v2539
        %v2541 = vcombine.low %v2452, %v2456
        %v2542 = vcombine.high %v2452, %v2456
        %v2544 = vunpack.c.l.s4 1983009808
        %v2545 = vunpack.c.0.s8 %v2544
        %v2546 = vlaneseq
        %v2547 = vshrl.u32 %v2546, 7
        %v2548 = vsub.s32 %v2545, %v2547
        %v2549 = vrot.slane %v2541, %v2548
        %v2551 = vunpack.c.l.s4 1983009808
        %v2552 = vunpack.c.0.s8 %v2551
        %v2553 = vlaneseq
        %v2554 = vshrl.u32 %v2553, 7
        %v2555 = vsub.s32 %v2552, %v2554
        %v2556 = vrot.slane %v2542, %v2555
        %v2557 = vcombine.low %v2533, %v2549
        %v2558 = vcombine.high %v2533, %v2549
        %v2560 = vunpack.c.l.s4 1934713408
        %v2561 = vunpack.c.0.s8 %v2560
        %v2562 = vlaneseq
        %v2563 = vshrl.u32 %v2562, 7
        %v2564 = vsub.s32 %v2561, %v2563
        %v2565 = vrot.slane %v2557, %v2564
        %v2567 = vunpack.c.l.s4 1934713408
        %v2568 = vunpack.c.0.s8 %v2567
        %v2569 = vlaneseq
        %v2570 = vshrl.u32 %v2569, 7
        %v2571 = vsub.s32 %v2568, %v2570
        %v2572 = vrot.slane %v2558, %v2571
        %v2573 = vcombine.low %v2540, %v2556
        %v2574 = vcombine.high %v2540, %v2556
        %v2576 = vunpack.c.l.s4 1934713408
        %v2577 = vunpack.c.0.s8 %v2576
        %v2578 = vlaneseq
        %v2579 = vshrl.u32 %v2578, 7
        %v2580 = vsub.s32 %v2577, %v2579
        %v2581 = vrot.slane %v2573, %v2580
        %v2583 = vunpack.c.l.s4 1934713408
        %v2584 = vunpack.c.0.s8 %v2583
        %v2585 = vlaneseq
        %v2586 = vshrl.u32 %v2585, 7
        %v2587 = vsub.s32 %v2584, %v2586
        %v2588 = vrot.slane %v2574, %v2587
        %v2589 = vcombine.high %v2565, 0.0
        %v2590 = vcombine.high %v2572, 0.0
        %v2591 = vcombine.high %v2581, 0.0
        %v2592 = vcombine.high %v2588, 0.0
        %v2593 = vcombine.low %v2497, %v2504
        %v2595 = vunpack.c.l.s4 1983009808
        %v2596 = vunpack.c.0.s8 %v2595
        %v2597 = vlaneseq
        %v2598 = vshrl.u32 %v2597, 7
        %v2599 = vsub.s32 %v2596, %v2598
        %v2600 = vrot.slane %v2593, %v2599
        %v2601 = vcombine.low %v2521, %v2522
        %v2603 = vunpack.c.l.s4 1983009808
        %v2604 = vunpack.c.0.s8 %v2603
        %v2605 = vlaneseq
        %v2606 = vshrl.u32 %v2605, 7
        %v2607 = vsub.s32 %v2604, %v2606
        %v2608 = vrot.slane %v2601, %v2607
        %v2609 = vcombine.low %v2513, %v2520
        %v2611 = vunpack.c.l.s4 1983009808
        %v2612 = vunpack.c.0.s8 %v2611
        %v2613 = vlaneseq
        %v2614 = vshrl.u32 %v2613, 7
        %v2615 = vsub.s32 %v2612, %v2614
        %v2616 = vrot.slane %v2609, %v2615
        %v2617 = vcombine.low %v2523, %v2524
        %v2619 = vunpack.c.l.s4 1983009808
        %v2620 = vunpack.c.0.s8 %v2619
        %v2621 = vlaneseq
        %v2622 = vshrl.u32 %v2621, 7
        %v2623 = vsub.s32 %v2620, %v2622
        %v2624 = vrot.slane %v2617, %v2623
        %v2625 = vcombine.low %v2600, %v2608
        %v2626 = vcombine.high %v2600, %v2608
        %v2628 = vunpack.c.l.s4 1934713408
        %v2629 = vunpack.c.0.s8 %v2628
        %v2630 = vlaneseq
        %v2631 = vshrl.u32 %v2630, 7
        %v2632 = vsub.s32 %v2629, %v2631
        %v2633 = vrot.slane %v2625, %v2632
        %v2635 = vunpack.c.l.s4 1934713408
        %v2636 = vunpack.c.0.s8 %v2635
        %v2637 = vlaneseq
        %v2638 = vshrl.u32 %v2637, 7
        %v2639 = vsub.s32 %v2636, %v2638
        %v2640 = vrot.slane %v2626, %v2639
        %v2641 = vcombine.low %v2616, %v2624
        %v2642 = vcombine.high %v2616, %v2624
        %v2644 = vunpack.c.l.s4 1934713408
        %v2645 = vunpack.c.0.s8 %v2644
        %v2646 = vlaneseq
        %v2647 = vshrl.u32 %v2646, 7
        %v2648 = vsub.s32 %v2645, %v2647
        %v2649 = vrot.slane %v2641, %v2648
        %v2651 = vunpack.c.l.s4 1934713408
        %v2652 = vunpack.c.0.s8 %v2651
        %v2653 = vlaneseq
        %v2654 = vshrl.u32 %v2653, 7
        %v2655 = vsub.s32 %v2652, %v2654
        %v2656 = vrot.slane %v2642, %v2655
        %v2657 = vcombine.low %v2633, %v2649
        %v2658 = vcombine.high %v2633, %v2649
        %v2659 = vcombine.low %v2640, %v2656
        %v2660 = vcombine.high %v2640, %v2656
        %v2661 = vcombine.low %v2565, %v2572
        %v2663 = vunpack.c.l.s4 1983009808
        %v2664 = vunpack.c.0.s8 %v2663
        %v2665 = vlaneseq
        %v2666 = vshrl.u32 %v2665, 7
        %v2667 = vsub.s32 %v2664, %v2666
        %v2668 = vrot.slane %v2661, %v2667
        %v2669 = vcombine.low %v2589, %v2590
        %v2671 = vunpack.c.l.s4 1983009808
        %v2672 = vunpack.c.0.s8 %v2671
        %v2673 = vlaneseq
        %v2674 = vshrl.u32 %v2673, 7
        %v2675 = vsub.s32 %v2672, %v2674
        %v2676 = vrot.slane %v2669, %v2675
        %v2677 = vcombine.low %v2581, %v2588
        %v2679 = vunpack.c.l.s4 1983009808
        %v2680 = vunpack.c.0.s8 %v2679
        %v2681 = vlaneseq
        %v2682 = vshrl.u32 %v2681, 7
        %v2683 = vsub.s32 %v2680, %v2682
        %v2684 = vrot.slane %v2677, %v2683
        %v2685 = vcombine.low %v2591, %v2592
        %v2687 = vunpack.c.l.s4 1983009808
        %v2688 = vunpack.c.0.s8 %v2687
        %v2689 = vlaneseq
        %v2690 = vshrl.u32 %v2689, 7
        %v2691 = vsub.s32 %v2688, %v2690
        %v2692 = vrot.slane %v2685, %v2691
        %v2693 = vcombine.low %v2668, %v2676
        %v2694 = vcombine.high %v2668, %v2676
        %v2696 = vunpack.c.l.s4 1934713408
        %v2697 = vunpack.c.0.s8 %v2696
        %v2698 = vlaneseq
        %v2699 = vshrl.u32 %v2698, 7
        %v2700 = vsub.s32 %v2697, %v2699
        %v2701 = vrot.slane %v2693, %v2700
        %v2703 = vunpack.c.l.s4 1934713408
        %v2704 = vunpack.c.0.s8 %v2703
        %v2705 = vlaneseq
        %v2706 = vshrl.u32 %v2705, 7
        %v2707 = vsub.s32 %v2704, %v2706
        %v2708 = vrot.slane %v2694, %v2707
        %v2709 = vcombine.low %v2684, %v2692
        %v2710 = vcombine.high %v2684, %v2692
        %v2712 = vunpack.c.l.s4 1934713408
        %v2713 = vunpack.c.0.s8 %v2712
        %v2714 = vlaneseq
        %v2715 = vshrl.u32 %v2714, 7
        %v2716 = vsub.s32 %v2713, %v2715
        %v2717 = vrot.slane %v2709, %v2716
        %v2719 = vunpack.c.l.s4 1934713408
        %v2720 = vunpack.c.0.s8 %v2719
        %v2721 = vlaneseq
        %v2722 = vshrl.u32 %v2721, 7
        %v2723 = vsub.s32 %v2720, %v2722
        %v2724 = vrot.slane %v2710, %v2723
        %v2725 = vcombine.low %v2701, %v2717
        %v2726 = vcombine.high %v2701, %v2717
        %v2727 = vcombine.low %v2708, %v2724
        %v2728 = vcombine.high %v2708, %v2724
        %2731 = vrot.lane.b32.xlu0 %v2658, 8
        %v2732 = vpop.permute.xlu0 %2731
        %2733 = vrot.lane.b32.xlu0 %v2726, 8
        %v2734 = vpop.permute.xlu0 %2733
        %2739 = vrot.lane.b32.xlu0 %v2659, 16
        %v2740 = vpop.permute.xlu0 %2739
        %2741 = vrot.lane.b32.xlu0 %v2727, 16
        %v2742 = vpop.permute.xlu0 %2741
        %2747 = vrot.lane.b32.xlu0 %v2660, 24
        %v2748 = vpop.permute.xlu0 %2747
        %2749 = vrot.lane.b32.xlu0 %v2728, 24
        %v2750 = vpop.permute.xlu0 %2749
        %v2753 = vsel %vm1414, %v2657, %v2732
        %v2754 = vsel %vm1414, %v2725, %v2734
        %vm2755 = vcmask 130048
        %v2756 = vsel %vm2755, %v2753, %v2740
        %v2757 = vsel %vm2755, %v2754, %v2742
        %vm2758 = vcmask 195584
        %v2759 = vsel %vm2758, %v2756, %v2748
        %v2760 = vsel %vm2758, %v2757, %v2750
        %v2761 = vpack.c.bf16 %v2760, %v2759
        %v2762 = vld [vmem:[#allocation11] sm:$0xf]
        %v2763 = vld [vmem:[#allocation11 + $0x4] sm:$0xf]
        %v2764 = vld [vmem:[#allocation11 + $0x8] sm:$0xf]
        %v2765 = vld [vmem:[#allocation11 + $0xc] sm:$0xf]
        %v2766 = vld [vmem:[#allocation13] sm:$0x1]
        %v2768 = vlaneseq
        %v2769 = vshrl.u32 %v2768, 7
        %v2770 = vsub.s32 0, %v2769
        %v2771 = vrot.slane %v2766, %v2770
        %v2777 = vunpack.c.l.b16 %v2762
        %v2778 = vunpack.c.l.b16 %v2763
        %v2779 = vunpack.c.l.b16 %v2764
        %v2780 = vunpack.c.l.b16 %v2765
        %v2781 = vpack.c.b16 %v2778, %v2777
        %v2782 = vpack.c.b16 %v2780, %v2779
        %v2786 = vsel %vm381, %v2761, 0
        %2788 = vmatprep.subr.bf16.mxu0 0
        %2789 = vmatpush1.bf16.msra.mxu0 %v2781
        %2790 = vmatprep.subr.bf16.mxu0 0
        %2791 = vmatpush1.bf16.msra.mxu0 %v2782
        %2792 = vmatprep.subr.bf16.mxu0 0
        %2793 = vmatpush1.bf16.msra.mxu0 0
        %2794 = vmatprep.subr.bf16.mxu0 0
        %2795 = vmatpush1.bf16.msra.mxu0 0
        %2796 = vmatprep.subr.bf16.mxu0 0
        %2797 = vmatpush1.bf16.msra.mxu0 0
        %2798 = vmatprep.subr.bf16.mxu0 0
        %2799 = vmatpush1.bf16.msra.mxu0 0
        %2800 = vmatprep.subr.bf16.mxu0 0
        %2801 = vmatpush1.bf16.msra.mxu0 0
        %2802 = vmatprep.subr.bf16.mxu0 0
        %2803 = vmatpush1.bf16.msra.mxu0 0
        %2804 = vmatprep.subr.bf16.mxu0 0
        %2805 = vmatpush1.bf16.msra.mxu0 0
        %2806 = vmatprep.subr.bf16.mxu0 0
        %2807 = vmatpush1.bf16.msra.mxu0 0
        %2808 = vmatprep.subr.bf16.mxu0 0
        %2809 = vmatpush1.bf16.msra.mxu0 0
        %2810 = vmatprep.subr.bf16.mxu0 0
        %2811 = vmatpush1.bf16.msra.mxu0 0
        %2812 = vmatprep.subr.bf16.mxu0 0
        %2813 = vmatpush1.bf16.msra.mxu0 0
        %2814 = vmatprep.subr.bf16.mxu0 0
        %2815 = vmatpush1.bf16.msra.mxu0 0
        %2816 = vmatprep.subr.bf16.mxu0 0
        %2817 = vmatpush1.bf16.msra.mxu0 0
        %2818 = vmatprep.subr.bf16.mxu0 0
        %2819 = vmatpush1.bf16.msra.mxu0 0
        %2820 = vmatprep.mubr.bf16.mxu0 0
        %2821 = vmatmul.mubr.bf16.gmra.mrb[0].mxu0 %v2786
        %v2822 = vpop.f32.mrb[0].mxu0
        %v2823 = vadd.f32 %v2771, %v2822
        %v2824 = vpop.f32.mrb[0].mxu0
        %v2825 = vpop.f32.mrb[0].mxu0
        %v2826 = vadd.f32 %v2771, %v2825
        %v2827 = vpop.f32.mrb[0].mxu0
        %2828 = vdwg.mxu0
        %v2829 = vadd.f32 %v377, %v2823
        %v2830 = vadd.f32 %v378, %v2826
        %2831 = vst.msk [vmem:[%s375] sm:$0xff] %vm381, %v2829
        %2832 = vst.msk [vmem:[%s375 + $0x8] sm:$0xff] %vm381, %v2830
        %s2833 = sand.u32 %s187, 1
        %s2834 = scalar_lea.sflag [#allocation4], %s2833
        %s2835 = sand.u32 %s187, 1
        %s2836 = smul.addr %s2835, 16
        %s2837 = scalar_lea.vmem [#allocation14], %s2836
        // Predicated region
        $region77: #{decoder_forward.6} parent=47 // pred_check
          %p2838 = pneg %p197
        $region78: #{decoder_forward.6} parent=47 // pred_check_branch
          %2840 = sbr.rel (%p2838) target = $region80
        $region79: #{decoder_forward.6} parent=47 // pred_region
          %s2842 = ssub.s32 256, 256
          %2843 = vsyncadd %s2834, %s2842
          %s2844 = smul.addr %s27, 2
          %s2845 = smul.addr %s2844, 128
          %s2846 = scalar_lea.hbm %s7, %s2845
          %s2847 = sshll.u32 %s2837, 4
          %s2848 = int_to_ptr.vmem [resolvable:$true] %s2847
          %2853 = dma.vmem_to_hbm [thread:$0]  %s2848, 256, %s2846, %s2834, 128, 128, 8
        $region80: #{decoder_forward.6} parent=47 // pred_fallthru
          _
      $region48: #{decoder_forward.6} parent=5 // pred_fallthru
        _
      %p2854 = scmp.le.s32.totalorder 2, %s22
      // Predicated region
      $region81: #{decoder_forward.6} parent=5 // pred_check
        %p2855 = pneg %p2854
      $region82: #{decoder_forward.6} parent=5 // pred_check_branch
        %2857 = sbr.rel (%p2855) target = $region84
      $region83: #{decoder_forward.6} parent=5 // pred_region
        %s2858 = ssub.s32 %s22, 2
        // Predicated region
        $region85: #{decoder_forward.6} parent=83 // pred_check
          %p2859 = pneg %p203
        $region86: #{decoder_forward.6} parent=83 // pred_check_branch
          %2861 = sbr.rel (%p2859) target = $region88
        $region87: #{decoder_forward.6} parent=83 // pred_region
          %s2862 = sand.u32 %s188, 1
          %s2863 = scalar_lea.sflag [#allocation4], %s2862
          %s2864 = sand.u32 %s188, 1
          %s2865 = smul.addr %s2864, 16
          %s2866 = scalar_lea.vmem [#allocation14], %s2865
          %2867 = dma.done %s2863, 256
        $region88: #{decoder_forward.6} parent=83 // pred_fallthru
          _
      $region84: #{decoder_forward.6} parent=5 // pred_fallthru
        _
    $region6: #{decoder_forward.6} parent=1 // loop_footer
      %s26 = sadd.s32 1, %s22
    $region7: #{decoder_forward.6} parent=1 // loop_footer_branch
      %21 = sbr.rel target = $region3
    $region8: #{decoder_forward.6} parent=1 // loop_exit
      _
    %2868 = vsyncpa [#allocation3], 1
    %s2869 = scalar_lea.sflag [#allocation3], 1
    %2870 = vsyncpa %s2869, 1
    %2871 = vsyncpa [#allocation6], 1
    %2872 = vsyncpa [#allocation9], 1
    %2873 = vsyncpa [#allocation12], 1
    %2874 = vsyncpa [#allocation4], 1
    %s2875 = scalar_lea.sflag [#allocation4], 1
    %2876 = vsyncpa %s2875, 1

</llo_original>
